<compile_context>
chip_gen: v7x
topology: tpu7x:2x2x1
jax: 0.10.0
libtpu: 0.0.40
codegen_flags: <defaults>
</compile_context>

<pallas_src>
import functools

import jax
import jax.numpy as jnp
import numpy as np
from jax import lax
from jax.experimental import pallas as pl
from jax.experimental.pallas import tpu as pltpu


# --------------------------------------------------------------------------- #
# Kernel
# --------------------------------------------------------------------------- #
def _encoder_kernel(x_ref, w1_ref, b1_ref, w2_ref, b2_ref,
                    feat_ref, pool_ref, *, img_h):
    # x_ref   : (1, 1, TH+4, W+2, Cin)  pre-haloed, zero-padded NHWC input tile
    # w1_ref  : (9*Cin, Cout)           conv1 weights, rows ordered (kh, kw, ci)
    # b1_ref  : (1, Cout)
    # w2_ref  : (9*Cout, Cout)          conv2 weights
    # b2_ref  : (1, Cout)
    # feat_ref: (1, TH, W, Cout)        conv_block output rows [t*TH, t*TH+TH)
    # pool_ref: (1, TH//2, W//2, Cout)  2x2-maxpooled rows
    TH = feat_ref.shape[1]
    W = feat_ref.shape[2]
    Cout = feat_ref.shape[3]
    Cin = x_ref.shape[-1]
    rows1 = TH + 2                       # conv1 output rows (+1 halo row each side)
    cdt = x_ref.dtype                    # MXU operand dtype (f32 or bf16)

    # ---- conv1: 9 taps concatenated along the contraction axis, one MXU dot --
    taps1 = [x_ref[0, 0, kh:kh + rows1, kw:kw + W, :]       # (rows1, W, Cin)
             for kh in range(3) for kw in range(3)]
    col1 = jnp.concatenate(taps1, axis=-1).reshape(rows1 * W, 9 * Cin)
    acc1 = jnp.dot(col1, w1_ref[...], preferred_element_type=jnp.float32)
    h1 = jnp.maximum(acc1 + b1_ref[...], 0.0).reshape(rows1, W, Cout)

    # Halo rows outside the true image must be exact zeros for conv2's padding
    # (conv1 evaluated on zero padding gives relu(bias) != 0).
    r0 = pl.program_id(1) * TH
    g = r0 - 1 + lax.broadcasted_iota(jnp.int32, (rows1, 1, 1), 0)
    h1 = jnp.where((g >= 0) & (g < img_h), h1, 0.0)

    # conv2 input = h1 with a 1-column zero halo, built in registers.
    zcol = jnp.zeros((rows1, 1, Cout), jnp.float32)
    h1p = jnp.concatenate([zcol, h1, zcol], axis=1).astype(cdt)  # (rows1, W+2, Cout)

    # ---- conv2: same fused-tap operand, one MXU dot -------------------------
    taps2 = [h1p[kh:kh + TH, kw:kw + W, :]                   # (TH, W, Cout)
             for kh in range(3) for kw in range(3)]
    col2 = jnp.concatenate(taps2, axis=-1).reshape(TH * W, 9 * Cout)
    acc2 = jnp.dot(col2, w2_ref[...], preferred_element_type=jnp.float32)
    y = jnp.maximum(acc2 + b2_ref[...], 0.0).reshape(TH, W, Cout)
    feat_ref[0] = y

    # ---- MaxPool2d(2, 2): reshape + max reductions (no stride-2 gathers) ----
    rmax = jnp.max(y.reshape(TH // 2, 2, W, Cout), axis=1)       # (TH//2, W, Cout)
    pool_ref[0] = jnp.max(rmax.reshape(TH // 2, W // 2, 2, Cout), axis=2)


# --------------------------------------------------------------------------- #
# Tiling helpers
# --------------------------------------------------------------------------- #
def _round_up(x, m):
    return ((x + m - 1) // m) * m


def _padded_vmem_bytes(shape, dtype):
    """VMEM footprint with native (sublane, lane) tiling (minor -> 128 lanes)."""
    itemsize = jnp.dtype(dtype).itemsize
    sublane = 8 * (4 // itemsize)          # 8 for 32-bit, 16 for 16-bit
    lead = 1
    for d in shape[:-2]:
        lead *= int(d)
    second = int(shape[-2]) if len(shape) >= 2 else 1
    minor = int(shape[-1])
    return lead * _round_up(second, sublane) * _round_up(minor, 128) * itemsize


def _vmem_capacity_bytes():
    try:
        return int(pltpu.get_tpu_info().vmem_capacity_bytes)
    except Exception:
        # Unknown / older runtime: assume a 128 MiB part (v5e / v6e).
        return 128 * 1024 * 1024


def _pick_tile_h(H, W, Cin, Cout, compute_dtype, budget_bytes):
    """Largest row tile TH (multiple of 8) whose per-step working set fits."""
    f32 = jnp.float32

    def fits(th):
        rows1 = th + 2
        total = (
            2 * _padded_vmem_bytes((th + 4, W + 2, Cin), compute_dtype)    # input tile (x2 bufs)
            + 2 * _padded_vmem_bytes((th, W, Cout), f32)                   # feat out (x2 bufs)
            + 2 * _padded_vmem_bytes((th // 2, W // 2, Cout), f32)         # pool out (x2 bufs)
            + _padded_vmem_bytes((rows1 * W, 9 * Cin), compute_dtype)      # conv1 operand (live)
            + _padded_vmem_bytes((th * W, 9 * Cout), compute_dtype)        # conv2 operand (live)
            + _padded_vmem_bytes((rows1, W + 2, Cout), f32)                # h1 (+ column halo)
            + 2 * _padded_vmem_bytes((th * W, Cout), f32)                  # f32 accumulators
            + 2 * (_padded_vmem_bytes((9 * Cin, Cout), compute_dtype)
                   + _padded_vmem_bytes((9 * Cout, Cout), compute_dtype)))
        return total <= budget_bytes

    th_max = _round_up(H, 8)
    for th in range(th_max, 7, -8):
        if fits(th):
            return th
    return 8   # may still exceed the budget for extreme W*Cin; vmem_limit guards


# --------------------------------------------------------------------------- #
# Wrapper
# --------------------------------------------------------------------------- #
def encoder_block(x_nchw, w1, b1, w2, b2, *, compute_dtype=jnp.float32,
                  tile_h=None, vmem_limit_bytes=None):
    """EncoderBlock.forward.

    x_nchw: (N, Cin, H, W); w1: (3,3,Cin,Cout) HWIO; b1: (Cout,);
    w2: (3,3,Cout,Cout) HWIO; b2: (Cout,).
    Returns (conv_block(x), maxpool2x2(conv_block(x))) in NCHW, matching the
    PyTorch module.  compute_dtype=jnp.bfloat16 uses bf16 MXU operands with
    f32 accumulation (recommended on v6e/v7x; keep f32 on v5e).
    """
    N, Cin, H, W = x_nchw.shape
    Cout = w1.shape[-1]
    if W % 8 != 0:
        # TODO(synk): widths that are not a multiple of 8 need sublane-unaligned
        # merges in the im2col reshapes and are not supported by this kernel.
        raise ValueError("encoder_block requires W % 8 == 0")

    cap = _vmem_capacity_bytes()
    if cap <= 80 * 1024 * 1024:            # 64 MiB / TensorCore parts (v7x)
        budget, default_limit = 40 << 20, 48 << 20
    else:                                   # 128 MiB parts (v5e / v6e)
        budget, default_limit = 96 << 20, 112 << 20
    if vmem_limit_bytes is None:
        vmem_limit_bytes = default_limit

    if tile_h is None:
        TH = _pick_tile_h(H, W, Cin, Cout, compute_dtype, budget)
        if N == 1:
            # v7x has 2 TensorCores per chip: keep >= 2 parallel grid steps.
            TH = min(TH, max(8, _round_up((H + 1) // 2, 8)))
    else:
        TH = int(tile_h)
        if TH < 2 or TH % 2:
            raise ValueError("tile_h must be even and >= 2")

    n_h = pl.cdiv(H, TH)
    H_pad = n_h * TH                        # rows >= H are computed then sliced off

    itemsize = jnp.dtype(compute_dtype).itemsize

    # NHWC + zero halo: 2 rows top, 2 + (H_pad - H) rows bottom, 1 column each
    # side.  Then gather overlapping (TH+4)-row slabs so each grid step only
    # needs its own tile in VMEM (halo rows are duplicated in HBM, 4 rows per
    # tile -- negligible, and keeps plain Blocked pipelining).
    x = jnp.transpose(x_nchw, (0, 2, 3, 1)).astype(compute_dtype)
    xpad = jnp.pad(x, ((0, 0), (2, 2 + H_pad - H), (1, 1), (0, 0)))
    row_idx = (jnp.arange(n_h) * TH)[:, None] + jnp.arange(TH + 4)[None, :]
    x_tiles = xpad[:, row_idx]              # (N, n_h, TH+4, W+2, Cin)

    # Weights packed as (K, Cout) with K ordered (kh, kw, cin) -- the same
    # order the kernel concatenates taps along the contraction axis.
    w1c = w1.reshape(9 * Cin, Cout).astype(compute_dtype)
    w2c = w2.reshape(9 * Cout, Cout).astype(compute_dtype)
    b1r = b1.reshape(1, Cout).astype(jnp.float32)
    b2r = b2.reshape(1, Cout).astype(jnp.float32)

    flops = 2 * N * n_h * ((TH + 2) * W * 9 * Cin * Cout
                           + TH * W * 9 * Cout * Cout)
    bytes_accessed = (int(x_tiles.size) * itemsize
                      + (int(w1c.size) + int(w2c.size)) * itemsize
                      + (N * H_pad * W * Cout
                         + N * (H_pad // 2) * (W // 2) * Cout) * 4)

    kernel = functools.partial(_encoder_kernel, img_h=H)

    feat, pooled = pl.pallas_call(
        kernel,
        out_shape=(
            jax.ShapeDtypeStruct((N, H_pad, W, Cout), jnp.float32),
            jax.ShapeDtypeStruct((N, H_pad // 2, W // 2, Cout), jnp.float32),
        ),
        grid_spec=pltpu.PrefetchScalarGridSpec(
            num_scalar_prefetch=0,
            grid=(N, n_h),
            in_specs=[
                pl.BlockSpec((1, 1, TH + 4, W + 2, Cin),
                             lambda b, t: (b, t, 0, 0, 0)),
                pl.BlockSpec((9 * Cin, Cout), lambda b, t: (0, 0)),
                pl.BlockSpec((1, Cout), lambda b, t: (0, 0)),
                pl.BlockSpec((9 * Cout, Cout), lambda b, t: (0, 0)),
                pl.BlockSpec((1, Cout), lambda b, t: (0, 0)),
            ],
            out_specs=[
                pl.BlockSpec((1, TH, W, Cout), lambda b, t: (b, t, 0, 0)),
                pl.BlockSpec((1, TH // 2, W // 2, Cout),
                             lambda b, t: (b, t, 0, 0)),
            ],
        ),
        compiler_params=pltpu.CompilerParams(
            dimension_semantics=("parallel", "parallel"),
            vmem_limit_bytes=vmem_limit_bytes),
        cost_estimate=pl.CostEstimate(flops=flops, transcendentals=0,
                                      bytes_accessed=bytes_accessed),
    )(x_tiles, w1c, b1r, w2c, b2r)

    # Drop padded rows, back to NCHW to match the PyTorch output convention.
    feat = jnp.transpose(feat[:, :H], (0, 3, 1, 2))
    pooled = jnp.transpose(pooled[:, :H // 2], (0, 3, 1, 2))
    return feat, pooled


# --------------------------------------------------------------------------- #
# Pure-JAX reference (lax conv + reduce_window) for validation
# --------------------------------------------------------------------------- #
def _reference(x_nchw, w1, b1, w2, b2):
    w1_oihw = jnp.transpose(w1, (3, 2, 0, 1))
    w2_oihw = jnp.transpose(w2, (3, 2, 0, 1))
    dn = ("NCHW", "OIHW", "NCHW")
    h = lax.conv_general_dilated(x_nchw, w1_oihw, (1, 1), ((1, 1), (1, 1)),
                                 dimension_numbers=dn)
    h = jnp.maximum(h + b1[None, :, None, None], 0.0)
    h = lax.conv_general_dilated(h, w2_oihw, (1, 1), ((1, 1), (1, 1)),
                                 dimension_numbers=dn)
    h = jnp.maximum(h + b2[None, :, None, None], 0.0)
    p = lax.reduce_window(h, -jnp.inf, lax.max,
                          (1, 1, 2, 2), (1, 1, 2, 2), "VALID")
    return h, p


if __name__ == "__main__":
    key = jax.random.PRNGKey(0)
    kx, k1, k2, k3, k4, kx2 = jax.random.split(key, 6)

    N, Cin, Cout, H, W = 2, 4, 8, 16, 16
    x = jax.random.normal(kx, (N, Cin, H, W), dtype=jnp.float32)
    w1 = 0.1 * jax.random.normal(k1, (3, 3, Cin, Cout), dtype=jnp.float32)
    b1 = 0.1 * jax.random.normal(k2, (Cout,), dtype=jnp.float32)
    w2 = 0.1 * jax.random.normal(k3, (3, 3, Cout, Cout), dtype=jnp.float32)
    b2 = 0.1 * jax.random.normal(k4, (Cout,), dtype=jnp.float32)

    # --- N=2, H=W=16: one row tile per image, f32 ---
    feat, pooled = encoder_block(x, w1, b1, w2, b2)
    jax.block_until_ready((feat, pooled))
    ref_feat, ref_pool = _reference(x, w1, b1, w2, b2)
    assert feat.shape == (N, Cout, H, W)
    assert pooled.shape == (N, Cout, H // 2, W // 2)
    np.testing.assert_allclose(np.asarray(feat), np.asarray(ref_feat),
                               rtol=1e-4, atol=1e-4)
    np.testing.assert_allclose(np.asarray(pooled), np.asarray(ref_pool),
                               rtol=1e-4, atol=1e-4)

    # --- N=1, H=24, W=32: auto tiling picks TH=16 (>=2 grid steps for v7x),
    #     exercising the cdiv / masked-last-tile path and rectangular images ---
    H2, W2 = 24, 32
    x2 = jax.random.normal(kx2, (1, Cin, H2, W2), dtype=jnp.float32)
    ref_f2, ref_p2 = _reference(x2, w1, b1, w2, b2)
    f2, p2 = encoder_block(x2, w1, b1, w2, b2)
    jax.block_until_ready((f2, p2))
    assert f2.shape == (1, Cout, H2, W2)
    assert p2.shape == (1, Cout, H2 // 2, W2 // 2)
    np.testing.assert_allclose(np.asarray(f2), np.asarray(ref_f2),
                               rtol=1e-4, atol=1e-4)
    np.testing.assert_allclose(np.asarray(p2), np.asarray(ref_p2),
                               rtol=1e-4, atol=1e-4)

    # --- bf16 MXU operands (f32 accumulation), looser tolerance ---
    f3, p3 = encoder_block(x2, w1, b1, w2, b2, compute_dtype=jnp.bfloat16)
    jax.block_until_ready((f3, p3))
    np.testing.assert_allclose(np.asarray(f3), np.asarray(ref_f2),
                               rtol=5e-2, atol=5e-2)
    np.testing.assert_allclose(np.asarray(p3), np.asarray(ref_p2),
                               rtol=5e-2, atol=5e-2)

    print("KERNEL_OK")
</pallas_src>

<mosaic_0001>
module attributes {stable_mosaic.version = 11 : i64} {
  func.func @_encoder_kernel(%arg0: i32, %arg1: i32, %arg2: memref<1x1x20x18x4xf32, #tpu.memory_space<vmem>>, %arg3: memref<36x8xf32, #tpu.memory_space<vmem>>, %arg4: memref<1x8xf32, #tpu.memory_space<vmem>>, %arg5: memref<72x8xf32, #tpu.memory_space<vmem>>, %arg6: memref<1x8xf32, #tpu.memory_space<vmem>>, %arg7: memref<1x16x16x8xf32, #tpu.memory_space<vmem>>, %arg8: memref<1x8x8x8xf32, #tpu.memory_space<vmem>>) attributes {dimension_semantics = [#tpu.dimension_semantics<parallel>, #tpu.dimension_semantics<parallel>], iteration_bounds = array<i64: 2, 1>, scalar_prefetch = 0 : i64, scratch_operands = 0 : i64, tpu.core_type = #tpu.core_type<tc>, window_params = [{transform_indices = @transform_0, window_bounds = array<i64: 1, 1, 20, 18, 4>}, {pipeline_mode = #tpu.pipeline_mode<synchronous>, transform_indices = @transform_1, window_bounds = array<i64: 36, 8>}, {pipeline_mode = #tpu.pipeline_mode<synchronous>, transform_indices = @transform_2, window_bounds = array<i64: 1, 8>}, {pipeline_mode = #tpu.pipeline_mode<synchronous>, transform_indices = @transform_3, window_bounds = array<i64: 72, 8>}, {pipeline_mode = #tpu.pipeline_mode<synchronous>, transform_indices = @transform_4, window_bounds = array<i64: 1, 8>}, {transform_indices = @transform_5, window_bounds = array<i64: 1, 16, 16, 8>}, {transform_indices = @transform_6, window_bounds = array<i64: 1, 8, 8, 8>}]} {
    %c0 = arith.constant 0 : index
    %c0_0 = arith.constant 0 : index
    %c0_1 = arith.constant 0 : index
    %c0_2 = arith.constant 0 : index
    %c0_3 = arith.constant 0 : index
    %0 = vector.load %arg2[%c0, %c0_0, %c0_1, %c0_2, %c0_3] : memref<1x1x20x18x4xf32, #tpu.memory_space<vmem>>, vector<1x1x18x16x4xf32>
    %1 = vector.shape_cast %0 : vector<1x1x18x16x4xf32> to vector<18x16x4xf32>
    %c0_4 = arith.constant 0 : index
    %c0_5 = arith.constant 0 : index
    %c0_6 = arith.constant 0 : index
    %c1 = arith.constant 1 : index
    %c0_7 = arith.constant 0 : index
    %2 = vector.load %arg2[%c0_4, %c0_5, %c0_6, %c1, %c0_7] : memref<1x1x20x18x4xf32, #tpu.memory_space<vmem>>, vector<1x1x18x16x4xf32>
    %3 = vector.shape_cast %2 : vector<1x1x18x16x4xf32> to vector<18x16x4xf32>
    %c0_8 = arith.constant 0 : index
    %c0_9 = arith.constant 0 : index
    %c0_10 = arith.constant 0 : index
    %c2 = arith.constant 2 : index
    %c0_11 = arith.constant 0 : index
    %4 = vector.load %arg2[%c0_8, %c0_9, %c0_10, %c2, %c0_11] : memref<1x1x20x18x4xf32, #tpu.memory_space<vmem>>, vector<1x1x18x16x4xf32>
    %5 = vector.shape_cast %4 : vector<1x1x18x16x4xf32> to vector<18x16x4xf32>
    %c0_12 = arith.constant 0 : index
    %c0_13 = arith.constant 0 : index
    %c1_14 = arith.constant 1 : index
    %c0_15 = arith.constant 0 : index
    %c0_16 = arith.constant 0 : index
    %6 = vector.load %arg2[%c0_12, %c0_13, %c1_14, %c0_15, %c0_16] : memref<1x1x20x18x4xf32, #tpu.memory_space<vmem>>, vector<1x1x18x16x4xf32>
    %7 = vector.shape_cast %6 : vector<1x1x18x16x4xf32> to vector<18x16x4xf32>
    %c0_17 = arith.constant 0 : index
    %c0_18 = arith.constant 0 : index
    %c1_19 = arith.constant 1 : index
    %c1_20 = arith.constant 1 : index
    %c0_21 = arith.constant 0 : index
    %8 = vector.load %arg2[%c0_17, %c0_18, %c1_19, %c1_20, %c0_21] : memref<1x1x20x18x4xf32, #tpu.memory_space<vmem>>, vector<1x1x18x16x4xf32>
    %9 = vector.shape_cast %8 : vector<1x1x18x16x4xf32> to vector<18x16x4xf32>
    %c0_22 = arith.constant 0 : index
    %c0_23 = arith.constant 0 : index
    %c1_24 = arith.constant 1 : index
    %c2_25 = arith.constant 2 : index
    %c0_26 = arith.constant 0 : index
    %10 = vector.load %arg2[%c0_22, %c0_23, %c1_24, %c2_25, %c0_26] : memref<1x1x20x18x4xf32, #tpu.memory_space<vmem>>, vector<1x1x18x16x4xf32>
    %11 = vector.shape_cast %10 : vector<1x1x18x16x4xf32> to vector<18x16x4xf32>
    %c0_27 = arith.constant 0 : index
    %c0_28 = arith.constant 0 : index
    %c2_29 = arith.constant 2 : index
    %c0_30 = arith.constant 0 : index
    %c0_31 = arith.constant 0 : index
    %12 = vector.load %arg2[%c0_27, %c0_28, %c2_29, %c0_30, %c0_31] : memref<1x1x20x18x4xf32, #tpu.memory_space<vmem>>, vector<1x1x18x16x4xf32>
    %13 = vector.shape_cast %12 : vector<1x1x18x16x4xf32> to vector<18x16x4xf32>
    %c0_32 = arith.constant 0 : index
    %c0_33 = arith.constant 0 : index
    %c2_34 = arith.constant 2 : index
    %c1_35 = arith.constant 1 : index
    %c0_36 = arith.constant 0 : index
    %14 = vector.load %arg2[%c0_32, %c0_33, %c2_34, %c1_35, %c0_36] : memref<1x1x20x18x4xf32, #tpu.memory_space<vmem>>, vector<1x1x18x16x4xf32>
    %15 = vector.shape_cast %14 : vector<1x1x18x16x4xf32> to vector<18x16x4xf32>
    %c0_37 = arith.constant 0 : index
    %c0_38 = arith.constant 0 : index
    %c2_39 = arith.constant 2 : index
    %c2_40 = arith.constant 2 : index
    %c0_41 = arith.constant 0 : index
    %16 = vector.load %arg2[%c0_37, %c0_38, %c2_39, %c2_40, %c0_41] : memref<1x1x20x18x4xf32, #tpu.memory_space<vmem>>, vector<1x1x18x16x4xf32>
    %17 = vector.shape_cast %16 : vector<1x1x18x16x4xf32> to vector<18x16x4xf32>
    %18 = tpu.concatenate %1, %3, %5, %7, %9, %11, %13, %15, %17 in 2 : vector<18x16x4xf32>, vector<18x16x4xf32>, vector<18x16x4xf32>, vector<18x16x4xf32>, vector<18x16x4xf32>, vector<18x16x4xf32>, vector<18x16x4xf32>, vector<18x16x4xf32>, vector<18x16x4xf32> -> vector<18x16x36xf32>
    %19 = vector.shape_cast %18 : vector<18x16x36xf32> to vector<288x36xf32>
    %c0_42 = arith.constant 0 : index
    %c0_43 = arith.constant 0 : index
    %20 = vector.load %arg3[%c0_42, %c0_43] : memref<36x8xf32, #tpu.memory_space<vmem>>, vector<36x8xf32>
    %cst = arith.constant dense<0.000000e+00> : vector<288x8xf32>
    %21 = tpu.matmul %19, %20, %cst {dimension_numbers = #tpu.dot_dimension_numbers<[1], [0], [0], [1], [0, 0, 1, 1], [], []>} : vector<288x36xf32>, vector<36x8xf32>, vector<288x8xf32> -> vector<288x8xf32>
    %c0_44 = arith.constant 0 : index
    %c0_45 = arith.constant 0 : index
    %22 = vector.load %arg4[%c0_44, %c0_45] : memref<1x8xf32, #tpu.memory_space<vmem>>, vector<1x8xf32>
    %23 = vector.broadcast %22 : vector<1x8xf32> to vector<288x8xf32>
    %24 = arith.addf %21, %23 : vector<288x8xf32>
    %cst_46 = arith.constant 0.000000e+00 : f32
    %25 = vector.broadcast %cst_46 : f32 to vector<288x8xf32>
    %26 = arith.maximumf %24, %25 : vector<288x8xf32>
    %27 = vector.shape_cast %26 : vector<288x8xf32> to vector<18x16x8xf32>
    %c16_i32 = arith.constant 16 : i32
    %28 = arith.muli %arg1, %c16_i32 : i32
    %c1_i32 = arith.constant 1 : i32
    %29 = arith.subi %28, %c1_i32 : i32
    %30 = tpu.iota {dimensions = array<i32: 0>} : vector<18x1x1xi32>
    %31 = vector.broadcast %29 : i32 to vector<18x1x1xi32>
    %32 = arith.addi %31, %30 : vector<18x1x1xi32>
    %c0_i32 = arith.constant 0 : i32
    %33 = vector.broadcast %c0_i32 : i32 to vector<18x1x1xi32>
    %34 = arith.cmpi sge, %32, %33 : vector<18x1x1xi32>
    %c16_i32_47 = arith.constant 16 : i32
    %35 = vector.broadcast %c16_i32_47 : i32 to vector<18x1x1xi32>
    %36 = arith.cmpi slt, %32, %35 : vector<18x1x1xi32>
    %37 = arith.andi %34, %36 : vector<18x1x1xi1>
    %cst_48 = arith.constant 0.000000e+00 : f32
    %38 = vector.shape_cast %37 : vector<18x1x1xi1> to vector<18x1x1xi1>
    %39 = vector.broadcast %38 : vector<18x1x1xi1> to vector<18x16x8xi1>
    %40 = vector.broadcast %cst_48 : f32 to vector<18x16x8xf32>
    %41 = arith.select %39, %27, %40 : vector<18x16x8xi1>, vector<18x16x8xf32>
    %cst_49 = arith.constant 0.000000e+00 : f32
    %42 = vector.broadcast %cst_49 : f32 to vector<18x1x8xf32>
    %43 = tpu.concatenate %42, %41, %42 in 1 : vector<18x1x8xf32>, vector<18x16x8xf32>, vector<18x1x8xf32> -> vector<18x18x8xf32>
    %44 = vector.extract_strided_slice %43 {offsets = [0, 0, 0], sizes = [16, 16, 8], strides = [1, 1, 1]} : vector<18x18x8xf32> to vector<16x16x8xf32>
    %45 = vector.extract_strided_slice %43 {offsets = [0, 1, 0], sizes = [16, 16, 8], strides = [1, 1, 1]} : vector<18x18x8xf32> to vector<16x16x8xf32>
    %46 = vector.extract_strided_slice %43 {offsets = [0, 2, 0], sizes = [16, 16, 8], strides = [1, 1, 1]} : vector<18x18x8xf32> to vector<16x16x8xf32>
    %47 = vector.extract_strided_slice %43 {offsets = [1, 0, 0], sizes = [16, 16, 8], strides = [1, 1, 1]} : vector<18x18x8xf32> to vector<16x16x8xf32>
    %48 = vector.extract_strided_slice %43 {offsets = [1, 1, 0], sizes = [16, 16, 8], strides = [1, 1, 1]} : vector<18x18x8xf32> to vector<16x16x8xf32>
    %49 = vector.extract_strided_slice %43 {offsets = [1, 2, 0], sizes = [16, 16, 8], strides = [1, 1, 1]} : vector<18x18x8xf32> to vector<16x16x8xf32>
    %50 = vector.extract_strided_slice %43 {offsets = [2, 0, 0], sizes = [16, 16, 8], strides = [1, 1, 1]} : vector<18x18x8xf32> to vector<16x16x8xf32>
    %51 = vector.extract_strided_slice %43 {offsets = [2, 1, 0], sizes = [16, 16, 8], strides = [1, 1, 1]} : vector<18x18x8xf32> to vector<16x16x8xf32>
    %52 = vector.extract_strided_slice %43 {offsets = [2, 2, 0], sizes = [16, 16, 8], strides = [1, 1, 1]} : vector<18x18x8xf32> to vector<16x16x8xf32>
    %53 = tpu.concatenate %44, %45, %46, %47, %48, %49, %50, %51, %52 in 2 : vector<16x16x8xf32>, vector<16x16x8xf32>, vector<16x16x8xf32>, vector<16x16x8xf32>, vector<16x16x8xf32>, vector<16x16x8xf32>, vector<16x16x8xf32>, vector<16x16x8xf32>, vector<16x16x8xf32> -> vector<16x16x72xf32>
    %54 = vector.shape_cast %53 : vector<16x16x72xf32> to vector<256x72xf32>
    %c0_50 = arith.constant 0 : index
    %c0_51 = arith.constant 0 : index
    %55 = vector.load %arg5[%c0_50, %c0_51] : memref<72x8xf32, #tpu.memory_space<vmem>>, vector<72x8xf32>
    %cst_52 = arith.constant dense<0.000000e+00> : vector<256x8xf32>
    %56 = tpu.matmul %54, %55, %cst_52 {dimension_numbers = #tpu.dot_dimension_numbers<[1], [0], [0], [1], [0, 0, 1, 1], [], []>} : vector<256x72xf32>, vector<72x8xf32>, vector<256x8xf32> -> vector<256x8xf32>
    %c0_53 = arith.constant 0 : index
    %c0_54 = arith.constant 0 : index
    %57 = vector.load %arg6[%c0_53, %c0_54] : memref<1x8xf32, #tpu.memory_space<vmem>>, vector<1x8xf32>
    %58 = vector.broadcast %57 : vector<1x8xf32> to vector<256x8xf32>
    %59 = arith.addf %56, %58 : vector<256x8xf32>
    %cst_55 = arith.constant 0.000000e+00 : f32
    %60 = vector.broadcast %cst_55 : f32 to vector<256x8xf32>
    %61 = arith.maximumf %59, %60 : vector<256x8xf32>
    %62 = vector.shape_cast %61 : vector<256x8xf32> to vector<16x16x8xf32>
    %c0_56 = arith.constant 0 : index
    %c0_57 = arith.constant 0 : index
    %c0_58 = arith.constant 0 : index
    %c0_59 = arith.constant 0 : index
    %63 = vector.load %arg7[%c0_56, %c0_57, %c0_58, %c0_59] : memref<1x16x16x8xf32, #tpu.memory_space<vmem>>, vector<1x16x16x8xf32>
    %64 = vector.shape_cast %63 : vector<1x16x16x8xf32> to vector<16x16x8xf32>
    %65 = vector.shape_cast %62 : vector<16x16x8xf32> to vector<1x16x16x8xf32>
    tpu.vector_store %arg7[%c0_56, %c0_57, %c0_58, %c0_59], %65 {strides = array<i32>} : memref<1x16x16x8xf32, #tpu.memory_space<vmem>>, vector<1x16x16x8xf32>,
    %66 = vector.shape_cast %62 : vector<16x16x8xf32> to vector<8x2x16x8xf32>
    %cst_60 = arith.constant dense<0xFF800000> : vector<8x16x8xf32>
    %67 = vector.multi_reduction <maximumf>, %66, %cst_60 [1] : vector<8x2x16x8xf32> to vector<8x16x8xf32>
    %68 = vector.shape_cast %67 : vector<8x16x8xf32> to vector<8x8x2x8xf32>
    %cst_61 = arith.constant dense<0xFF800000> : vector<8x8x8xf32>
    %69 = vector.multi_reduction <maximumf>, %68, %cst_61 [2] : vector<8x8x2x8xf32> to vector<8x8x8xf32>
    %c0_62 = arith.constant 0 : index
    %c0_63 = arith.constant 0 : index
    %c0_64 = arith.constant 0 : index
    %c0_65 = arith.constant 0 : index
    %70 = vector.load %arg8[%c0_62, %c0_63, %c0_64, %c0_65] : memref<1x8x8x8xf32, #tpu.memory_space<vmem>>, vector<1x8x8x8xf32>
    %71 = vector.shape_cast %70 : vector<1x8x8x8xf32> to vector<8x8x8xf32>
    %72 = vector.shape_cast %69 : vector<8x8x8xf32> to vector<1x8x8x8xf32>
    tpu.vector_store %arg8[%c0_62, %c0_63, %c0_64, %c0_65], %72 {strides = array<i32>} : memref<1x8x8x8xf32, #tpu.memory_space<vmem>>, vector<1x8x8x8xf32>,
    return
  }
  func.func @transform_0(%arg0: i32, %arg1: i32) -> (i32, i32, i32, i32, i32) {
    %c0_i32 = arith.constant 0 : i32
    %c0_i32_0 = arith.constant 0 : i32
    %c0_i32_1 = arith.constant 0 : i32
    %c0_i32_2 = arith.constant 0 : i32
    return %arg0, %arg1, %c0_i32, %c0_i32_0, %c0_i32_1 : i32, i32, i32, i32, i32
  }
  func.func @transform_1(%arg0: i32, %arg1: i32) -> (i32, i32) {
    %c0_i32 = arith.constant 0 : i32
    %c0_i32_0 = arith.constant 0 : i32
    %c0_i32_1 = arith.constant 0 : i32
    return %c0_i32, %c0_i32_0 : i32, i32
  }
  func.func @transform_2(%arg0: i32, %arg1: i32) -> (i32, i32) {
    %c0_i32 = arith.constant 0 : i32
    %c0_i32_0 = arith.constant 0 : i32
    %c0_i32_1 = arith.constant 0 : i32
    return %c0_i32, %c0_i32_0 : i32, i32
  }
  func.func @transform_3(%arg0: i32, %arg1: i32) -> (i32, i32) {
    %c0_i32 = arith.constant 0 : i32
    %c0_i32_0 = arith.constant 0 : i32
    %c0_i32_1 = arith.constant 0 : i32
    return %c0_i32, %c0_i32_0 : i32, i32
  }
  func.func @transform_4(%arg0: i32, %arg1: i32) -> (i32, i32) {
    %c0_i32 = arith.constant 0 : i32
    %c0_i32_0 = arith.constant 0 : i32
    %c0_i32_1 = arith.constant 0 : i32
    return %c0_i32, %c0_i32_0 : i32, i32
  }
  func.func @transform_5(%arg0: i32, %arg1: i32) -> (i32, i32, i32, i32) {
    %c0_i32 = arith.constant 0 : i32
    %c0_i32_0 = arith.constant 0 : i32
    %c0_i32_1 = arith.constant 0 : i32
    return %arg0, %arg1, %c0_i32, %c0_i32_0 : i32, i32, i32, i32
  }
  func.func @transform_6(%arg0: i32, %arg1: i32) -> (i32, i32, i32, i32) {
    %c0_i32 = arith.constant 0 : i32
    %c0_i32_0 = arith.constant 0 : i32
    %c0_i32_1 = arith.constant 0 : i32
    return %arg0, %arg1, %c0_i32, %c0_i32_0 : i32, i32, i32, i32
  }
}

</mosaic_0001>

<llo_original>
// kernel: tpu_custom_call.1
$region0: #{tpu_custom_call.1}
  #allocation0 [shape = 'u32[]', space=smem, size = 0x4, offset = 0x4, fixed_abs, tag = 'smem constant byte address 0x4 - core index']
  #allocation1 [shape = 'u32[144,128]{1,0:T(1,128)}', space=vmem, size = 0x12000, scoped, tag = 'internal scratch']
  %s0 = inlined_call_operand.hbm [shape: f32[2,1,20,18,4], index: 0, kind: input, shape index: {}]
  %s1 = inlined_call_operand.hbm [shape: f32[36,8], index: 1, kind: input, shape index: {}]
  %s2 = inlined_call_operand.hbm [shape: f32[1,8], index: 2, kind: input, shape index: {}]
  %s3 = inlined_call_operand.hbm [shape: f32[72,8], index: 3, kind: input, shape index: {}]
  %s4 = inlined_call_operand.hbm [shape: f32[1,8], index: 4, kind: input, shape index: {}]
  %s5 = inlined_call_operand.hbm [shape: f32[2,16,16,8], index: 5, kind: output, shape index: {0}]
  %s6 = inlined_call_operand.hbm [shape: f32[2,8,8,8], index: 6, kind: output, shape index: {1}]
  %7 = xla_tuple %s5, %s6
  %s8 = sld [smem:[#allocation0]]
  $region81: #{tpu_custom_call.1} parent=0
    _
  %s10 = ssub.s32 1, %s8
  %s11 = scalar_select 0, %s10, %s8
  $region1: #{tpu_custom_call.1} parent=0
    #allocation2 [shape = 'u8[491520]{0}', space=vmem, size = 0x78000, scoped, tag = 'input window, operand 0']
    #allocation3 [shape = 's32[2]{0}', space=sflag, size = 0x8, scoped, tag = 'scoped memory for tpu_custom_call.1']
    #allocation4 [shape = 's32[2]{0}', space=sflag, size = 0x8, scoped, tag = 'scoped memory for tpu_custom_call.1']
    #allocation5 [shape = 'u8[20480]{0}', space=vmem, size = 0x5000, scoped, tag = 'input window, operand 1, single buffered']
    #allocation6 [shape = 's32[1]{0}', space=sflag, size = 0x4, scoped, tag = 'scoped memory for tpu_custom_call.1']
    #allocation7 [shape = 'u8[512]{0}', space=vmem, size = 0x400, scoped, tag = 'input window, operand 2, single buffered']
    #allocation8 [shape = 'u8[36864]{0}', space=vmem, size = 0x9000, scoped, tag = 'input window, operand 3, single buffered']
    #allocation9 [shape = 's32[1]{0}', space=sflag, size = 0x4, scoped, tag = 'scoped memory for tpu_custom_call.1']
    #allocation10 [shape = 'u8[512]{0}', space=vmem, size = 0x400, scoped, tag = 'input window, operand 4, single buffered']
    #allocation11 [shape = 'u8[262144]{0}', space=vmem, size = 0x40000, scoped, tag = 'output window, operand 0']
    #allocation12 [shape = 'u8[65536]{0}', space=vmem, size = 0x10000, scoped, tag = 'output window, operand 1']
    #allocation13 [shape = 's32[2]{0}', space=sflag, size = 0x8, scoped, tag = 'scoped memory for tpu_custom_call.1']
    %12 = vsyncpa [#allocation3], 0
    %s13 = scalar_lea.sflag [#allocation3], 1
    %14 = vsyncpa %s13, 0
    %15 = vsyncpa [#allocation6], 0
    %16 = vsyncpa [#allocation9], 0
    %17 = vsyncpa [#allocation4], 0
    %s18 = scalar_lea.sflag [#allocation4], 1
    %19 = vsyncpa %s18, 0
    %20 = vsyncpa [#allocation13], 0
    %s21 = scalar_lea.sflag [#allocation13], 1
    %22 = vsyncpa %s21, 0
    loop: start=0, step=1, limit=4
    $region2: #{tpu_custom_call.1} parent=1 // loop_pre_header
      _
    $region3: #{tpu_custom_call.1} parent=1 // loop_header
      %s24 = sphi 0, %s28
      %p25 = scmp.ge.s32.totalorder %s24, 4
      %s31 = sphi 0, %s43
      %s32 = sphi 0, %s39
      %s33 = sphi 0, %s31
      %s34 = sphi 0, %s32
      %s35 = sphi 0, %s33
      %s36 = sphi 0, %s34
      %s48 = sphi 0, %s50
      %s51 = sphi 0, %s48
      %s52 = sphi 0, %s51
      %s68 = sphi 0, %s52
      %s72 = sphi 0, %s72
      %s74 = sphi 0, %s72
      %s75 = sphi 0, %s74
      %s89 = sphi 0, %s75
      %s93 = sphi 0, %s93
      %s95 = sphi 0, %s93
      %s96 = sphi 0, %s95
      %s110 = sphi 0, %s96
      %s114 = sphi 0, %s114
      %s116 = sphi 0, %s114
      %s117 = sphi 0, %s116
      %s131 = sphi 0, %s117
      %s135 = sphi 0, %s135
      %s137 = sphi 0, %s135
      %s138 = sphi 0, %s137
      %s152 = sphi 0, %s138
      %s160 = sphi 0, %s162
      %s163 = sphi 0, %s160
      %s164 = sphi 0, %s163
      %s180 = sphi 0, %s164
      %s188 = sphi 0, %s190
      %s191 = sphi 0, %s188
      %s192 = sphi 0, %s191
      %s208 = sphi 0, %s192
    $region4: #{tpu_custom_call.1} parent=1 // loop_header_branch
      %27 = sbr.rel (%p25) target = $region8
    $region5: #{tpu_custom_call.1} parent=1 // loop_body
      %s29 = ssub.s32 %s24, 1
      %s30 = ssub.s32 %s24, 2
      %s37 = sadd.s32 1, %s32
      %p38 = scmp.ge.s32.totalorder %s37, 1
      %s39 = scalar_select %p38, 0, %s37
      %s40 = sadd.s32 1, %s31
      %s41 = scalar_select %p38, %s40, %s31
      %p42 = scmp.ge.s32.totalorder %s41, 2
      %s43 = scalar_select %p42, 0, %s41
      %s44 = ssub.s32 %s31, %s43
      %s45 = ssub.s32 %s32, %s39
      %s46 = sor.u32 %s44, %s45
      %p47 = scmp.eq.s32.totalorder %s46, 0
      %s49 = sadd.s32 %s48, 1
      %s50 = scalar_select %p47, %s48, %s49
      %p53 = pneg %p47
      %p54 = scmp.eq.s32.totalorder %s24, 1
      %p55 = por %p53, %p54
      %p56 = scmp.ne.s32.totalorder %s48, %s51
      %p57 = scmp.eq.s32.totalorder %s24, 0
      %p58 = por %p56, %p57
      %p59 = scmp.ne.s32.totalorder %s48, %s51
      %p60 = scmp.eq.s32.totalorder %s29, 1
      %p61 = por %p59, %p60
      %p62 = scmp.ne.s32.totalorder %s51, %s52
      %p63 = scmp.eq.s32.totalorder %s29, 0
      %p64 = por %p62, %p63
      %p65 = scmp.ne.s32.totalorder %s51, %s52
      %p66 = scmp.eq.s32.totalorder %s30, 1
      %p67 = por %p65, %p66
      %p69 = scmp.ne.s32.totalorder %s52, %s68
      %p70 = scmp.eq.s32.totalorder %s30, 0
      %p71 = por %p69, %p70
      %s73 = sadd.s32 %s72, 1
      %p76 = scmp.eq.s32.totalorder %s24, 1
      %p77 = scmp.ne.s32.totalorder %s72, %s74
      %p78 = scmp.eq.s32.totalorder %s24, 0
      %p79 = por %p77, %p78
      %p80 = scmp.ne.s32.totalorder %s72, %s74
      %p81 = scmp.eq.s32.totalorder %s29, 1
      %p82 = por %p80, %p81
      %p83 = scmp.ne.s32.totalorder %s74, %s75
      %p84 = scmp.eq.s32.totalorder %s29, 0
      %p85 = por %p83, %p84
      %p86 = scmp.ne.s32.totalorder %s74, %s75
      %p87 = scmp.eq.s32.totalorder %s30, 1
      %p88 = por %p86, %p87
      %p90 = scmp.ne.s32.totalorder %s75, %s89
      %p91 = scmp.eq.s32.totalorder %s30, 0
      %p92 = por %p90, %p91
      %s94 = sadd.s32 %s93, 1
      %p97 = scmp.eq.s32.totalorder %s24, 1
      %p98 = scmp.ne.s32.totalorder %s93, %s95
      %p99 = scmp.eq.s32.totalorder %s24, 0
      %p100 = por %p98, %p99
      %p101 = scmp.ne.s32.totalorder %s93, %s95
      %p102 = scmp.eq.s32.totalorder %s29, 1
      %p103 = por %p101, %p102
      %p104 = scmp.ne.s32.totalorder %s95, %s96
      %p105 = scmp.eq.s32.totalorder %s29, 0
      %p106 = por %p104, %p105
      %p107 = scmp.ne.s32.totalorder %s95, %s96
      %p108 = scmp.eq.s32.totalorder %s30, 1
      %p109 = por %p107, %p108
      %p111 = scmp.ne.s32.totalorder %s96, %s110
      %p112 = scmp.eq.s32.totalorder %s30, 0
      %p113 = por %p111, %p112
      %s115 = sadd.s32 %s114, 1
      %p118 = scmp.eq.s32.totalorder %s24, 1
      %p119 = scmp.ne.s32.totalorder %s114, %s116
      %p120 = scmp.eq.s32.totalorder %s24, 0
      %p121 = por %p119, %p120
      %p122 = scmp.ne.s32.totalorder %s114, %s116
      %p123 = scmp.eq.s32.totalorder %s29, 1
      %p124 = por %p122, %p123
      %p125 = scmp.ne.s32.totalorder %s116, %s117
      %p126 = scmp.eq.s32.totalorder %s29, 0
      %p127 = por %p125, %p126
      %p128 = scmp.ne.s32.totalorder %s116, %s117
      %p129 = scmp.eq.s32.totalorder %s30, 1
      %p130 = por %p128, %p129
      %p132 = scmp.ne.s32.totalorder %s117, %s131
      %p133 = scmp.eq.s32.totalorder %s30, 0
      %p134 = por %p132, %p133
      %s136 = sadd.s32 %s135, 1
      %p139 = scmp.eq.s32.totalorder %s24, 1
      %p140 = scmp.ne.s32.totalorder %s135, %s137
      %p141 = scmp.eq.s32.totalorder %s24, 0
      %p142 = por %p140, %p141
      %p143 = scmp.ne.s32.totalorder %s135, %s137
      %p144 = scmp.eq.s32.totalorder %s29, 1
      %p145 = por %p143, %p144
      %p146 = scmp.ne.s32.totalorder %s137, %s138
      %p147 = scmp.eq.s32.totalorder %s29, 0
      %p148 = por %p146, %p147
      %p149 = scmp.ne.s32.totalorder %s137, %s138
      %p150 = scmp.eq.s32.totalorder %s30, 1
      %p151 = por %p149, %p150
      %p153 = scmp.ne.s32.totalorder %s138, %s152
      %p154 = scmp.eq.s32.totalorder %s30, 0
      %p155 = por %p153, %p154
      %s156 = ssub.s32 %s31, %s43
      %s157 = ssub.s32 %s32, %s39
      %s158 = sor.u32 %s156, %s157
      %p159 = scmp.eq.s32.totalorder %s158, 0
      %s161 = sadd.s32 %s160, 1
      %s162 = scalar_select %p159, %s160, %s161
      %p165 = pneg %p159
      %p166 = scmp.eq.s32.totalorder %s24, 1
      %p167 = por %p165, %p166
      %p168 = scmp.ne.s32.totalorder %s160, %s163
      %p169 = scmp.eq.s32.totalorder %s24, 0
      %p170 = por %p168, %p169
      %p171 = scmp.ne.s32.totalorder %s160, %s163
      %p172 = scmp.eq.s32.totalorder %s29, 1
      %p173 = por %p171, %p172
      %p174 = scmp.ne.s32.totalorder %s163, %s164
      %p175 = scmp.eq.s32.totalorder %s29, 0
      %p176 = por %p174, %p175
      %p177 = scmp.ne.s32.totalorder %s163, %s164
      %p178 = scmp.eq.s32.totalorder %s30, 1
      %p179 = por %p177, %p178
      %p181 = scmp.ne.s32.totalorder %s164, %s180
      %p182 = scmp.eq.s32.totalorder %s30, 0
      %p183 = por %p181, %p182
      %s184 = ssub.s32 %s31, %s43
      %s185 = ssub.s32 %s32, %s39
      %s186 = sor.u32 %s184, %s185
      %p187 = scmp.eq.s32.totalorder %s186, 0
      %s189 = sadd.s32 %s188, 1
      %s190 = scalar_select %p187, %s188, %s189
      %p193 = pneg %p187
      %p194 = scmp.eq.s32.totalorder %s24, 1
      %p195 = por %p193, %p194
      %p196 = scmp.ne.s32.totalorder %s188, %s191
      %p197 = scmp.eq.s32.totalorder %s24, 0
      %p198 = por %p196, %p197
      %p199 = scmp.ne.s32.totalorder %s188, %s191
      %p200 = scmp.eq.s32.totalorder %s29, 1
      %p201 = por %p199, %p200
      %p202 = scmp.ne.s32.totalorder %s191, %s192
      %p203 = scmp.eq.s32.totalorder %s29, 0
      %p204 = por %p202, %p203
      %p205 = scmp.ne.s32.totalorder %s191, %s192
      %p206 = scmp.eq.s32.totalorder %s30, 1
      %p207 = por %p205, %p206
      %p209 = scmp.ne.s32.totalorder %s192, %s208
      %p210 = scmp.eq.s32.totalorder %s30, 0
      %p211 = por %p209, %p210
      %p212 = scmp.le.s32.totalorder 1, %s24
      %p213 = scmp.lt.s32.totalorder %s24, 3
      %p214 = pnand %p212, %p213
      %p215 = pneg %p214
      // Predicated region
      $region9: #{tpu_custom_call.1} parent=5 // pred_check
        _
      $region10: #{tpu_custom_call.1} parent=5 // pred_check_branch
        %217 = sbr.rel (%p214) target = $region12
      $region11: #{tpu_custom_call.1} parent=5 // pred_region
        %s218 = ssub.s32 %s24, 1
        // Predicated region
        $region13: #{tpu_custom_call.1} parent=11 // pred_check
          %p219 = pneg %p85
        $region14: #{tpu_custom_call.1} parent=11 // pred_check_branch
          %221 = sbr.rel (%p219) target = $region16
        $region15: #{tpu_custom_call.1} parent=11 // pred_region
          %s223 = ssub.s32 640, 640
          %224 = vsyncadd [#allocation6], %s223
          %s225 = sshll.u32 [#allocation5], 4
          %s226 = int_to_ptr.vmem [resolvable:$true] %s225
          %231 = dma.hbm_to_vmem [thread:$0]  %s1, 640, %s226, [#allocation6], 128, 128, 8
        $region16: #{tpu_custom_call.1} parent=11 // pred_fallthru
          _
        // Predicated region
        $region17: #{tpu_custom_call.1} parent=11 // pred_check
          %p232 = pneg %p106
        $region18: #{tpu_custom_call.1} parent=11 // pred_check_branch
          %234 = sbr.rel (%p232) target = $region20
        $region19: #{tpu_custom_call.1} parent=11 // pred_region
          %s236 = ssub.s32 16, 16
          %237 = vsyncadd [#allocation6], %s236
          %s239 = sshll.u32 [#allocation7], 4
          %s240 = int_to_ptr.vmem [resolvable:$true] %s239
          %242 = dma.hbm_to_vmem [thread:$0]  %s2, 16, %s240, [#allocation6]
        $region20: #{tpu_custom_call.1} parent=11 // pred_fallthru
          _
        // Predicated region
        $region21: #{tpu_custom_call.1} parent=11 // pred_check
          %p243 = pneg %p127
        $region22: #{tpu_custom_call.1} parent=11 // pred_check_branch
          %245 = sbr.rel (%p243) target = $region24
        $region23: #{tpu_custom_call.1} parent=11 // pred_region
          %s247 = ssub.s32 1152, 1152
          %248 = vsyncadd [#allocation9], %s247
          %s249 = sshll.u32 [#allocation8], 4
          %s250 = int_to_ptr.vmem [resolvable:$true] %s249
          %255 = dma.hbm_to_vmem [thread:$0]  %s3, 1152, %s250, [#allocation9], 128, 128, 8
        $region24: #{tpu_custom_call.1} parent=11 // pred_fallthru
          _
        // Predicated region
        $region25: #{tpu_custom_call.1} parent=11 // pred_check
          %p256 = pneg %p148
        $region26: #{tpu_custom_call.1} parent=11 // pred_check_branch
          %258 = sbr.rel (%p256) target = $region28
        $region27: #{tpu_custom_call.1} parent=11 // pred_region
          %s260 = ssub.s32 16, 16
          %261 = vsyncadd [#allocation9], %s260
          %s263 = sshll.u32 [#allocation10], 4
          %s264 = int_to_ptr.vmem [resolvable:$true] %s263
          %266 = dma.hbm_to_vmem [thread:$0]  %s4, 16, %s264, [#allocation9]
        $region28: #{tpu_custom_call.1} parent=11 // pred_fallthru
          _
      $region12: #{tpu_custom_call.1} parent=5 // pred_fallthru
        _
      %p267 = scmp.lt.s32.totalorder %s24, 2
      // Predicated region
      $region29: #{tpu_custom_call.1} parent=5 // pred_check
        %p268 = pneg %p267
      $region30: #{tpu_custom_call.1} parent=5 // pred_check_branch
        %270 = sbr.rel (%p268) target = $region32
      $region31: #{tpu_custom_call.1} parent=5 // pred_region
        // Predicated region
        $region33: #{tpu_custom_call.1} parent=31 // pred_check
          %p271 = pneg %p58
        $region34: #{tpu_custom_call.1} parent=31 // pred_check_branch
          %273 = sbr.rel (%p271) target = $region36
        $region35: #{tpu_custom_call.1} parent=31 // pred_region
          %s274 = sand.u32 %s48, 1
          %s275 = scalar_lea.sflag [#allocation3], %s274
          %s276 = sand.u32 %s48, 1
          %s277 = smul.addr %s276, 480
          %s278 = scalar_lea.vmem [#allocation2], %s277
          %s280 = ssub.s32 7680, 7680
          %281 = vsyncadd %s275, %s280
          %s282 = smul.addr %s32, 60
          %s283 = smul.addr %s31, 60
          %s284 = sadd.s32 %s282, %s283
          %s285 = smul.addr %s284, 128
          %s286 = scalar_lea.hbm %s0, %s285
          %s287 = sshll.u32 %s278, 4
          %s288 = int_to_ptr.vmem [resolvable:$true] %s287
          %293 = dma.hbm_to_vmem [thread:$0]  %s286, 7680, %s288, %s275, 128, 128, 8
        $region36: #{tpu_custom_call.1} parent=31 // pred_fallthru
          _
      $region32: #{tpu_custom_call.1} parent=5 // pred_fallthru
        _
      %p294 = scmp.le.s32.totalorder 1, %s24
      %p295 = scmp.lt.s32.totalorder %s24, 3
      %p296 = pnand %p294, %p295
      %p297 = pneg %p296
      // Predicated region
      $region37: #{tpu_custom_call.1} parent=5 // pred_check
        _
      $region38: #{tpu_custom_call.1} parent=5 // pred_check_branch
        %299 = sbr.rel (%p296) target = $region40
      $region39: #{tpu_custom_call.1} parent=5 // pred_region
        %s300 = ssub.s32 %s24, 1
        %s301 = sand.u32 %s51, 1
        %s302 = scalar_lea.sflag [#allocation3], %s301
        %s303 = sand.u32 %s51, 1
        %s304 = smul.addr %s303, 480
        %s305 = scalar_lea.vmem [#allocation2], %s304
        // Predicated region
        $region41: #{tpu_custom_call.1} parent=39 // pred_check
          %p306 = pneg %p64
        $region42: #{tpu_custom_call.1} parent=39 // pred_check_branch
          %308 = sbr.rel (%p306) target = $region44
        $region43: #{tpu_custom_call.1} parent=39 // pred_region
          %309 = dma.done %s302, 7680
        $region44: #{tpu_custom_call.1} parent=39 // pred_fallthru
          _
        // Predicated region
        $region45: #{tpu_custom_call.1} parent=39 // pred_check
          %p310 = pneg %p85
        $region46: #{tpu_custom_call.1} parent=39 // pred_check_branch
          %312 = sbr.rel (%p310) target = $region48
        $region47: #{tpu_custom_call.1} parent=39 // pred_region
          %313 = dma.done [#allocation6], 640
        $region48: #{tpu_custom_call.1} parent=39 // pred_fallthru
          _
        // Predicated region
        $region49: #{tpu_custom_call.1} parent=39 // pred_check
          %p314 = pneg %p106
        $region50: #{tpu_custom_call.1} parent=39 // pred_check_branch
          %316 = sbr.rel (%p314) target = $region52
        $region51: #{tpu_custom_call.1} parent=39 // pred_region
          %317 = dma.done [#allocation6], 16
        $region52: #{tpu_custom_call.1} parent=39 // pred_fallthru
          _
        // Predicated region
        $region53: #{tpu_custom_call.1} parent=39 // pred_check
          %p318 = pneg %p127
        $region54: #{tpu_custom_call.1} parent=39 // pred_check_branch
          %320 = sbr.rel (%p318) target = $region56
        $region55: #{tpu_custom_call.1} parent=39 // pred_region
          %321 = dma.done [#allocation9], 1152
        $region56: #{tpu_custom_call.1} parent=39 // pred_fallthru
          _
        // Predicated region
        $region57: #{tpu_custom_call.1} parent=39 // pred_check
          %p322 = pneg %p148
        $region58: #{tpu_custom_call.1} parent=39 // pred_check_branch
          %324 = sbr.rel (%p322) target = $region60
        $region59: #{tpu_custom_call.1} parent=39 // pred_region
          %325 = dma.done [#allocation9], 16
        $region60: #{tpu_custom_call.1} parent=39 // pred_fallthru
          _
        %s326 = sand.u32 %s51, 1
        %s327 = scalar_lea.sflag [#allocation3], %s326
        %s328 = sand.u32 %s51, 1
        %s329 = smul.addr %s328, 480
        %s330 = scalar_lea.vmem [#allocation2], %s329
        %p331 = pneg %p64
        %p332 = pneg %p61
        %p333 = pneg %p85
        %p334 = pneg %p82
        %p335 = pneg %p106
        %p336 = pneg %p103
        %p337 = pneg %p127
        %p338 = pneg %p124
        %p339 = pneg %p148
        %p340 = pneg %p145
        %p341 = pneg %p176
        %p342 = pneg %p173
        %s343 = sand.u32 %s163, 1
        %s344 = scalar_lea.sflag [#allocation4], %s343
        %s345 = sand.u32 %s163, 1
        %s346 = smul.addr %s345, 256
        %s347 = scalar_lea.vmem [#allocation11], %s346
        %p348 = pneg %p204
        %p349 = pneg %p201
        %s350 = sand.u32 %s191, 1
        %s351 = scalar_lea.sflag [#allocation13], %s350
        %s352 = sand.u32 %s191, 1
        %s353 = smul.addr %s352, 64
        %s354 = scalar_lea.vmem [#allocation12], %s353
        %s355 = smul.u32 16, %s34
        %s356 = smul.u32 8, %s34
        %v357 = vld [vmem:[%s305] sm:$0xff]
        %v358 = vld [vmem:[%s305 + $0x8] sm:$0xff]
        %v359 = vld [vmem:[%s305 + $0x18] sm:$0xff]
        %v360 = vld [vmem:[%s305 + $0x20] sm:$0xff]
        %v361 = vld [vmem:[%s305 + $0x30] sm:$0xff]
        %v362 = vld [vmem:[%s305 + $0x38] sm:$0xff]
        %v363 = vld [vmem:[%s305 + $0x48] sm:$0xff]
        %v364 = vld [vmem:[%s305 + $0x50] sm:$0xff]
        %v365 = vld [vmem:[%s305 + $0x60] sm:$0xff]
        %v366 = vld [vmem:[%s305 + $0x68] sm:$0xff]
        %v367 = vld [vmem:[%s305 + $0x78] sm:$0xff]
        %v368 = vld [vmem:[%s305 + $0x80] sm:$0xff]
        %v369 = vld [vmem:[%s305 + $0x90] sm:$0xff]
        %v370 = vld [vmem:[%s305 + $0x98] sm:$0xff]
        %v371 = vld [vmem:[%s305 + $0xa8] sm:$0xff]
        %v372 = vld [vmem:[%s305 + $0xb0] sm:$0xff]
        %v373 = vld [vmem:[%s305 + $0xc0] sm:$0xff]
        %v374 = vld [vmem:[%s305 + $0xc8] sm:$0xff]
        %v375 = vld [vmem:[%s305 + $0xd8] sm:$0xff]
        %v376 = vld [vmem:[%s305 + $0xe0] sm:$0xff]
        %v377 = vld [vmem:[%s305 + $0xf0] sm:$0xff]
        %v378 = vld [vmem:[%s305 + $0xf8] sm:$0xff]
        %v379 = vld [vmem:[%s305 + $0x108] sm:$0xff]
        %v380 = vld [vmem:[%s305 + $0x110] sm:$0xff]
        %v381 = vld [vmem:[%s305 + $0x120] sm:$0xff]
        %v382 = vld [vmem:[%s305 + $0x128] sm:$0xff]
        %v383 = vld [vmem:[%s305 + $0x138] sm:$0xff]
        %v384 = vld [vmem:[%s305 + $0x140] sm:$0xff]
        %v385 = vld [vmem:[%s305 + $0x150] sm:$0xff]
        %v386 = vld [vmem:[%s305 + $0x158] sm:$0xff]
        %v387 = vld [vmem:[%s305 + $0x168] sm:$0xff]
        %v388 = vld [vmem:[%s305 + $0x170] sm:$0xff]
        %v389 = vld [vmem:[%s305 + $0x180] sm:$0xff]
        %v390 = vld [vmem:[%s305 + $0x188] sm:$0xff]
        %v391 = vld [vmem:[%s305 + $0x198] sm:$0xff]
        %v392 = vld [vmem:[%s305 + $0x1a0] sm:$0xff]
        %v393 = vld [vmem:[%s305 + $0x1] sm:$0xff]
        %v394 = vld [vmem:[%s305 + $0x9] sm:$0xff]
        %v395 = vld [vmem:[%s305 + $0x19] sm:$0xff]
        %v396 = vld [vmem:[%s305 + $0x21] sm:$0xff]
        %v397 = vld [vmem:[%s305 + $0x31] sm:$0xff]
        %v398 = vld [vmem:[%s305 + $0x39] sm:$0xff]
        %v399 = vld [vmem:[%s305 + $0x49] sm:$0xff]
        %v400 = vld [vmem:[%s305 + $0x51] sm:$0xff]
        %v401 = vld [vmem:[%s305 + $0x61] sm:$0xff]
        %v402 = vld [vmem:[%s305 + $0x69] sm:$0xff]
        %v403 = vld [vmem:[%s305 + $0x79] sm:$0xff]
        %v404 = vld [vmem:[%s305 + $0x81] sm:$0xff]
        %v405 = vld [vmem:[%s305 + $0x91] sm:$0xff]
        %v406 = vld [vmem:[%s305 + $0x99] sm:$0xff]
        %v407 = vld [vmem:[%s305 + $0xa9] sm:$0xff]
        %v408 = vld [vmem:[%s305 + $0xb1] sm:$0xff]
        %v409 = vld [vmem:[%s305 + $0xc1] sm:$0xff]
        %v410 = vld [vmem:[%s305 + $0xc9] sm:$0xff]
        %v411 = vld [vmem:[%s305 + $0xd9] sm:$0xff]
        %v412 = vld [vmem:[%s305 + $0xe1] sm:$0xff]
        %v413 = vld [vmem:[%s305 + $0xf1] sm:$0xff]
        %v414 = vld [vmem:[%s305 + $0xf9] sm:$0xff]
        %v415 = vld [vmem:[%s305 + $0x109] sm:$0xff]
        %v416 = vld [vmem:[%s305 + $0x111] sm:$0xff]
        %v417 = vld [vmem:[%s305 + $0x121] sm:$0xff]
        %v418 = vld [vmem:[%s305 + $0x129] sm:$0xff]
        %v419 = vld [vmem:[%s305 + $0x139] sm:$0xff]
        %v420 = vld [vmem:[%s305 + $0x141] sm:$0xff]
        %v421 = vld [vmem:[%s305 + $0x151] sm:$0xff]
        %v422 = vld [vmem:[%s305 + $0x159] sm:$0xff]
        %v423 = vld [vmem:[%s305 + $0x169] sm:$0xff]
        %v424 = vld [vmem:[%s305 + $0x171] sm:$0xff]
        %v425 = vld [vmem:[%s305 + $0x181] sm:$0xff]
        %v426 = vld [vmem:[%s305 + $0x189] sm:$0xff]
        %v427 = vld [vmem:[%s305 + $0x199] sm:$0xff]
        %v428 = vld [vmem:[%s305 + $0x1a1] sm:$0xff]
        %v429 = vld [vmem:[%s305 + $0x2] sm:$0xff]
        %v430 = vld [vmem:[%s305 + $0xa] sm:$0xff]
        %v431 = vld [vmem:[%s305 + $0x1a] sm:$0xff]
        %v432 = vld [vmem:[%s305 + $0x22] sm:$0xff]
        %v433 = vld [vmem:[%s305 + $0x32] sm:$0xff]
        %v434 = vld [vmem:[%s305 + $0x3a] sm:$0xff]
        %v435 = vld [vmem:[%s305 + $0x4a] sm:$0xff]
        %v436 = vld [vmem:[%s305 + $0x52] sm:$0xff]
        %v437 = vld [vmem:[%s305 + $0x62] sm:$0xff]
        %v438 = vld [vmem:[%s305 + $0x6a] sm:$0xff]
        %v439 = vld [vmem:[%s305 + $0x7a] sm:$0xff]
        %v440 = vld [vmem:[%s305 + $0x82] sm:$0xff]
        %v441 = vld [vmem:[%s305 + $0x92] sm:$0xff]
        %v442 = vld [vmem:[%s305 + $0x9a] sm:$0xff]
        %v443 = vld [vmem:[%s305 + $0xaa] sm:$0xff]
        %v444 = vld [vmem:[%s305 + $0xb2] sm:$0xff]
        %v445 = vld [vmem:[%s305 + $0xc2] sm:$0xff]
        %v446 = vld [vmem:[%s305 + $0xca] sm:$0xff]
        %v447 = vld [vmem:[%s305 + $0xda] sm:$0xff]
        %v448 = vld [vmem:[%s305 + $0xe2] sm:$0xff]
        %v449 = vld [vmem:[%s305 + $0xf2] sm:$0xff]
        %v450 = vld [vmem:[%s305 + $0xfa] sm:$0xff]
        %v451 = vld [vmem:[%s305 + $0x10a] sm:$0xff]
        %v452 = vld [vmem:[%s305 + $0x112] sm:$0xff]
        %v453 = vld [vmem:[%s305 + $0x122] sm:$0xff]
        %v454 = vld [vmem:[%s305 + $0x12a] sm:$0xff]
        %v455 = vld [vmem:[%s305 + $0x13a] sm:$0xff]
        %v456 = vld [vmem:[%s305 + $0x142] sm:$0xff]
        %v457 = vld [vmem:[%s305 + $0x152] sm:$0xff]
        %v458 = vld [vmem:[%s305 + $0x15a] sm:$0xff]
        %v459 = vld [vmem:[%s305 + $0x16a] sm:$0xff]
        %v460 = vld [vmem:[%s305 + $0x172] sm:$0xff]
        %v461 = vld [vmem:[%s305 + $0x182] sm:$0xff]
        %v462 = vld [vmem:[%s305 + $0x18a] sm:$0xff]
        %v463 = vld [vmem:[%s305 + $0x19a] sm:$0xff]
        %v464 = vld [vmem:[%s305 + $0x1a2] sm:$0xff]
        %s465 = scalar_lea.vmem %s305, 24 [#allocation2]
        %v466 = vld [vmem:[%s465] sm:$0xff]
        %v467 = vld [vmem:[%s465 + $0x8] sm:$0xff]
        %v468 = vld [vmem:[%s465 + $0x18] sm:$0xff]
        %v469 = vld [vmem:[%s465 + $0x20] sm:$0xff]
        %v470 = vld [vmem:[%s465 + $0x30] sm:$0xff]
        %v471 = vld [vmem:[%s465 + $0x38] sm:$0xff]
        %v472 = vld [vmem:[%s465 + $0x48] sm:$0xff]
        %v473 = vld [vmem:[%s465 + $0x50] sm:$0xff]
        %v474 = vld [vmem:[%s465 + $0x60] sm:$0xff]
        %v475 = vld [vmem:[%s465 + $0x68] sm:$0xff]
        %v476 = vld [vmem:[%s465 + $0x78] sm:$0xff]
        %v477 = vld [vmem:[%s465 + $0x80] sm:$0xff]
        %v478 = vld [vmem:[%s465 + $0x90] sm:$0xff]
        %v479 = vld [vmem:[%s465 + $0x98] sm:$0xff]
        %v480 = vld [vmem:[%s465 + $0xa8] sm:$0xff]
        %v481 = vld [vmem:[%s465 + $0xb0] sm:$0xff]
        %v482 = vld [vmem:[%s465 + $0xc0] sm:$0xff]
        %v483 = vld [vmem:[%s465 + $0xc8] sm:$0xff]
        %v484 = vld [vmem:[%s465 + $0xd8] sm:$0xff]
        %v485 = vld [vmem:[%s465 + $0xe0] sm:$0xff]
        %v486 = vld [vmem:[%s465 + $0xf0] sm:$0xff]
        %v487 = vld [vmem:[%s465 + $0xf8] sm:$0xff]
        %v488 = vld [vmem:[%s465 + $0x108] sm:$0xff]
        %v489 = vld [vmem:[%s465 + $0x110] sm:$0xff]
        %v490 = vld [vmem:[%s465 + $0x120] sm:$0xff]
        %v491 = vld [vmem:[%s465 + $0x128] sm:$0xff]
        %v492 = vld [vmem:[%s465 + $0x138] sm:$0xff]
        %v493 = vld [vmem:[%s465 + $0x140] sm:$0xff]
        %v494 = vld [vmem:[%s465 + $0x150] sm:$0xff]
        %v495 = vld [vmem:[%s465 + $0x158] sm:$0xff]
        %v496 = vld [vmem:[%s465 + $0x168] sm:$0xff]
        %v497 = vld [vmem:[%s465 + $0x170] sm:$0xff]
        %v498 = vld [vmem:[%s465 + $0x180] sm:$0xff]
        %v499 = vld [vmem:[%s465 + $0x188] sm:$0xff]
        %v500 = vld [vmem:[%s465 + $0x198] sm:$0xff]
        %v501 = vld [vmem:[%s465 + $0x1a0] sm:$0xff]
        %v502 = vld [vmem:[%s465 + $0x1] sm:$0xff]
        %v503 = vld [vmem:[%s465 + $0x9] sm:$0xff]
        %v504 = vld [vmem:[%s465 + $0x19] sm:$0xff]
        %v505 = vld [vmem:[%s465 + $0x21] sm:$0xff]
        %v506 = vld [vmem:[%s465 + $0x31] sm:$0xff]
        %v507 = vld [vmem:[%s465 + $0x39] sm:$0xff]
        %v508 = vld [vmem:[%s465 + $0x49] sm:$0xff]
        %v509 = vld [vmem:[%s465 + $0x51] sm:$0xff]
        %v510 = vld [vmem:[%s465 + $0x61] sm:$0xff]
        %v511 = vld [vmem:[%s465 + $0x69] sm:$0xff]
        %v512 = vld [vmem:[%s465 + $0x79] sm:$0xff]
        %v513 = vld [vmem:[%s465 + $0x81] sm:$0xff]
        %v514 = vld [vmem:[%s465 + $0x91] sm:$0xff]
        %v515 = vld [vmem:[%s465 + $0x99] sm:$0xff]
        %v516 = vld [vmem:[%s465 + $0xa9] sm:$0xff]
        %v517 = vld [vmem:[%s465 + $0xb1] sm:$0xff]
        %v518 = vld [vmem:[%s465 + $0xc1] sm:$0xff]
        %v519 = vld [vmem:[%s465 + $0xc9] sm:$0xff]
        %v520 = vld [vmem:[%s465 + $0xd9] sm:$0xff]
        %v521 = vld [vmem:[%s465 + $0xe1] sm:$0xff]
        %v522 = vld [vmem:[%s465 + $0xf1] sm:$0xff]
        %v523 = vld [vmem:[%s465 + $0xf9] sm:$0xff]
        %v524 = vld [vmem:[%s465 + $0x109] sm:$0xff]
        %v525 = vld [vmem:[%s465 + $0x111] sm:$0xff]
        %v526 = vld [vmem:[%s465 + $0x121] sm:$0xff]
        %v527 = vld [vmem:[%s465 + $0x129] sm:$0xff]
        %v528 = vld [vmem:[%s465 + $0x139] sm:$0xff]
        %v529 = vld [vmem:[%s465 + $0x141] sm:$0xff]
        %v530 = vld [vmem:[%s465 + $0x151] sm:$0xff]
        %v531 = vld [vmem:[%s465 + $0x159] sm:$0xff]
        %v532 = vld [vmem:[%s465 + $0x169] sm:$0xff]
        %v533 = vld [vmem:[%s465 + $0x171] sm:$0xff]
        %v534 = vld [vmem:[%s465 + $0x181] sm:$0xff]
        %v535 = vld [vmem:[%s465 + $0x189] sm:$0xff]
        %v536 = vld [vmem:[%s465 + $0x199] sm:$0xff]
        %v537 = vld [vmem:[%s465 + $0x1a1] sm:$0xff]
        %v538 = vld [vmem:[%s465 + $0x2] sm:$0xff]
        %v539 = vld [vmem:[%s465 + $0xa] sm:$0xff]
        %v540 = vld [vmem:[%s465 + $0x1a] sm:$0xff]
        %v541 = vld [vmem:[%s465 + $0x22] sm:$0xff]
        %v542 = vld [vmem:[%s465 + $0x32] sm:$0xff]
        %v543 = vld [vmem:[%s465 + $0x3a] sm:$0xff]
        %v544 = vld [vmem:[%s465 + $0x4a] sm:$0xff]
        %v545 = vld [vmem:[%s465 + $0x52] sm:$0xff]
        %v546 = vld [vmem:[%s465 + $0x62] sm:$0xff]
        %v547 = vld [vmem:[%s465 + $0x6a] sm:$0xff]
        %v548 = vld [vmem:[%s465 + $0x7a] sm:$0xff]
        %v549 = vld [vmem:[%s465 + $0x82] sm:$0xff]
        %v550 = vld [vmem:[%s465 + $0x92] sm:$0xff]
        %v551 = vld [vmem:[%s465 + $0x9a] sm:$0xff]
        %v552 = vld [vmem:[%s465 + $0xaa] sm:$0xff]
        %v553 = vld [vmem:[%s465 + $0xb2] sm:$0xff]
        %v554 = vld [vmem:[%s465 + $0xc2] sm:$0xff]
        %v555 = vld [vmem:[%s465 + $0xca] sm:$0xff]
        %v556 = vld [vmem:[%s465 + $0xda] sm:$0xff]
        %v557 = vld [vmem:[%s465 + $0xe2] sm:$0xff]
        %v558 = vld [vmem:[%s465 + $0xf2] sm:$0xff]
        %v559 = vld [vmem:[%s465 + $0xfa] sm:$0xff]
        %v560 = vld [vmem:[%s465 + $0x10a] sm:$0xff]
        %v561 = vld [vmem:[%s465 + $0x112] sm:$0xff]
        %v562 = vld [vmem:[%s465 + $0x122] sm:$0xff]
        %v563 = vld [vmem:[%s465 + $0x12a] sm:$0xff]
        %v564 = vld [vmem:[%s465 + $0x13a] sm:$0xff]
        %v565 = vld [vmem:[%s465 + $0x142] sm:$0xff]
        %v566 = vld [vmem:[%s465 + $0x152] sm:$0xff]
        %v567 = vld [vmem:[%s465 + $0x15a] sm:$0xff]
        %v568 = vld [vmem:[%s465 + $0x16a] sm:$0xff]
        %v569 = vld [vmem:[%s465 + $0x172] sm:$0xff]
        %v570 = vld [vmem:[%s465 + $0x182] sm:$0xff]
        %v571 = vld [vmem:[%s465 + $0x18a] sm:$0xff]
        %v572 = vld [vmem:[%s465 + $0x19a] sm:$0xff]
        %v573 = vld [vmem:[%s465 + $0x1a2] sm:$0xff]
        %s574 = scalar_lea.vmem %s305, 48 [#allocation2]
        %v575 = vld [vmem:[%s574] sm:$0xff]
        %v576 = vld [vmem:[%s574 + $0x8] sm:$0xff]
        %v577 = vld [vmem:[%s574 + $0x18] sm:$0xff]
        %v578 = vld [vmem:[%s574 + $0x20] sm:$0xff]
        %v579 = vld [vmem:[%s574 + $0x30] sm:$0xff]
        %v580 = vld [vmem:[%s574 + $0x38] sm:$0xff]
        %v581 = vld [vmem:[%s574 + $0x48] sm:$0xff]
        %v582 = vld [vmem:[%s574 + $0x50] sm:$0xff]
        %v583 = vld [vmem:[%s574 + $0x60] sm:$0xff]
        %v584 = vld [vmem:[%s574 + $0x68] sm:$0xff]
        %v585 = vld [vmem:[%s574 + $0x78] sm:$0xff]
        %v586 = vld [vmem:[%s574 + $0x80] sm:$0xff]
        %v587 = vld [vmem:[%s574 + $0x90] sm:$0xff]
        %v588 = vld [vmem:[%s574 + $0x98] sm:$0xff]
        %v589 = vld [vmem:[%s574 + $0xa8] sm:$0xff]
        %v590 = vld [vmem:[%s574 + $0xb0] sm:$0xff]
        %v591 = vld [vmem:[%s574 + $0xc0] sm:$0xff]
        %v592 = vld [vmem:[%s574 + $0xc8] sm:$0xff]
        %v593 = vld [vmem:[%s574 + $0xd8] sm:$0xff]
        %v594 = vld [vmem:[%s574 + $0xe0] sm:$0xff]
        %v595 = vld [vmem:[%s574 + $0xf0] sm:$0xff]
        %v596 = vld [vmem:[%s574 + $0xf8] sm:$0xff]
        %v597 = vld [vmem:[%s574 + $0x108] sm:$0xff]
        %v598 = vld [vmem:[%s574 + $0x110] sm:$0xff]
        %v599 = vld [vmem:[%s574 + $0x120] sm:$0xff]
        %v600 = vld [vmem:[%s574 + $0x128] sm:$0xff]
        %v601 = vld [vmem:[%s574 + $0x138] sm:$0xff]
        %v602 = vld [vmem:[%s574 + $0x140] sm:$0xff]
        %v603 = vld [vmem:[%s574 + $0x150] sm:$0xff]
        %v604 = vld [vmem:[%s574 + $0x158] sm:$0xff]
        %v605 = vld [vmem:[%s574 + $0x168] sm:$0xff]
        %v606 = vld [vmem:[%s574 + $0x170] sm:$0xff]
        %v607 = vld [vmem:[%s574 + $0x180] sm:$0xff]
        %v608 = vld [vmem:[%s574 + $0x188] sm:$0xff]
        %v609 = vld [vmem:[%s574 + $0x198] sm:$0xff]
        %v610 = vld [vmem:[%s574 + $0x1a0] sm:$0xff]
        %v611 = vld [vmem:[%s574 + $0x1] sm:$0xff]
        %v612 = vld [vmem:[%s574 + $0x9] sm:$0xff]
        %v613 = vld [vmem:[%s574 + $0x19] sm:$0xff]
        %v614 = vld [vmem:[%s574 + $0x21] sm:$0xff]
        %v615 = vld [vmem:[%s574 + $0x31] sm:$0xff]
        %v616 = vld [vmem:[%s574 + $0x39] sm:$0xff]
        %v617 = vld [vmem:[%s574 + $0x49] sm:$0xff]
        %v618 = vld [vmem:[%s574 + $0x51] sm:$0xff]
        %v619 = vld [vmem:[%s574 + $0x61] sm:$0xff]
        %v620 = vld [vmem:[%s574 + $0x69] sm:$0xff]
        %v621 = vld [vmem:[%s574 + $0x79] sm:$0xff]
        %v622 = vld [vmem:[%s574 + $0x81] sm:$0xff]
        %v623 = vld [vmem:[%s574 + $0x91] sm:$0xff]
        %v624 = vld [vmem:[%s574 + $0x99] sm:$0xff]
        %v625 = vld [vmem:[%s574 + $0xa9] sm:$0xff]
        %v626 = vld [vmem:[%s574 + $0xb1] sm:$0xff]
        %v627 = vld [vmem:[%s574 + $0xc1] sm:$0xff]
        %v628 = vld [vmem:[%s574 + $0xc9] sm:$0xff]
        %v629 = vld [vmem:[%s574 + $0xd9] sm:$0xff]
        %v630 = vld [vmem:[%s574 + $0xe1] sm:$0xff]
        %v631 = vld [vmem:[%s574 + $0xf1] sm:$0xff]
        %v632 = vld [vmem:[%s574 + $0xf9] sm:$0xff]
        %v633 = vld [vmem:[%s574 + $0x109] sm:$0xff]
        %v634 = vld [vmem:[%s574 + $0x111] sm:$0xff]
        %v635 = vld [vmem:[%s574 + $0x121] sm:$0xff]
        %v636 = vld [vmem:[%s574 + $0x129] sm:$0xff]
        %v637 = vld [vmem:[%s574 + $0x139] sm:$0xff]
        %v638 = vld [vmem:[%s574 + $0x141] sm:$0xff]
        %v639 = vld [vmem:[%s574 + $0x151] sm:$0xff]
        %v640 = vld [vmem:[%s574 + $0x159] sm:$0xff]
        %v641 = vld [vmem:[%s574 + $0x169] sm:$0xff]
        %v642 = vld [vmem:[%s574 + $0x171] sm:$0xff]
        %v643 = vld [vmem:[%s574 + $0x181] sm:$0xff]
        %v644 = vld [vmem:[%s574 + $0x189] sm:$0xff]
        %v645 = vld [vmem:[%s574 + $0x199] sm:$0xff]
        %v646 = vld [vmem:[%s574 + $0x1a1] sm:$0xff]
        %v647 = vld [vmem:[%s574 + $0x2] sm:$0xff]
        %v648 = vld [vmem:[%s574 + $0xa] sm:$0xff]
        %v649 = vld [vmem:[%s574 + $0x1a] sm:$0xff]
        %v650 = vld [vmem:[%s574 + $0x22] sm:$0xff]
        %v651 = vld [vmem:[%s574 + $0x32] sm:$0xff]
        %v652 = vld [vmem:[%s574 + $0x3a] sm:$0xff]
        %v653 = vld [vmem:[%s574 + $0x4a] sm:$0xff]
        %v654 = vld [vmem:[%s574 + $0x52] sm:$0xff]
        %v655 = vld [vmem:[%s574 + $0x62] sm:$0xff]
        %v656 = vld [vmem:[%s574 + $0x6a] sm:$0xff]
        %v657 = vld [vmem:[%s574 + $0x7a] sm:$0xff]
        %v658 = vld [vmem:[%s574 + $0x82] sm:$0xff]
        %v659 = vld [vmem:[%s574 + $0x92] sm:$0xff]
        %v660 = vld [vmem:[%s574 + $0x9a] sm:$0xff]
        %v661 = vld [vmem:[%s574 + $0xaa] sm:$0xff]
        %v662 = vld [vmem:[%s574 + $0xb2] sm:$0xff]
        %v663 = vld [vmem:[%s574 + $0xc2] sm:$0xff]
        %v664 = vld [vmem:[%s574 + $0xca] sm:$0xff]
        %v665 = vld [vmem:[%s574 + $0xda] sm:$0xff]
        %v666 = vld [vmem:[%s574 + $0xe2] sm:$0xff]
        %v667 = vld [vmem:[%s574 + $0xf2] sm:$0xff]
        %v668 = vld [vmem:[%s574 + $0xfa] sm:$0xff]
        %v669 = vld [vmem:[%s574 + $0x10a] sm:$0xff]
        %v670 = vld [vmem:[%s574 + $0x112] sm:$0xff]
        %v671 = vld [vmem:[%s574 + $0x122] sm:$0xff]
        %v672 = vld [vmem:[%s574 + $0x12a] sm:$0xff]
        %v673 = vld [vmem:[%s574 + $0x13a] sm:$0xff]
        %v674 = vld [vmem:[%s574 + $0x142] sm:$0xff]
        %v675 = vld [vmem:[%s574 + $0x152] sm:$0xff]
        %v676 = vld [vmem:[%s574 + $0x15a] sm:$0xff]
        %v677 = vld [vmem:[%s574 + $0x16a] sm:$0xff]
        %v678 = vld [vmem:[%s574 + $0x172] sm:$0xff]
        %v679 = vld [vmem:[%s574 + $0x182] sm:$0xff]
        %v680 = vld [vmem:[%s574 + $0x18a] sm:$0xff]
        %v681 = vld [vmem:[%s574 + $0x19a] sm:$0xff]
        %v682 = vld [vmem:[%s574 + $0x1a2] sm:$0xff]
        %719 = vrot.lane.b32.xlu0 %v393, 4
        %v720 = vpop.permute.xlu0 %719
        %721 = vrot.lane.b32.xlu0 %v394, 4
        %v722 = vpop.permute.xlu0 %721
        %723 = vrot.lane.b32.xlu0 %v395, 4
        %v724 = vpop.permute.xlu0 %723
        %725 = vrot.lane.b32.xlu0 %v396, 4
        %v726 = vpop.permute.xlu0 %725
        %727 = vrot.lane.b32.xlu0 %v397, 4
        %v728 = vpop.permute.xlu0 %727
        %729 = vrot.lane.b32.xlu0 %v398, 4
        %v730 = vpop.permute.xlu0 %729
        %731 = vrot.lane.b32.xlu0 %v399, 4
        %v732 = vpop.permute.xlu0 %731
        %733 = vrot.lane.b32.xlu0 %v400, 4
        %v734 = vpop.permute.xlu0 %733
        %735 = vrot.lane.b32.xlu0 %v401, 4
        %v736 = vpop.permute.xlu0 %735
        %737 = vrot.lane.b32.xlu0 %v402, 4
        %v738 = vpop.permute.xlu0 %737
        %739 = vrot.lane.b32.xlu0 %v403, 4
        %v740 = vpop.permute.xlu0 %739
        %741 = vrot.lane.b32.xlu0 %v404, 4
        %v742 = vpop.permute.xlu0 %741
        %743 = vrot.lane.b32.xlu0 %v405, 4
        %v744 = vpop.permute.xlu0 %743
        %745 = vrot.lane.b32.xlu0 %v406, 4
        %v746 = vpop.permute.xlu0 %745
        %747 = vrot.lane.b32.xlu0 %v407, 4
        %v748 = vpop.permute.xlu0 %747
        %749 = vrot.lane.b32.xlu0 %v408, 4
        %v750 = vpop.permute.xlu0 %749
        %751 = vrot.lane.b32.xlu0 %v409, 4
        %v752 = vpop.permute.xlu0 %751
        %753 = vrot.lane.b32.xlu0 %v410, 4
        %v754 = vpop.permute.xlu0 %753
        %755 = vrot.lane.b32.xlu0 %v411, 4
        %v756 = vpop.permute.xlu0 %755
        %757 = vrot.lane.b32.xlu0 %v412, 4
        %v758 = vpop.permute.xlu0 %757
        %759 = vrot.lane.b32.xlu0 %v413, 4
        %v760 = vpop.permute.xlu0 %759
        %761 = vrot.lane.b32.xlu0 %v414, 4
        %v762 = vpop.permute.xlu0 %761
        %763 = vrot.lane.b32.xlu0 %v415, 4
        %v764 = vpop.permute.xlu0 %763
        %765 = vrot.lane.b32.xlu0 %v416, 4
        %v766 = vpop.permute.xlu0 %765
        %767 = vrot.lane.b32.xlu0 %v417, 4
        %v768 = vpop.permute.xlu0 %767
        %769 = vrot.lane.b32.xlu0 %v418, 4
        %v770 = vpop.permute.xlu0 %769
        %771 = vrot.lane.b32.xlu0 %v419, 4
        %v772 = vpop.permute.xlu0 %771
        %773 = vrot.lane.b32.xlu0 %v420, 4
        %v774 = vpop.permute.xlu0 %773
        %775 = vrot.lane.b32.xlu0 %v421, 4
        %v776 = vpop.permute.xlu0 %775
        %777 = vrot.lane.b32.xlu0 %v422, 4
        %v778 = vpop.permute.xlu0 %777
        %779 = vrot.lane.b32.xlu0 %v423, 4
        %v780 = vpop.permute.xlu0 %779
        %781 = vrot.lane.b32.xlu0 %v424, 4
        %v782 = vpop.permute.xlu0 %781
        %783 = vrot.lane.b32.xlu0 %v425, 4
        %v784 = vpop.permute.xlu0 %783
        %785 = vrot.lane.b32.xlu0 %v426, 4
        %v786 = vpop.permute.xlu0 %785
        %787 = vrot.lane.b32.xlu0 %v427, 4
        %v788 = vpop.permute.xlu0 %787
        %789 = vrot.lane.b32.xlu0 %v428, 4
        %v790 = vpop.permute.xlu0 %789
        %863 = vrot.lane.b32.xlu0 %v429, 8
        %v864 = vpop.permute.xlu0 %863
        %865 = vrot.lane.b32.xlu0 %v430, 8
        %v866 = vpop.permute.xlu0 %865
        %867 = vrot.lane.b32.xlu0 %v431, 8
        %v868 = vpop.permute.xlu0 %867
        %869 = vrot.lane.b32.xlu0 %v432, 8
        %v870 = vpop.permute.xlu0 %869
        %871 = vrot.lane.b32.xlu0 %v433, 8
        %v872 = vpop.permute.xlu0 %871
        %873 = vrot.lane.b32.xlu0 %v434, 8
        %v874 = vpop.permute.xlu0 %873
        %875 = vrot.lane.b32.xlu0 %v435, 8
        %v876 = vpop.permute.xlu0 %875
        %877 = vrot.lane.b32.xlu0 %v436, 8
        %v878 = vpop.permute.xlu0 %877
        %879 = vrot.lane.b32.xlu0 %v437, 8
        %v880 = vpop.permute.xlu0 %879
        %881 = vrot.lane.b32.xlu0 %v438, 8
        %v882 = vpop.permute.xlu0 %881
        %883 = vrot.lane.b32.xlu0 %v439, 8
        %v884 = vpop.permute.xlu0 %883
        %885 = vrot.lane.b32.xlu0 %v440, 8
        %v886 = vpop.permute.xlu0 %885
        %887 = vrot.lane.b32.xlu0 %v441, 8
        %v888 = vpop.permute.xlu0 %887
        %889 = vrot.lane.b32.xlu0 %v442, 8
        %v890 = vpop.permute.xlu0 %889
        %891 = vrot.lane.b32.xlu0 %v443, 8
        %v892 = vpop.permute.xlu0 %891
        %893 = vrot.lane.b32.xlu0 %v444, 8
        %v894 = vpop.permute.xlu0 %893
        %895 = vrot.lane.b32.xlu0 %v445, 8
        %v896 = vpop.permute.xlu0 %895
        %897 = vrot.lane.b32.xlu0 %v446, 8
        %v898 = vpop.permute.xlu0 %897
        %899 = vrot.lane.b32.xlu0 %v447, 8
        %v900 = vpop.permute.xlu0 %899
        %901 = vrot.lane.b32.xlu0 %v448, 8
        %v902 = vpop.permute.xlu0 %901
        %903 = vrot.lane.b32.xlu0 %v449, 8
        %v904 = vpop.permute.xlu0 %903
        %905 = vrot.lane.b32.xlu0 %v450, 8
        %v906 = vpop.permute.xlu0 %905
        %907 = vrot.lane.b32.xlu0 %v451, 8
        %v908 = vpop.permute.xlu0 %907
        %909 = vrot.lane.b32.xlu0 %v452, 8
        %v910 = vpop.permute.xlu0 %909
        %911 = vrot.lane.b32.xlu0 %v453, 8
        %v912 = vpop.permute.xlu0 %911
        %913 = vrot.lane.b32.xlu0 %v454, 8
        %v914 = vpop.permute.xlu0 %913
        %915 = vrot.lane.b32.xlu0 %v455, 8
        %v916 = vpop.permute.xlu0 %915
        %917 = vrot.lane.b32.xlu0 %v456, 8
        %v918 = vpop.permute.xlu0 %917
        %919 = vrot.lane.b32.xlu0 %v457, 8
        %v920 = vpop.permute.xlu0 %919
        %921 = vrot.lane.b32.xlu0 %v458, 8
        %v922 = vpop.permute.xlu0 %921
        %923 = vrot.lane.b32.xlu0 %v459, 8
        %v924 = vpop.permute.xlu0 %923
        %925 = vrot.lane.b32.xlu0 %v460, 8
        %v926 = vpop.permute.xlu0 %925
        %927 = vrot.lane.b32.xlu0 %v461, 8
        %v928 = vpop.permute.xlu0 %927
        %929 = vrot.lane.b32.xlu0 %v462, 8
        %v930 = vpop.permute.xlu0 %929
        %931 = vrot.lane.b32.xlu0 %v463, 8
        %v932 = vpop.permute.xlu0 %931
        %933 = vrot.lane.b32.xlu0 %v464, 8
        %v934 = vpop.permute.xlu0 %933
        %1007 = vrot.lane.b32.xlu0 %v466, 12
        %v1008 = vpop.permute.xlu0 %1007
        %1009 = vrot.lane.b32.xlu0 %v467, 12
        %v1010 = vpop.permute.xlu0 %1009
        %1011 = vrot.lane.b32.xlu0 %v468, 12
        %v1012 = vpop.permute.xlu0 %1011
        %1013 = vrot.lane.b32.xlu0 %v469, 12
        %v1014 = vpop.permute.xlu0 %1013
        %1015 = vrot.lane.b32.xlu0 %v470, 12
        %v1016 = vpop.permute.xlu0 %1015
        %1017 = vrot.lane.b32.xlu0 %v471, 12
        %v1018 = vpop.permute.xlu0 %1017
        %1019 = vrot.lane.b32.xlu0 %v472, 12
        %v1020 = vpop.permute.xlu0 %1019
        %1021 = vrot.lane.b32.xlu0 %v473, 12
        %v1022 = vpop.permute.xlu0 %1021
        %1023 = vrot.lane.b32.xlu0 %v474, 12
        %v1024 = vpop.permute.xlu0 %1023
        %1025 = vrot.lane.b32.xlu0 %v475, 12
        %v1026 = vpop.permute.xlu0 %1025
        %1027 = vrot.lane.b32.xlu0 %v476, 12
        %v1028 = vpop.permute.xlu0 %1027
        %1029 = vrot.lane.b32.xlu0 %v477, 12
        %v1030 = vpop.permute.xlu0 %1029
        %1031 = vrot.lane.b32.xlu0 %v478, 12
        %v1032 = vpop.permute.xlu0 %1031
        %1033 = vrot.lane.b32.xlu0 %v479, 12
        %v1034 = vpop.permute.xlu0 %1033
        %1035 = vrot.lane.b32.xlu0 %v480, 12
        %v1036 = vpop.permute.xlu0 %1035
        %1037 = vrot.lane.b32.xlu0 %v481, 12
        %v1038 = vpop.permute.xlu0 %1037
        %1039 = vrot.lane.b32.xlu0 %v482, 12
        %v1040 = vpop.permute.xlu0 %1039
        %1041 = vrot.lane.b32.xlu0 %v483, 12
        %v1042 = vpop.permute.xlu0 %1041
        %1043 = vrot.lane.b32.xlu0 %v484, 12
        %v1044 = vpop.permute.xlu0 %1043
        %1045 = vrot.lane.b32.xlu0 %v485, 12
        %v1046 = vpop.permute.xlu0 %1045
        %1047 = vrot.lane.b32.xlu0 %v486, 12
        %v1048 = vpop.permute.xlu0 %1047
        %1049 = vrot.lane.b32.xlu0 %v487, 12
        %v1050 = vpop.permute.xlu0 %1049
        %1051 = vrot.lane.b32.xlu0 %v488, 12
        %v1052 = vpop.permute.xlu0 %1051
        %1053 = vrot.lane.b32.xlu0 %v489, 12
        %v1054 = vpop.permute.xlu0 %1053
        %1055 = vrot.lane.b32.xlu0 %v490, 12
        %v1056 = vpop.permute.xlu0 %1055
        %1057 = vrot.lane.b32.xlu0 %v491, 12
        %v1058 = vpop.permute.xlu0 %1057
        %1059 = vrot.lane.b32.xlu0 %v492, 12
        %v1060 = vpop.permute.xlu0 %1059
        %1061 = vrot.lane.b32.xlu0 %v493, 12
        %v1062 = vpop.permute.xlu0 %1061
        %1063 = vrot.lane.b32.xlu0 %v494, 12
        %v1064 = vpop.permute.xlu0 %1063
        %1065 = vrot.lane.b32.xlu0 %v495, 12
        %v1066 = vpop.permute.xlu0 %1065
        %1067 = vrot.lane.b32.xlu0 %v496, 12
        %v1068 = vpop.permute.xlu0 %1067
        %1069 = vrot.lane.b32.xlu0 %v497, 12
        %v1070 = vpop.permute.xlu0 %1069
        %1071 = vrot.lane.b32.xlu0 %v498, 12
        %v1072 = vpop.permute.xlu0 %1071
        %1073 = vrot.lane.b32.xlu0 %v499, 12
        %v1074 = vpop.permute.xlu0 %1073
        %1075 = vrot.lane.b32.xlu0 %v500, 12
        %v1076 = vpop.permute.xlu0 %1075
        %1077 = vrot.lane.b32.xlu0 %v501, 12
        %v1078 = vpop.permute.xlu0 %1077
        %1151 = vrot.lane.b32.xlu0 %v502, 16
        %v1152 = vpop.permute.xlu0 %1151
        %1153 = vrot.lane.b32.xlu0 %v503, 16
        %v1154 = vpop.permute.xlu0 %1153
        %1155 = vrot.lane.b32.xlu0 %v504, 16
        %v1156 = vpop.permute.xlu0 %1155
        %1157 = vrot.lane.b32.xlu0 %v505, 16
        %v1158 = vpop.permute.xlu0 %1157
        %1159 = vrot.lane.b32.xlu0 %v506, 16
        %v1160 = vpop.permute.xlu0 %1159
        %1161 = vrot.lane.b32.xlu0 %v507, 16
        %v1162 = vpop.permute.xlu0 %1161
        %1163 = vrot.lane.b32.xlu0 %v508, 16
        %v1164 = vpop.permute.xlu0 %1163
        %1165 = vrot.lane.b32.xlu0 %v509, 16
        %v1166 = vpop.permute.xlu0 %1165
        %1167 = vrot.lane.b32.xlu0 %v510, 16
        %v1168 = vpop.permute.xlu0 %1167
        %1169 = vrot.lane.b32.xlu0 %v511, 16
        %v1170 = vpop.permute.xlu0 %1169
        %1171 = vrot.lane.b32.xlu0 %v512, 16
        %v1172 = vpop.permute.xlu0 %1171
        %1173 = vrot.lane.b32.xlu0 %v513, 16
        %v1174 = vpop.permute.xlu0 %1173
        %1175 = vrot.lane.b32.xlu0 %v514, 16
        %v1176 = vpop.permute.xlu0 %1175
        %1177 = vrot.lane.b32.xlu0 %v515, 16
        %v1178 = vpop.permute.xlu0 %1177
        %1179 = vrot.lane.b32.xlu0 %v516, 16
        %v1180 = vpop.permute.xlu0 %1179
        %1181 = vrot.lane.b32.xlu0 %v517, 16
        %v1182 = vpop.permute.xlu0 %1181
        %1183 = vrot.lane.b32.xlu0 %v518, 16
        %v1184 = vpop.permute.xlu0 %1183
        %1185 = vrot.lane.b32.xlu0 %v519, 16
        %v1186 = vpop.permute.xlu0 %1185
        %1187 = vrot.lane.b32.xlu0 %v520, 16
        %v1188 = vpop.permute.xlu0 %1187
        %1189 = vrot.lane.b32.xlu0 %v521, 16
        %v1190 = vpop.permute.xlu0 %1189
        %1191 = vrot.lane.b32.xlu0 %v522, 16
        %v1192 = vpop.permute.xlu0 %1191
        %1193 = vrot.lane.b32.xlu0 %v523, 16
        %v1194 = vpop.permute.xlu0 %1193
        %1195 = vrot.lane.b32.xlu0 %v524, 16
        %v1196 = vpop.permute.xlu0 %1195
        %1197 = vrot.lane.b32.xlu0 %v525, 16
        %v1198 = vpop.permute.xlu0 %1197
        %1199 = vrot.lane.b32.xlu0 %v526, 16
        %v1200 = vpop.permute.xlu0 %1199
        %1201 = vrot.lane.b32.xlu0 %v527, 16
        %v1202 = vpop.permute.xlu0 %1201
        %1203 = vrot.lane.b32.xlu0 %v528, 16
        %v1204 = vpop.permute.xlu0 %1203
        %1205 = vrot.lane.b32.xlu0 %v529, 16
        %v1206 = vpop.permute.xlu0 %1205
        %1207 = vrot.lane.b32.xlu0 %v530, 16
        %v1208 = vpop.permute.xlu0 %1207
        %1209 = vrot.lane.b32.xlu0 %v531, 16
        %v1210 = vpop.permute.xlu0 %1209
        %1211 = vrot.lane.b32.xlu0 %v532, 16
        %v1212 = vpop.permute.xlu0 %1211
        %1213 = vrot.lane.b32.xlu0 %v533, 16
        %v1214 = vpop.permute.xlu0 %1213
        %1215 = vrot.lane.b32.xlu0 %v534, 16
        %v1216 = vpop.permute.xlu0 %1215
        %1217 = vrot.lane.b32.xlu0 %v535, 16
        %v1218 = vpop.permute.xlu0 %1217
        %1219 = vrot.lane.b32.xlu0 %v536, 16
        %v1220 = vpop.permute.xlu0 %1219
        %1221 = vrot.lane.b32.xlu0 %v537, 16
        %v1222 = vpop.permute.xlu0 %1221
        %1295 = vrot.lane.b32.xlu0 %v538, 20
        %v1296 = vpop.permute.xlu0 %1295
        %1297 = vrot.lane.b32.xlu0 %v539, 20
        %v1298 = vpop.permute.xlu0 %1297
        %1299 = vrot.lane.b32.xlu0 %v540, 20
        %v1300 = vpop.permute.xlu0 %1299
        %1301 = vrot.lane.b32.xlu0 %v541, 20
        %v1302 = vpop.permute.xlu0 %1301
        %1303 = vrot.lane.b32.xlu0 %v542, 20
        %v1304 = vpop.permute.xlu0 %1303
        %1305 = vrot.lane.b32.xlu0 %v543, 20
        %v1306 = vpop.permute.xlu0 %1305
        %1307 = vrot.lane.b32.xlu0 %v544, 20
        %v1308 = vpop.permute.xlu0 %1307
        %1309 = vrot.lane.b32.xlu0 %v545, 20
        %v1310 = vpop.permute.xlu0 %1309
        %1311 = vrot.lane.b32.xlu0 %v546, 20
        %v1312 = vpop.permute.xlu0 %1311
        %1313 = vrot.lane.b32.xlu0 %v547, 20
        %v1314 = vpop.permute.xlu0 %1313
        %1315 = vrot.lane.b32.xlu0 %v548, 20
        %v1316 = vpop.permute.xlu0 %1315
        %1317 = vrot.lane.b32.xlu0 %v549, 20
        %v1318 = vpop.permute.xlu0 %1317
        %1319 = vrot.lane.b32.xlu0 %v550, 20
        %v1320 = vpop.permute.xlu0 %1319
        %1321 = vrot.lane.b32.xlu0 %v551, 20
        %v1322 = vpop.permute.xlu0 %1321
        %1323 = vrot.lane.b32.xlu0 %v552, 20
        %v1324 = vpop.permute.xlu0 %1323
        %1325 = vrot.lane.b32.xlu0 %v553, 20
        %v1326 = vpop.permute.xlu0 %1325
        %1327 = vrot.lane.b32.xlu0 %v554, 20
        %v1328 = vpop.permute.xlu0 %1327
        %1329 = vrot.lane.b32.xlu0 %v555, 20
        %v1330 = vpop.permute.xlu0 %1329
        %1331 = vrot.lane.b32.xlu0 %v556, 20
        %v1332 = vpop.permute.xlu0 %1331
        %1333 = vrot.lane.b32.xlu0 %v557, 20
        %v1334 = vpop.permute.xlu0 %1333
        %1335 = vrot.lane.b32.xlu0 %v558, 20
        %v1336 = vpop.permute.xlu0 %1335
        %1337 = vrot.lane.b32.xlu0 %v559, 20
        %v1338 = vpop.permute.xlu0 %1337
        %1339 = vrot.lane.b32.xlu0 %v560, 20
        %v1340 = vpop.permute.xlu0 %1339
        %1341 = vrot.lane.b32.xlu0 %v561, 20
        %v1342 = vpop.permute.xlu0 %1341
        %1343 = vrot.lane.b32.xlu0 %v562, 20
        %v1344 = vpop.permute.xlu0 %1343
        %1345 = vrot.lane.b32.xlu0 %v563, 20
        %v1346 = vpop.permute.xlu0 %1345
        %1347 = vrot.lane.b32.xlu0 %v564, 20
        %v1348 = vpop.permute.xlu0 %1347
        %1349 = vrot.lane.b32.xlu0 %v565, 20
        %v1350 = vpop.permute.xlu0 %1349
        %1351 = vrot.lane.b32.xlu0 %v566, 20
        %v1352 = vpop.permute.xlu0 %1351
        %1353 = vrot.lane.b32.xlu0 %v567, 20
        %v1354 = vpop.permute.xlu0 %1353
        %1355 = vrot.lane.b32.xlu0 %v568, 20
        %v1356 = vpop.permute.xlu0 %1355
        %1357 = vrot.lane.b32.xlu0 %v569, 20
        %v1358 = vpop.permute.xlu0 %1357
        %1359 = vrot.lane.b32.xlu0 %v570, 20
        %v1360 = vpop.permute.xlu0 %1359
        %1361 = vrot.lane.b32.xlu0 %v571, 20
        %v1362 = vpop.permute.xlu0 %1361
        %1363 = vrot.lane.b32.xlu0 %v572, 20
        %v1364 = vpop.permute.xlu0 %1363
        %1365 = vrot.lane.b32.xlu0 %v573, 20
        %v1366 = vpop.permute.xlu0 %1365
        %1439 = vrot.lane.b32.xlu0 %v575, 24
        %v1440 = vpop.permute.xlu0 %1439
        %1441 = vrot.lane.b32.xlu0 %v576, 24
        %v1442 = vpop.permute.xlu0 %1441
        %1443 = vrot.lane.b32.xlu0 %v577, 24
        %v1444 = vpop.permute.xlu0 %1443
        %1445 = vrot.lane.b32.xlu0 %v578, 24
        %v1446 = vpop.permute.xlu0 %1445
        %1447 = vrot.lane.b32.xlu0 %v579, 24
        %v1448 = vpop.permute.xlu0 %1447
        %1449 = vrot.lane.b32.xlu0 %v580, 24
        %v1450 = vpop.permute.xlu0 %1449
        %1451 = vrot.lane.b32.xlu0 %v581, 24
        %v1452 = vpop.permute.xlu0 %1451
        %1453 = vrot.lane.b32.xlu0 %v582, 24
        %v1454 = vpop.permute.xlu0 %1453
        %1455 = vrot.lane.b32.xlu0 %v583, 24
        %v1456 = vpop.permute.xlu0 %1455
        %1457 = vrot.lane.b32.xlu0 %v584, 24
        %v1458 = vpop.permute.xlu0 %1457
        %1459 = vrot.lane.b32.xlu0 %v585, 24
        %v1460 = vpop.permute.xlu0 %1459
        %1461 = vrot.lane.b32.xlu0 %v586, 24
        %v1462 = vpop.permute.xlu0 %1461
        %1463 = vrot.lane.b32.xlu0 %v587, 24
        %v1464 = vpop.permute.xlu0 %1463
        %1465 = vrot.lane.b32.xlu0 %v588, 24
        %v1466 = vpop.permute.xlu0 %1465
        %1467 = vrot.lane.b32.xlu0 %v589, 24
        %v1468 = vpop.permute.xlu0 %1467
        %1469 = vrot.lane.b32.xlu0 %v590, 24
        %v1470 = vpop.permute.xlu0 %1469
        %1471 = vrot.lane.b32.xlu0 %v591, 24
        %v1472 = vpop.permute.xlu0 %1471
        %1473 = vrot.lane.b32.xlu0 %v592, 24
        %v1474 = vpop.permute.xlu0 %1473
        %1475 = vrot.lane.b32.xlu0 %v593, 24
        %v1476 = vpop.permute.xlu0 %1475
        %1477 = vrot.lane.b32.xlu0 %v594, 24
        %v1478 = vpop.permute.xlu0 %1477
        %1479 = vrot.lane.b32.xlu0 %v595, 24
        %v1480 = vpop.permute.xlu0 %1479
        %1481 = vrot.lane.b32.xlu0 %v596, 24
        %v1482 = vpop.permute.xlu0 %1481
        %1483 = vrot.lane.b32.xlu0 %v597, 24
        %v1484 = vpop.permute.xlu0 %1483
        %1485 = vrot.lane.b32.xlu0 %v598, 24
        %v1486 = vpop.permute.xlu0 %1485
        %1487 = vrot.lane.b32.xlu0 %v599, 24
        %v1488 = vpop.permute.xlu0 %1487
        %1489 = vrot.lane.b32.xlu0 %v600, 24
        %v1490 = vpop.permute.xlu0 %1489
        %1491 = vrot.lane.b32.xlu0 %v601, 24
        %v1492 = vpop.permute.xlu0 %1491
        %1493 = vrot.lane.b32.xlu0 %v602, 24
        %v1494 = vpop.permute.xlu0 %1493
        %1495 = vrot.lane.b32.xlu0 %v603, 24
        %v1496 = vpop.permute.xlu0 %1495
        %1497 = vrot.lane.b32.xlu0 %v604, 24
        %v1498 = vpop.permute.xlu0 %1497
        %1499 = vrot.lane.b32.xlu0 %v605, 24
        %v1500 = vpop.permute.xlu0 %1499
        %1501 = vrot.lane.b32.xlu0 %v606, 24
        %v1502 = vpop.permute.xlu0 %1501
        %1503 = vrot.lane.b32.xlu0 %v607, 24
        %v1504 = vpop.permute.xlu0 %1503
        %1505 = vrot.lane.b32.xlu0 %v608, 24
        %v1506 = vpop.permute.xlu0 %1505
        %1507 = vrot.lane.b32.xlu0 %v609, 24
        %v1508 = vpop.permute.xlu0 %1507
        %1509 = vrot.lane.b32.xlu0 %v610, 24
        %v1510 = vpop.permute.xlu0 %1509
        %1583 = vrot.lane.b32.xlu0 %v611, 28
        %v1584 = vpop.permute.xlu0 %1583
        %1585 = vrot.lane.b32.xlu0 %v612, 28
        %v1586 = vpop.permute.xlu0 %1585
        %1587 = vrot.lane.b32.xlu0 %v613, 28
        %v1588 = vpop.permute.xlu0 %1587
        %1589 = vrot.lane.b32.xlu0 %v614, 28
        %v1590 = vpop.permute.xlu0 %1589
        %1591 = vrot.lane.b32.xlu0 %v615, 28
        %v1592 = vpop.permute.xlu0 %1591
        %1593 = vrot.lane.b32.xlu0 %v616, 28
        %v1594 = vpop.permute.xlu0 %1593
        %1595 = vrot.lane.b32.xlu0 %v617, 28
        %v1596 = vpop.permute.xlu0 %1595
        %1597 = vrot.lane.b32.xlu0 %v618, 28
        %v1598 = vpop.permute.xlu0 %1597
        %1599 = vrot.lane.b32.xlu0 %v619, 28
        %v1600 = vpop.permute.xlu0 %1599
        %1601 = vrot.lane.b32.xlu0 %v620, 28
        %v1602 = vpop.permute.xlu0 %1601
        %1603 = vrot.lane.b32.xlu0 %v621, 28
        %v1604 = vpop.permute.xlu0 %1603
        %1605 = vrot.lane.b32.xlu0 %v622, 28
        %v1606 = vpop.permute.xlu0 %1605
        %1607 = vrot.lane.b32.xlu0 %v623, 28
        %v1608 = vpop.permute.xlu0 %1607
        %1609 = vrot.lane.b32.xlu0 %v624, 28
        %v1610 = vpop.permute.xlu0 %1609
        %1611 = vrot.lane.b32.xlu0 %v625, 28
        %v1612 = vpop.permute.xlu0 %1611
        %1613 = vrot.lane.b32.xlu0 %v626, 28
        %v1614 = vpop.permute.xlu0 %1613
        %1615 = vrot.lane.b32.xlu0 %v627, 28
        %v1616 = vpop.permute.xlu0 %1615
        %1617 = vrot.lane.b32.xlu0 %v628, 28
        %v1618 = vpop.permute.xlu0 %1617
        %1619 = vrot.lane.b32.xlu0 %v629, 28
        %v1620 = vpop.permute.xlu0 %1619
        %1621 = vrot.lane.b32.xlu0 %v630, 28
        %v1622 = vpop.permute.xlu0 %1621
        %1623 = vrot.lane.b32.xlu0 %v631, 28
        %v1624 = vpop.permute.xlu0 %1623
        %1625 = vrot.lane.b32.xlu0 %v632, 28
        %v1626 = vpop.permute.xlu0 %1625
        %1627 = vrot.lane.b32.xlu0 %v633, 28
        %v1628 = vpop.permute.xlu0 %1627
        %1629 = vrot.lane.b32.xlu0 %v634, 28
        %v1630 = vpop.permute.xlu0 %1629
        %1631 = vrot.lane.b32.xlu0 %v635, 28
        %v1632 = vpop.permute.xlu0 %1631
        %1633 = vrot.lane.b32.xlu0 %v636, 28
        %v1634 = vpop.permute.xlu0 %1633
        %1635 = vrot.lane.b32.xlu0 %v637, 28
        %v1636 = vpop.permute.xlu0 %1635
        %1637 = vrot.lane.b32.xlu0 %v638, 28
        %v1638 = vpop.permute.xlu0 %1637
        %1639 = vrot.lane.b32.xlu0 %v639, 28
        %v1640 = vpop.permute.xlu0 %1639
        %1641 = vrot.lane.b32.xlu0 %v640, 28
        %v1642 = vpop.permute.xlu0 %1641
        %1643 = vrot.lane.b32.xlu0 %v641, 28
        %v1644 = vpop.permute.xlu0 %1643
        %1645 = vrot.lane.b32.xlu0 %v642, 28
        %v1646 = vpop.permute.xlu0 %1645
        %1647 = vrot.lane.b32.xlu0 %v643, 28
        %v1648 = vpop.permute.xlu0 %1647
        %1649 = vrot.lane.b32.xlu0 %v644, 28
        %v1650 = vpop.permute.xlu0 %1649
        %1651 = vrot.lane.b32.xlu0 %v645, 28
        %v1652 = vpop.permute.xlu0 %1651
        %1653 = vrot.lane.b32.xlu0 %v646, 28
        %v1654 = vpop.permute.xlu0 %1653
        %1727 = vrot.lane.b32.xlu0 %v647, 32
        %v1728 = vpop.permute.xlu0 %1727
        %1729 = vrot.lane.b32.xlu0 %v648, 32
        %v1730 = vpop.permute.xlu0 %1729
        %1731 = vrot.lane.b32.xlu0 %v649, 32
        %v1732 = vpop.permute.xlu0 %1731
        %1733 = vrot.lane.b32.xlu0 %v650, 32
        %v1734 = vpop.permute.xlu0 %1733
        %1735 = vrot.lane.b32.xlu0 %v651, 32
        %v1736 = vpop.permute.xlu0 %1735
        %1737 = vrot.lane.b32.xlu0 %v652, 32
        %v1738 = vpop.permute.xlu0 %1737
        %1739 = vrot.lane.b32.xlu0 %v653, 32
        %v1740 = vpop.permute.xlu0 %1739
        %1741 = vrot.lane.b32.xlu0 %v654, 32
        %v1742 = vpop.permute.xlu0 %1741
        %1743 = vrot.lane.b32.xlu0 %v655, 32
        %v1744 = vpop.permute.xlu0 %1743
        %1745 = vrot.lane.b32.xlu0 %v656, 32
        %v1746 = vpop.permute.xlu0 %1745
        %1747 = vrot.lane.b32.xlu0 %v657, 32
        %v1748 = vpop.permute.xlu0 %1747
        %1749 = vrot.lane.b32.xlu0 %v658, 32
        %v1750 = vpop.permute.xlu0 %1749
        %1751 = vrot.lane.b32.xlu0 %v659, 32
        %v1752 = vpop.permute.xlu0 %1751
        %1753 = vrot.lane.b32.xlu0 %v660, 32
        %v1754 = vpop.permute.xlu0 %1753
        %1755 = vrot.lane.b32.xlu0 %v661, 32
        %v1756 = vpop.permute.xlu0 %1755
        %1757 = vrot.lane.b32.xlu0 %v662, 32
        %v1758 = vpop.permute.xlu0 %1757
        %1759 = vrot.lane.b32.xlu0 %v663, 32
        %v1760 = vpop.permute.xlu0 %1759
        %1761 = vrot.lane.b32.xlu0 %v664, 32
        %v1762 = vpop.permute.xlu0 %1761
        %1763 = vrot.lane.b32.xlu0 %v665, 32
        %v1764 = vpop.permute.xlu0 %1763
        %1765 = vrot.lane.b32.xlu0 %v666, 32
        %v1766 = vpop.permute.xlu0 %1765
        %1767 = vrot.lane.b32.xlu0 %v667, 32
        %v1768 = vpop.permute.xlu0 %1767
        %1769 = vrot.lane.b32.xlu0 %v668, 32
        %v1770 = vpop.permute.xlu0 %1769
        %1771 = vrot.lane.b32.xlu0 %v669, 32
        %v1772 = vpop.permute.xlu0 %1771
        %1773 = vrot.lane.b32.xlu0 %v670, 32
        %v1774 = vpop.permute.xlu0 %1773
        %1775 = vrot.lane.b32.xlu0 %v671, 32
        %v1776 = vpop.permute.xlu0 %1775
        %1777 = vrot.lane.b32.xlu0 %v672, 32
        %v1778 = vpop.permute.xlu0 %1777
        %1779 = vrot.lane.b32.xlu0 %v673, 32
        %v1780 = vpop.permute.xlu0 %1779
        %1781 = vrot.lane.b32.xlu0 %v674, 32
        %v1782 = vpop.permute.xlu0 %1781
        %1783 = vrot.lane.b32.xlu0 %v675, 32
        %v1784 = vpop.permute.xlu0 %1783
        %1785 = vrot.lane.b32.xlu0 %v676, 32
        %v1786 = vpop.permute.xlu0 %1785
        %1787 = vrot.lane.b32.xlu0 %v677, 32
        %v1788 = vpop.permute.xlu0 %1787
        %1789 = vrot.lane.b32.xlu0 %v678, 32
        %v1790 = vpop.permute.xlu0 %1789
        %1791 = vrot.lane.b32.xlu0 %v679, 32
        %v1792 = vpop.permute.xlu0 %1791
        %1793 = vrot.lane.b32.xlu0 %v680, 32
        %v1794 = vpop.permute.xlu0 %1793
        %1795 = vrot.lane.b32.xlu0 %v681, 32
        %v1796 = vpop.permute.xlu0 %1795
        %1797 = vrot.lane.b32.xlu0 %v682, 32
        %v1798 = vpop.permute.xlu0 %1797
        %vm1835 = vcmask 31744
        %v1836 = vsel %vm1835, %v357, %v720
        %v1837 = vsel %vm1835, %v358, %v722
        %v1838 = vsel %vm1835, %v359, %v724
        %v1839 = vsel %vm1835, %v360, %v726
        %v1840 = vsel %vm1835, %v361, %v728
        %v1841 = vsel %vm1835, %v362, %v730
        %v1842 = vsel %vm1835, %v363, %v732
        %v1843 = vsel %vm1835, %v364, %v734
        %v1844 = vsel %vm1835, %v365, %v736
        %v1845 = vsel %vm1835, %v366, %v738
        %v1846 = vsel %vm1835, %v367, %v740
        %v1847 = vsel %vm1835, %v368, %v742
        %v1848 = vsel %vm1835, %v369, %v744
        %v1849 = vsel %vm1835, %v370, %v746
        %v1850 = vsel %vm1835, %v371, %v748
        %v1851 = vsel %vm1835, %v372, %v750
        %v1852 = vsel %vm1835, %v373, %v752
        %v1853 = vsel %vm1835, %v374, %v754
        %v1854 = vsel %vm1835, %v375, %v756
        %v1855 = vsel %vm1835, %v376, %v758
        %v1856 = vsel %vm1835, %v377, %v760
        %v1857 = vsel %vm1835, %v378, %v762
        %v1858 = vsel %vm1835, %v379, %v764
        %v1859 = vsel %vm1835, %v380, %v766
        %v1860 = vsel %vm1835, %v381, %v768
        %v1861 = vsel %vm1835, %v382, %v770
        %v1862 = vsel %vm1835, %v383, %v772
        %v1863 = vsel %vm1835, %v384, %v774
        %v1864 = vsel %vm1835, %v385, %v776
        %v1865 = vsel %vm1835, %v386, %v778
        %v1866 = vsel %vm1835, %v387, %v780
        %v1867 = vsel %vm1835, %v388, %v782
        %v1868 = vsel %vm1835, %v389, %v784
        %v1869 = vsel %vm1835, %v390, %v786
        %v1870 = vsel %vm1835, %v391, %v788
        %v1871 = vsel %vm1835, %v392, %v790
        %vm1872 = vcmask 64512
        %v1873 = vsel %vm1872, %v1836, %v864
        %v1874 = vsel %vm1872, %v1837, %v866
        %v1875 = vsel %vm1872, %v1838, %v868
        %v1876 = vsel %vm1872, %v1839, %v870
        %v1877 = vsel %vm1872, %v1840, %v872
        %v1878 = vsel %vm1872, %v1841, %v874
        %v1879 = vsel %vm1872, %v1842, %v876
        %v1880 = vsel %vm1872, %v1843, %v878
        %v1881 = vsel %vm1872, %v1844, %v880
        %v1882 = vsel %vm1872, %v1845, %v882
        %v1883 = vsel %vm1872, %v1846, %v884
        %v1884 = vsel %vm1872, %v1847, %v886
        %v1885 = vsel %vm1872, %v1848, %v888
        %v1886 = vsel %vm1872, %v1849, %v890
        %v1887 = vsel %vm1872, %v1850, %v892
        %v1888 = vsel %vm1872, %v1851, %v894
        %v1889 = vsel %vm1872, %v1852, %v896
        %v1890 = vsel %vm1872, %v1853, %v898
        %v1891 = vsel %vm1872, %v1854, %v900
        %v1892 = vsel %vm1872, %v1855, %v902
        %v1893 = vsel %vm1872, %v1856, %v904
        %v1894 = vsel %vm1872, %v1857, %v906
        %v1895 = vsel %vm1872, %v1858, %v908
        %v1896 = vsel %vm1872, %v1859, %v910
        %v1897 = vsel %vm1872, %v1860, %v912
        %v1898 = vsel %vm1872, %v1861, %v914
        %v1899 = vsel %vm1872, %v1862, %v916
        %v1900 = vsel %vm1872, %v1863, %v918
        %v1901 = vsel %vm1872, %v1864, %v920
        %v1902 = vsel %vm1872, %v1865, %v922
        %v1903 = vsel %vm1872, %v1866, %v924
        %v1904 = vsel %vm1872, %v1867, %v926
        %v1905 = vsel %vm1872, %v1868, %v928
        %v1906 = vsel %vm1872, %v1869, %v930
        %v1907 = vsel %vm1872, %v1870, %v932
        %v1908 = vsel %vm1872, %v1871, %v934
        %vm1909 = vcmask 97280
        %v1910 = vsel %vm1909, %v1873, %v1008
        %v1911 = vsel %vm1909, %v1874, %v1010
        %v1912 = vsel %vm1909, %v1875, %v1012
        %v1913 = vsel %vm1909, %v1876, %v1014
        %v1914 = vsel %vm1909, %v1877, %v1016
        %v1915 = vsel %vm1909, %v1878, %v1018
        %v1916 = vsel %vm1909, %v1879, %v1020
        %v1917 = vsel %vm1909, %v1880, %v1022
        %v1918 = vsel %vm1909, %v1881, %v1024
        %v1919 = vsel %vm1909, %v1882, %v1026
        %v1920 = vsel %vm1909, %v1883, %v1028
        %v1921 = vsel %vm1909, %v1884, %v1030
        %v1922 = vsel %vm1909, %v1885, %v1032
        %v1923 = vsel %vm1909, %v1886, %v1034
        %v1924 = vsel %vm1909, %v1887, %v1036
        %v1925 = vsel %vm1909, %v1888, %v1038
        %v1926 = vsel %vm1909, %v1889, %v1040
        %v1927 = vsel %vm1909, %v1890, %v1042
        %v1928 = vsel %vm1909, %v1891, %v1044
        %v1929 = vsel %vm1909, %v1892, %v1046
        %v1930 = vsel %vm1909, %v1893, %v1048
        %v1931 = vsel %vm1909, %v1894, %v1050
        %v1932 = vsel %vm1909, %v1895, %v1052
        %v1933 = vsel %vm1909, %v1896, %v1054
        %v1934 = vsel %vm1909, %v1897, %v1056
        %v1935 = vsel %vm1909, %v1898, %v1058
        %v1936 = vsel %vm1909, %v1899, %v1060
        %v1937 = vsel %vm1909, %v1900, %v1062
        %v1938 = vsel %vm1909, %v1901, %v1064
        %v1939 = vsel %vm1909, %v1902, %v1066
        %v1940 = vsel %vm1909, %v1903, %v1068
        %v1941 = vsel %vm1909, %v1904, %v1070
        %v1942 = vsel %vm1909, %v1905, %v1072
        %v1943 = vsel %vm1909, %v1906, %v1074
        %v1944 = vsel %vm1909, %v1907, %v1076
        %v1945 = vsel %vm1909, %v1908, %v1078
        %vm1946 = vcmask 130048
        %v1947 = vsel %vm1946, %v1910, %v1152
        %v1948 = vsel %vm1946, %v1911, %v1154
        %v1949 = vsel %vm1946, %v1912, %v1156
        %v1950 = vsel %vm1946, %v1913, %v1158
        %v1951 = vsel %vm1946, %v1914, %v1160
        %v1952 = vsel %vm1946, %v1915, %v1162
        %v1953 = vsel %vm1946, %v1916, %v1164
        %v1954 = vsel %vm1946, %v1917, %v1166
        %v1955 = vsel %vm1946, %v1918, %v1168
        %v1956 = vsel %vm1946, %v1919, %v1170
        %v1957 = vsel %vm1946, %v1920, %v1172
        %v1958 = vsel %vm1946, %v1921, %v1174
        %v1959 = vsel %vm1946, %v1922, %v1176
        %v1960 = vsel %vm1946, %v1923, %v1178
        %v1961 = vsel %vm1946, %v1924, %v1180
        %v1962 = vsel %vm1946, %v1925, %v1182
        %v1963 = vsel %vm1946, %v1926, %v1184
        %v1964 = vsel %vm1946, %v1927, %v1186
        %v1965 = vsel %vm1946, %v1928, %v1188
        %v1966 = vsel %vm1946, %v1929, %v1190
        %v1967 = vsel %vm1946, %v1930, %v1192
        %v1968 = vsel %vm1946, %v1931, %v1194
        %v1969 = vsel %vm1946, %v1932, %v1196
        %v1970 = vsel %vm1946, %v1933, %v1198
        %v1971 = vsel %vm1946, %v1934, %v1200
        %v1972 = vsel %vm1946, %v1935, %v1202
        %v1973 = vsel %vm1946, %v1936, %v1204
        %v1974 = vsel %vm1946, %v1937, %v1206
        %v1975 = vsel %vm1946, %v1938, %v1208
        %v1976 = vsel %vm1946, %v1939, %v1210
        %v1977 = vsel %vm1946, %v1940, %v1212
        %v1978 = vsel %vm1946, %v1941, %v1214
        %v1979 = vsel %vm1946, %v1942, %v1216
        %v1980 = vsel %vm1946, %v1943, %v1218
        %v1981 = vsel %vm1946, %v1944, %v1220
        %v1982 = vsel %vm1946, %v1945, %v1222
        %vm1983 = vcmask 162816
        %v1984 = vsel %vm1983, %v1947, %v1296
        %v1985 = vsel %vm1983, %v1948, %v1298
        %v1986 = vsel %vm1983, %v1949, %v1300
        %v1987 = vsel %vm1983, %v1950, %v1302
        %v1988 = vsel %vm1983, %v1951, %v1304
        %v1989 = vsel %vm1983, %v1952, %v1306
        %v1990 = vsel %vm1983, %v1953, %v1308
        %v1991 = vsel %vm1983, %v1954, %v1310
        %v1992 = vsel %vm1983, %v1955, %v1312
        %v1993 = vsel %vm1983, %v1956, %v1314
        %v1994 = vsel %vm1983, %v1957, %v1316
        %v1995 = vsel %vm1983, %v1958, %v1318
        %v1996 = vsel %vm1983, %v1959, %v1320
        %v1997 = vsel %vm1983, %v1960, %v1322
        %v1998 = vsel %vm1983, %v1961, %v1324
        %v1999 = vsel %vm1983, %v1962, %v1326
        %v2000 = vsel %vm1983, %v1963, %v1328
        %v2001 = vsel %vm1983, %v1964, %v1330
        %v2002 = vsel %vm1983, %v1965, %v1332
        %v2003 = vsel %vm1983, %v1966, %v1334
        %v2004 = vsel %vm1983, %v1967, %v1336
        %v2005 = vsel %vm1983, %v1968, %v1338
        %v2006 = vsel %vm1983, %v1969, %v1340
        %v2007 = vsel %vm1983, %v1970, %v1342
        %v2008 = vsel %vm1983, %v1971, %v1344
        %v2009 = vsel %vm1983, %v1972, %v1346
        %v2010 = vsel %vm1983, %v1973, %v1348
        %v2011 = vsel %vm1983, %v1974, %v1350
        %v2012 = vsel %vm1983, %v1975, %v1352
        %v2013 = vsel %vm1983, %v1976, %v1354
        %v2014 = vsel %vm1983, %v1977, %v1356
        %v2015 = vsel %vm1983, %v1978, %v1358
        %v2016 = vsel %vm1983, %v1979, %v1360
        %v2017 = vsel %vm1983, %v1980, %v1362
        %v2018 = vsel %vm1983, %v1981, %v1364
        %v2019 = vsel %vm1983, %v1982, %v1366
        %vm2020 = vcmask 195584
        %v2021 = vsel %vm2020, %v1984, %v1440
        %v2022 = vsel %vm2020, %v1985, %v1442
        %v2023 = vsel %vm2020, %v1986, %v1444
        %v2024 = vsel %vm2020, %v1987, %v1446
        %v2025 = vsel %vm2020, %v1988, %v1448
        %v2026 = vsel %vm2020, %v1989, %v1450
        %v2027 = vsel %vm2020, %v1990, %v1452
        %v2028 = vsel %vm2020, %v1991, %v1454
        %v2029 = vsel %vm2020, %v1992, %v1456
        %v2030 = vsel %vm2020, %v1993, %v1458
        %v2031 = vsel %vm2020, %v1994, %v1460
        %v2032 = vsel %vm2020, %v1995, %v1462
        %v2033 = vsel %vm2020, %v1996, %v1464
        %v2034 = vsel %vm2020, %v1997, %v1466
        %v2035 = vsel %vm2020, %v1998, %v1468
        %v2036 = vsel %vm2020, %v1999, %v1470
        %v2037 = vsel %vm2020, %v2000, %v1472
        %v2038 = vsel %vm2020, %v2001, %v1474
        %v2039 = vsel %vm2020, %v2002, %v1476
        %v2040 = vsel %vm2020, %v2003, %v1478
        %v2041 = vsel %vm2020, %v2004, %v1480
        %v2042 = vsel %vm2020, %v2005, %v1482
        %v2043 = vsel %vm2020, %v2006, %v1484
        %v2044 = vsel %vm2020, %v2007, %v1486
        %v2045 = vsel %vm2020, %v2008, %v1488
        %v2046 = vsel %vm2020, %v2009, %v1490
        %v2047 = vsel %vm2020, %v2010, %v1492
        %v2048 = vsel %vm2020, %v2011, %v1494
        %v2049 = vsel %vm2020, %v2012, %v1496
        %v2050 = vsel %vm2020, %v2013, %v1498
        %v2051 = vsel %vm2020, %v2014, %v1500
        %v2052 = vsel %vm2020, %v2015, %v1502
        %v2053 = vsel %vm2020, %v2016, %v1504
        %v2054 = vsel %vm2020, %v2017, %v1506
        %v2055 = vsel %vm2020, %v2018, %v1508
        %v2056 = vsel %vm2020, %v2019, %v1510
        %vm2057 = vcmask 228352
        %v2058 = vsel %vm2057, %v2021, %v1584
        %v2059 = vsel %vm2057, %v2022, %v1586
        %v2060 = vsel %vm2057, %v2023, %v1588
        %v2061 = vsel %vm2057, %v2024, %v1590
        %v2062 = vsel %vm2057, %v2025, %v1592
        %v2063 = vsel %vm2057, %v2026, %v1594
        %v2064 = vsel %vm2057, %v2027, %v1596
        %v2065 = vsel %vm2057, %v2028, %v1598
        %v2066 = vsel %vm2057, %v2029, %v1600
        %v2067 = vsel %vm2057, %v2030, %v1602
        %v2068 = vsel %vm2057, %v2031, %v1604
        %v2069 = vsel %vm2057, %v2032, %v1606
        %v2070 = vsel %vm2057, %v2033, %v1608
        %v2071 = vsel %vm2057, %v2034, %v1610
        %v2072 = vsel %vm2057, %v2035, %v1612
        %v2073 = vsel %vm2057, %v2036, %v1614
        %v2074 = vsel %vm2057, %v2037, %v1616
        %v2075 = vsel %vm2057, %v2038, %v1618
        %v2076 = vsel %vm2057, %v2039, %v1620
        %v2077 = vsel %vm2057, %v2040, %v1622
        %v2078 = vsel %vm2057, %v2041, %v1624
        %v2079 = vsel %vm2057, %v2042, %v1626
        %v2080 = vsel %vm2057, %v2043, %v1628
        %v2081 = vsel %vm2057, %v2044, %v1630
        %v2082 = vsel %vm2057, %v2045, %v1632
        %v2083 = vsel %vm2057, %v2046, %v1634
        %v2084 = vsel %vm2057, %v2047, %v1636
        %v2085 = vsel %vm2057, %v2048, %v1638
        %v2086 = vsel %vm2057, %v2049, %v1640
        %v2087 = vsel %vm2057, %v2050, %v1642
        %v2088 = vsel %vm2057, %v2051, %v1644
        %v2089 = vsel %vm2057, %v2052, %v1646
        %v2090 = vsel %vm2057, %v2053, %v1648
        %v2091 = vsel %vm2057, %v2054, %v1650
        %v2092 = vsel %vm2057, %v2055, %v1652
        %v2093 = vsel %vm2057, %v2056, %v1654
        %vm2094 = vcmask 261120
        %v2095 = vsel %vm2094, %v2058, %v1728
        %v2096 = vsel %vm2094, %v2059, %v1730
        %v2097 = vsel %vm2094, %v2060, %v1732
        %v2098 = vsel %vm2094, %v2061, %v1734
        %v2099 = vsel %vm2094, %v2062, %v1736
        %v2100 = vsel %vm2094, %v2063, %v1738
        %v2101 = vsel %vm2094, %v2064, %v1740
        %v2102 = vsel %vm2094, %v2065, %v1742
        %v2103 = vsel %vm2094, %v2066, %v1744
        %v2104 = vsel %vm2094, %v2067, %v1746
        %v2105 = vsel %vm2094, %v2068, %v1748
        %v2106 = vsel %vm2094, %v2069, %v1750
        %v2107 = vsel %vm2094, %v2070, %v1752
        %v2108 = vsel %vm2094, %v2071, %v1754
        %v2109 = vsel %vm2094, %v2072, %v1756
        %v2110 = vsel %vm2094, %v2073, %v1758
        %v2111 = vsel %vm2094, %v2074, %v1760
        %v2112 = vsel %vm2094, %v2075, %v1762
        %v2113 = vsel %vm2094, %v2076, %v1764
        %v2114 = vsel %vm2094, %v2077, %v1766
        %v2115 = vsel %vm2094, %v2078, %v1768
        %v2116 = vsel %vm2094, %v2079, %v1770
        %v2117 = vsel %vm2094, %v2080, %v1772
        %v2118 = vsel %vm2094, %v2081, %v1774
        %v2119 = vsel %vm2094, %v2082, %v1776
        %v2120 = vsel %vm2094, %v2083, %v1778
        %v2121 = vsel %vm2094, %v2084, %v1780
        %v2122 = vsel %vm2094, %v2085, %v1782
        %v2123 = vsel %vm2094, %v2086, %v1784
        %v2124 = vsel %vm2094, %v2087, %v1786
        %v2125 = vsel %vm2094, %v2088, %v1788
        %v2126 = vsel %vm2094, %v2089, %v1790
        %v2127 = vsel %vm2094, %v2090, %v1792
        %v2128 = vsel %vm2094, %v2091, %v1794
        %v2129 = vsel %vm2094, %v2092, %v1796
        %v2130 = vsel %vm2094, %v2093, %v1798
        %v2131 = vld [vmem:[#allocation5] sm:$0xff]
        %v2132 = vld [vmem:[#allocation5 + $0x8] sm:$0xff]
        %v2133 = vld [vmem:[#allocation5 + $0x10] sm:$0xff]
        %v2134 = vld [vmem:[#allocation5 + $0x18] sm:$0xff]
        %v2135 = vld [vmem:[#allocation5 + $0x20] sm:$0xf]
        %v2136 = vld [vmem:[#allocation7] sm:$0x1]
        %v2138 = vlaneseq
        %v2139 = vshrl.u32 %v2138, 7
        %v2140 = vsub.s32 0, %v2139
        %v2141 = vrot.slane %v2136, %v2140
        %vm2143 = vcmask 293888
        %v2145 = vsel %vm2143, %v2095, 0
        %v2148 = vsel %vm2143, %v2096, 0
        %v2151 = vsel %vm2143, %v2097, 0
        %v2154 = vsel %vm2143, %v2098, 0
        %v2157 = vsel %vm2143, %v2099, 0
        %v2160 = vsel %vm2143, %v2100, 0
        %v2163 = vsel %vm2143, %v2101, 0
        %v2166 = vsel %vm2143, %v2102, 0
        %v2169 = vsel %vm2143, %v2103, 0
        %v2172 = vsel %vm2143, %v2104, 0
        %v2175 = vsel %vm2143, %v2105, 0
        %v2178 = vsel %vm2143, %v2106, 0
        %v2181 = vsel %vm2143, %v2107, 0
        %v2184 = vsel %vm2143, %v2108, 0
        %v2187 = vsel %vm2143, %v2109, 0
        %v2190 = vsel %vm2143, %v2110, 0
        %v2193 = vsel %vm2143, %v2111, 0
        %v2196 = vsel %vm2143, %v2112, 0
        %v2199 = vsel %vm2143, %v2113, 0
        %v2202 = vsel %vm2143, %v2114, 0
        %v2205 = vsel %vm2143, %v2115, 0
        %v2208 = vsel %vm2143, %v2116, 0
        %v2211 = vsel %vm2143, %v2117, 0
        %v2214 = vsel %vm2143, %v2118, 0
        %v2217 = vsel %vm2143, %v2119, 0
        %v2220 = vsel %vm2143, %v2120, 0
        %v2223 = vsel %vm2143, %v2121, 0
        %v2226 = vsel %vm2143, %v2122, 0
        %v2229 = vsel %vm2143, %v2123, 0
        %v2232 = vsel %vm2143, %v2124, 0
        %v2235 = vsel %vm2143, %v2125, 0
        %v2238 = vsel %vm2143, %v2126, 0
        %v2241 = vsel %vm2143, %v2127, 0
        %v2244 = vsel %vm2143, %v2128, 0
        %v2247 = vsel %vm2143, %v2129, 0
        %v2250 = vsel %vm2143, %v2130, 0
        %vm2252 = vcmask 1043456
        %v2254 = vsel %vm2252, %v2135, 0
        %2256 = vmatprep.subr.mxu0 0.0
        %2257 = vmatpush1.msra.mxu0 %v2131
        %2258 = vmatprep.subr.mxu0 0.0
        %2259 = vmatpush1.msra.mxu0 %v2132
        %2260 = vmatprep.subr.mxu0 0.0
        %2261 = vmatpush1.msra.mxu0 %v2133
        %2262 = vmatprep.subr.mxu0 0.0
        %2263 = vmatpush1.msra.mxu0 %v2134
        %2264 = vmatprep.subr.mxu0 0.0
        %2265 = vmatpush1.msra.mxu0 %v2254
        %2266 = vmatprep.subr.mxu0 0.0
        %2267 = vmatpush1.msra.mxu0 0.0
        %2268 = vmatprep.subr.mxu0 0.0
        %2269 = vmatpush1.msra.mxu0 0.0
        %2270 = vmatprep.subr.mxu0 0.0
        %2271 = vmatpush1.msra.mxu0 0.0
        %2272 = vmatprep.subr.mxu0 0.0
        %2273 = vmatpush1.msra.mxu0 0.0
        %2274 = vmatprep.subr.mxu0 0.0
        %2275 = vmatpush1.msra.mxu0 0.0
        %2276 = vmatprep.subr.mxu0 0.0
        %2277 = vmatpush1.msra.mxu0 0.0
        %2278 = vmatprep.subr.mxu0 0.0
        %2279 = vmatpush1.msra.mxu0 0.0
        %2280 = vmatprep.subr.mxu0 0.0
        %2281 = vmatpush1.msra.mxu0 0.0
        %2282 = vmatprep.subr.mxu0 0.0
        %2283 = vmatpush1.msra.mxu0 0.0
        %2284 = vmatprep.subr.mxu0 0.0
        %2285 = vmatpush1.msra.mxu0 0.0
        %2286 = vmatprep.subr.mxu0 0.0
        %2287 = vmatpush1.msra.mxu0 0.0
        %2288 = vmatprep.subr.mxu0 0.0
        %2289 = vmatpush1.msra.mxu0 0.0
        %2290 = vmatprep.subr.mxu0 0.0
        %2291 = vmatpush1.msra.mxu0 0.0
        %2292 = vmatprep.subr.mxu0 0.0
        %2293 = vmatpush1.msra.mxu0 0.0
        %2294 = vmatprep.subr.mxu0 0.0
        %2295 = vmatpush1.msra.mxu0 0.0
        %2296 = vmatprep.subr.mxu0 0.0
        %2297 = vmatpush1.msra.mxu0 0.0
        %2298 = vmatprep.subr.mxu0 0.0
        %2299 = vmatpush1.msra.mxu0 0.0
        %2300 = vmatprep.subr.mxu0 0.0
        %2301 = vmatpush1.msra.mxu0 0.0
        %2302 = vmatprep.subr.mxu0 0.0
        %2303 = vmatpush1.msra.mxu0 0.0
        %2304 = vmatprep.subr.mxu0 0.0
        %2305 = vmatpush1.msra.mxu0 0.0
        %2306 = vmatprep.subr.mxu0 0.0
        %2307 = vmatpush1.msra.mxu0 0.0
        %2308 = vmatprep.subr.mxu0 0.0
        %2309 = vmatpush1.msra.mxu0 0.0
        %2310 = vmatprep.subr.mxu0 0.0
        %2311 = vmatpush1.msra.mxu0 0.0
        %2312 = vmatprep.subr.mxu0 0.0
        %2313 = vmatpush1.msra.mxu0 0.0
        %2314 = vmatprep.subr.mxu0 0.0
        %2315 = vmatpush1.msra.mxu0 0.0
        %2316 = vmatprep.subr.mxu0 0.0
        %2317 = vmatpush1.msra.mxu0 0.0
        %2318 = vmatprep.subr.mxu0 0.0
        %2319 = vmatpush1.msra.mxu0 0.0
        %2320 = vmatprep.mubr.f32.mxu0 0.0
        %2321 = vmatmul.mubr.f32.gmra.mrb[0].mxu0 %v2145
        %v2322 = vpop.f32.mrb[0].mxu0
        %v2323 = vadd.f32 %v2141, %v2322
        %v2324 = vpop.f32.mrb[0].mxu0
        %2325 = vmatprep.mubr.f32.mxu0 0.0
        %2326 = vmatmul.mubr.f32.gmra.mrb[0].mxu0 %v2148
        %v2327 = vpop.f32.mrb[0].mxu0
        %v2328 = vadd.f32 %v2141, %v2327
        %v2329 = vpop.f32.mrb[0].mxu0
        %2330 = vmatprep.mubr.f32.mxu0 0.0
        %2331 = vmatmul.mubr.f32.gmra.mrb[0].mxu0 %v2151
        %v2332 = vpop.f32.mrb[0].mxu0
        %v2333 = vadd.f32 %v2141, %v2332
        %v2334 = vpop.f32.mrb[0].mxu0
        %2335 = vmatprep.mubr.f32.mxu0 0.0
        %2336 = vmatmul.mubr.f32.gmra.mrb[0].mxu0 %v2154
        %v2337 = vpop.f32.mrb[0].mxu0
        %v2338 = vadd.f32 %v2141, %v2337
        %v2339 = vpop.f32.mrb[0].mxu0
        %2340 = vmatprep.mubr.f32.mxu0 0.0
        %2341 = vmatmul.mubr.f32.gmra.mrb[0].mxu0 %v2157
        %v2342 = vpop.f32.mrb[0].mxu0
        %v2343 = vadd.f32 %v2141, %v2342
        %v2344 = vpop.f32.mrb[0].mxu0
        %2345 = vmatprep.mubr.f32.mxu0 0.0
        %2346 = vmatmul.mubr.f32.gmra.mrb[0].mxu0 %v2160
        %v2347 = vpop.f32.mrb[0].mxu0
        %v2348 = vadd.f32 %v2141, %v2347
        %v2349 = vpop.f32.mrb[0].mxu0
        %2350 = vmatprep.mubr.f32.mxu0 0.0
        %2351 = vmatmul.mubr.f32.gmra.mrb[0].mxu0 %v2163
        %v2352 = vpop.f32.mrb[0].mxu0
        %v2353 = vadd.f32 %v2141, %v2352
        %v2354 = vpop.f32.mrb[0].mxu0
        %2355 = vmatprep.mubr.f32.mxu0 0.0
        %2356 = vmatmul.mubr.f32.gmra.mrb[0].mxu0 %v2166
        %v2357 = vpop.f32.mrb[0].mxu0
        %v2358 = vadd.f32 %v2141, %v2357
        %v2359 = vpop.f32.mrb[0].mxu0
        %2360 = vmatprep.mubr.f32.mxu0 0.0
        %2361 = vmatmul.mubr.f32.gmra.mrb[0].mxu0 %v2169
        %v2362 = vpop.f32.mrb[0].mxu0
        %v2363 = vadd.f32 %v2141, %v2362
        %v2364 = vpop.f32.mrb[0].mxu0
        %2365 = vmatprep.mubr.f32.mxu0 0.0
        %2366 = vmatmul.mubr.f32.gmra.mrb[0].mxu0 %v2172
        %v2367 = vpop.f32.mrb[0].mxu0
        %v2368 = vadd.f32 %v2141, %v2367
        %v2369 = vpop.f32.mrb[0].mxu0
        %2370 = vmatprep.mubr.f32.mxu0 0.0
        %2371 = vmatmul.mubr.f32.gmra.mrb[0].mxu0 %v2175
        %v2372 = vpop.f32.mrb[0].mxu0
        %v2373 = vadd.f32 %v2141, %v2372
        %v2374 = vpop.f32.mrb[0].mxu0
        %2375 = vmatprep.mubr.f32.mxu0 0.0
        %2376 = vmatmul.mubr.f32.gmra.mrb[0].mxu0 %v2178
        %v2377 = vpop.f32.mrb[0].mxu0
        %v2378 = vadd.f32 %v2141, %v2377
        %v2379 = vpop.f32.mrb[0].mxu0
        %2380 = vmatprep.mubr.f32.mxu0 0.0
        %2381 = vmatmul.mubr.f32.gmra.mrb[0].mxu0 %v2181
        %v2382 = vpop.f32.mrb[0].mxu0
        %v2383 = vadd.f32 %v2141, %v2382
        %v2384 = vpop.f32.mrb[0].mxu0
        %2385 = vmatprep.mubr.f32.mxu0 0.0
        %2386 = vmatmul.mubr.f32.gmra.mrb[0].mxu0 %v2184
        %v2387 = vpop.f32.mrb[0].mxu0
        %v2388 = vadd.f32 %v2141, %v2387
        %v2389 = vpop.f32.mrb[0].mxu0
        %2390 = vmatprep.mubr.f32.mxu0 0.0
        %2391 = vmatmul.mubr.f32.gmra.mrb[0].mxu0 %v2187
        %v2392 = vpop.f32.mrb[0].mxu0
        %v2393 = vadd.f32 %v2141, %v2392
        %v2394 = vpop.f32.mrb[0].mxu0
        %2395 = vmatprep.mubr.f32.mxu0 0.0
        %2396 = vmatmul.mubr.f32.gmra.mrb[0].mxu0 %v2190
        %v2397 = vpop.f32.mrb[0].mxu0
        %v2398 = vadd.f32 %v2141, %v2397
        %v2399 = vpop.f32.mrb[0].mxu0
        %2400 = vmatprep.mubr.f32.mxu0 0.0
        %2401 = vmatmul.mubr.f32.gmra.mrb[0].mxu0 %v2193
        %v2402 = vpop.f32.mrb[0].mxu0
        %v2403 = vadd.f32 %v2141, %v2402
        %v2404 = vpop.f32.mrb[0].mxu0
        %2405 = vmatprep.mubr.f32.mxu0 0.0
        %2406 = vmatmul.mubr.f32.gmra.mrb[0].mxu0 %v2196
        %v2407 = vpop.f32.mrb[0].mxu0
        %v2408 = vadd.f32 %v2141, %v2407
        %v2409 = vpop.f32.mrb[0].mxu0
        %2410 = vmatprep.mubr.f32.mxu0 0.0
        %2411 = vmatmul.mubr.f32.gmra.mrb[0].mxu0 %v2199
        %v2412 = vpop.f32.mrb[0].mxu0
        %v2413 = vadd.f32 %v2141, %v2412
        %v2414 = vpop.f32.mrb[0].mxu0
        %2415 = vmatprep.mubr.f32.mxu0 0.0
        %2416 = vmatmul.mubr.f32.gmra.mrb[0].mxu0 %v2202
        %v2417 = vpop.f32.mrb[0].mxu0
        %v2418 = vadd.f32 %v2141, %v2417
        %v2419 = vpop.f32.mrb[0].mxu0
        %2420 = vmatprep.mubr.f32.mxu0 0.0
        %2421 = vmatmul.mubr.f32.gmra.mrb[0].mxu0 %v2205
        %v2422 = vpop.f32.mrb[0].mxu0
        %v2423 = vadd.f32 %v2141, %v2422
        %v2424 = vpop.f32.mrb[0].mxu0
        %2425 = vmatprep.mubr.f32.mxu0 0.0
        %2426 = vmatmul.mubr.f32.gmra.mrb[0].mxu0 %v2208
        %v2427 = vpop.f32.mrb[0].mxu0
        %v2428 = vadd.f32 %v2141, %v2427
        %v2429 = vpop.f32.mrb[0].mxu0
        %2430 = vmatprep.mubr.f32.mxu0 0.0
        %2431 = vmatmul.mubr.f32.gmra.mrb[0].mxu0 %v2211
        %v2432 = vpop.f32.mrb[0].mxu0
        %v2433 = vadd.f32 %v2141, %v2432
        %v2434 = vpop.f32.mrb[0].mxu0
        %2435 = vmatprep.mubr.f32.mxu0 0.0
        %2436 = vmatmul.mubr.f32.gmra.mrb[0].mxu0 %v2214
        %v2437 = vpop.f32.mrb[0].mxu0
        %v2438 = vadd.f32 %v2141, %v2437
        %v2439 = vpop.f32.mrb[0].mxu0
        %2440 = vmatprep.mubr.f32.mxu0 0.0
        %2441 = vmatmul.mubr.f32.gmra.mrb[0].mxu0 %v2217
        %v2442 = vpop.f32.mrb[0].mxu0
        %v2443 = vadd.f32 %v2141, %v2442
        %v2444 = vpop.f32.mrb[0].mxu0
        %2445 = vmatprep.mubr.f32.mxu0 0.0
        %2446 = vmatmul.mubr.f32.gmra.mrb[0].mxu0 %v2220
        %v2447 = vpop.f32.mrb[0].mxu0
        %v2448 = vadd.f32 %v2141, %v2447
        %v2449 = vpop.f32.mrb[0].mxu0
        %2450 = vmatprep.mubr.f32.mxu0 0.0
        %2451 = vmatmul.mubr.f32.gmra.mrb[0].mxu0 %v2223
        %v2452 = vpop.f32.mrb[0].mxu0
        %v2453 = vadd.f32 %v2141, %v2452
        %v2454 = vpop.f32.mrb[0].mxu0
        %2455 = vmatprep.mubr.f32.mxu0 0.0
        %2456 = vmatmul.mubr.f32.gmra.mrb[0].mxu0 %v2226
        %v2457 = vpop.f32.mrb[0].mxu0
        %v2458 = vadd.f32 %v2141, %v2457
        %v2459 = vpop.f32.mrb[0].mxu0
        %2460 = vmatprep.mubr.f32.mxu0 0.0
        %2461 = vmatmul.mubr.f32.gmra.mrb[0].mxu0 %v2229
        %v2462 = vpop.f32.mrb[0].mxu0
        %v2463 = vadd.f32 %v2141, %v2462
        %v2464 = vpop.f32.mrb[0].mxu0
        %2465 = vmatprep.mubr.f32.mxu0 0.0
        %2466 = vmatmul.mubr.f32.gmra.mrb[0].mxu0 %v2232
        %v2467 = vpop.f32.mrb[0].mxu0
        %v2468 = vadd.f32 %v2141, %v2467
        %v2469 = vpop.f32.mrb[0].mxu0
        %2470 = vmatprep.mubr.f32.mxu0 0.0
        %2471 = vmatmul.mubr.f32.gmra.mrb[0].mxu0 %v2235
        %v2472 = vpop.f32.mrb[0].mxu0
        %v2473 = vadd.f32 %v2141, %v2472
        %v2474 = vpop.f32.mrb[0].mxu0
        %2475 = vmatprep.mubr.f32.mxu0 0.0
        %2476 = vmatmul.mubr.f32.gmra.mrb[0].mxu0 %v2238
        %v2477 = vpop.f32.mrb[0].mxu0
        %v2478 = vadd.f32 %v2141, %v2477
        %v2479 = vpop.f32.mrb[0].mxu0
        %2480 = vmatprep.mubr.f32.mxu0 0.0
        %2481 = vmatmul.mubr.f32.gmra.mrb[0].mxu0 %v2241
        %v2482 = vpop.f32.mrb[0].mxu0
        %v2483 = vadd.f32 %v2141, %v2482
        %v2484 = vpop.f32.mrb[0].mxu0
        %2485 = vmatprep.mubr.f32.mxu0 0.0
        %2486 = vmatmul.mubr.f32.gmra.mrb[0].mxu0 %v2244
        %v2487 = vpop.f32.mrb[0].mxu0
        %v2488 = vadd.f32 %v2141, %v2487
        %v2489 = vpop.f32.mrb[0].mxu0
        %2490 = vmatprep.mubr.f32.mxu0 0.0
        %2491 = vmatmul.mubr.f32.gmra.mrb[0].mxu0 %v2247
        %v2492 = vpop.f32.mrb[0].mxu0
        %v2493 = vadd.f32 %v2141, %v2492
        %v2494 = vpop.f32.mrb[0].mxu0
        %2495 = vmatprep.mubr.f32.mxu0 0.0
        %2496 = vmatmul.mubr.f32.gmra.mrb[0].mxu0 %v2250
        %v2497 = vpop.f32.mrb[0].mxu0
        %v2498 = vadd.f32 %v2141, %v2497
        %v2499 = vpop.f32.mrb[0].mxu0
        %2500 = vdwg.mxu0
        %v2501 = vmax.f32 %v2323, 0.0
        %v2502 = vmax.f32 %v2328, 0.0
        %v2503 = vmax.f32 %v2333, 0.0
        %v2504 = vmax.f32 %v2338, 0.0
        %v2505 = vmax.f32 %v2343, 0.0
        %v2506 = vmax.f32 %v2348, 0.0
        %v2507 = vmax.f32 %v2353, 0.0
        %v2508 = vmax.f32 %v2358, 0.0
        %v2509 = vmax.f32 %v2363, 0.0
        %v2510 = vmax.f32 %v2368, 0.0
        %v2511 = vmax.f32 %v2373, 0.0
        %v2512 = vmax.f32 %v2378, 0.0
        %v2513 = vmax.f32 %v2383, 0.0
        %v2514 = vmax.f32 %v2388, 0.0
        %v2515 = vmax.f32 %v2393, 0.0
        %v2516 = vmax.f32 %v2398, 0.0
        %v2517 = vmax.f32 %v2403, 0.0
        %v2518 = vmax.f32 %v2408, 0.0
        %v2519 = vmax.f32 %v2413, 0.0
        %v2520 = vmax.f32 %v2418, 0.0
        %v2521 = vmax.f32 %v2423, 0.0
        %v2522 = vmax.f32 %v2428, 0.0
        %v2523 = vmax.f32 %v2433, 0.0
        %v2524 = vmax.f32 %v2438, 0.0
        %v2525 = vmax.f32 %v2443, 0.0
        %v2526 = vmax.f32 %v2448, 0.0
        %v2527 = vmax.f32 %v2453, 0.0
        %v2528 = vmax.f32 %v2458, 0.0
        %v2529 = vmax.f32 %v2463, 0.0
        %v2530 = vmax.f32 %v2468, 0.0
        %v2531 = vmax.f32 %v2473, 0.0
        %v2532 = vmax.f32 %v2478, 0.0
        %v2533 = vmax.f32 %v2483, 0.0
        %v2534 = vmax.f32 %v2488, 0.0
        %v2535 = vmax.f32 %v2493, 0.0
        %v2536 = vmax.f32 %v2498, 0.0
        %s2537 = smul.u32 %s34, 16
        %s2538 = ssub.s32 %s2537, 1
        %v2539 = vstv %s2538
        %v2540 = vadd.s32 %v2539, 1
        %v2541 = vadd.s32 %v2539, 2
        %v2542 = vadd.s32 %v2539, 3
        %v2543 = vadd.s32 %v2539, 4
        %v2544 = vadd.s32 %v2539, 5
        %v2545 = vadd.s32 %v2539, 6
        %v2546 = vadd.s32 %v2539, 7
        %v2547 = vadd.s32 %v2539, 8
        %v2548 = vadd.s32 %v2539, 9
        %v2549 = vadd.s32 %v2539, 10
        %v2550 = vadd.s32 %v2539, 11
        %v2551 = vadd.s32 %v2539, 12
        %v2552 = vadd.s32 %v2539, 13
        %v2553 = vadd.s32 %v2539, 14
        %v2554 = vadd.s32 %v2539, 15
        %v2555 = vadd.s32 %v2539, 16
        %v2556 = vadd.s32 %v2539, 17
        %vm2557 = vcmp.ge.s32.totalorder %v2539, 0
        %vm2558 = vcmp.ge.s32.totalorder %v2540, 0
        %vm2559 = vcmp.ge.s32.totalorder %v2541, 0
        %vm2560 = vcmp.ge.s32.totalorder %v2542, 0
        %vm2561 = vcmp.ge.s32.totalorder %v2543, 0
        %vm2562 = vcmp.ge.s32.totalorder %v2544, 0
        %vm2563 = vcmp.ge.s32.totalorder %v2545, 0
        %vm2564 = vcmp.ge.s32.totalorder %v2546, 0
        %vm2565 = vcmp.ge.s32.totalorder %v2547, 0
        %vm2566 = vcmp.ge.s32.totalorder %v2548, 0
        %vm2567 = vcmp.ge.s32.totalorder %v2549, 0
        %vm2568 = vcmp.ge.s32.totalorder %v2550, 0
        %vm2569 = vcmp.ge.s32.totalorder %v2551, 0
        %vm2570 = vcmp.ge.s32.totalorder %v2552, 0
        %vm2571 = vcmp.ge.s32.totalorder %v2553, 0
        %vm2572 = vcmp.ge.s32.totalorder %v2554, 0
        %vm2573 = vcmp.ge.s32.totalorder %v2555, 0
        %vm2574 = vcmp.ge.s32.totalorder %v2556, 0
        %vm2575 = vcmp.lt.s32.totalorder %v2539, 16
        %vm2576 = vcmp.lt.s32.totalorder %v2540, 16
        %vm2577 = vcmp.lt.s32.totalorder %v2541, 16
        %vm2578 = vcmp.lt.s32.totalorder %v2542, 16
        %vm2579 = vcmp.lt.s32.totalorder %v2543, 16
        %vm2580 = vcmp.lt.s32.totalorder %v2544, 16
        %vm2581 = vcmp.lt.s32.totalorder %v2545, 16
        %vm2582 = vcmp.lt.s32.totalorder %v2546, 16
        %vm2583 = vcmp.lt.s32.totalorder %v2547, 16
        %vm2584 = vcmp.lt.s32.totalorder %v2548, 16
        %vm2585 = vcmp.lt.s32.totalorder %v2549, 16
        %vm2586 = vcmp.lt.s32.totalorder %v2550, 16
        %vm2587 = vcmp.lt.s32.totalorder %v2551, 16
        %vm2588 = vcmp.lt.s32.totalorder %v2552, 16
        %vm2589 = vcmp.lt.s32.totalorder %v2553, 16
        %vm2590 = vcmp.lt.s32.totalorder %v2554, 16
        %vm2591 = vcmp.lt.s32.totalorder %v2555, 16
        %vm2592 = vcmp.lt.s32.totalorder %v2556, 16
        %vm2593 = vmand %vm2557, %vm2575
        %vm2594 = vmand %vm2558, %vm2576
        %vm2595 = vmand %vm2559, %vm2577
        %vm2596 = vmand %vm2560, %vm2578
        %vm2597 = vmand %vm2561, %vm2579
        %vm2598 = vmand %vm2562, %vm2580
        %vm2599 = vmand %vm2563, %vm2581
        %vm2600 = vmand %vm2564, %vm2582
        %vm2601 = vmand %vm2565, %vm2583
        %vm2602 = vmand %vm2566, %vm2584
        %vm2603 = vmand %vm2567, %vm2585
        %vm2604 = vmand %vm2568, %vm2586
        %vm2605 = vmand %vm2569, %vm2587
        %vm2606 = vmand %vm2570, %vm2588
        %vm2607 = vmand %vm2571, %vm2589
        %vm2608 = vmand %vm2572, %vm2590
        %vm2609 = vmand %vm2573, %vm2591
        %vm2610 = vmand %vm2574, %vm2592
        %v2611 = vsel %vm2593, 1, 0
        %v2612 = vsel %vm2594, 1, 0
        %v2613 = vsel %vm2595, 1, 0
        %v2614 = vsel %vm2596, 1, 0
        %v2615 = vsel %vm2597, 1, 0
        %v2616 = vsel %vm2598, 1, 0
        %v2617 = vsel %vm2599, 1, 0
        %v2618 = vsel %vm2600, 1, 0
        %v2619 = vsel %vm2601, 1, 0
        %v2620 = vsel %vm2602, 1, 0
        %v2621 = vsel %vm2603, 1, 0
        %v2622 = vsel %vm2604, 1, 0
        %v2623 = vsel %vm2605, 1, 0
        %v2624 = vsel %vm2606, 1, 0
        %v2625 = vsel %vm2607, 1, 0
        %v2626 = vsel %vm2608, 1, 0
        %v2627 = vsel %vm2609, 1, 0
        %v2628 = vsel %vm2610, 1, 0
        %vm2629 = vcmp.eq.s32.totalorder %v2611, 1
        %vm2630 = vcmp.eq.s32.totalorder %v2612, 1
        %vm2631 = vcmp.eq.s32.totalorder %v2613, 1
        %vm2632 = vcmp.eq.s32.totalorder %v2614, 1
        %vm2633 = vcmp.eq.s32.totalorder %v2615, 1
        %vm2634 = vcmp.eq.s32.totalorder %v2616, 1
        %vm2635 = vcmp.eq.s32.totalorder %v2617, 1
        %vm2636 = vcmp.eq.s32.totalorder %v2618, 1
        %vm2637 = vcmp.eq.s32.totalorder %v2619, 1
        %vm2638 = vcmp.eq.s32.totalorder %v2620, 1
        %vm2639 = vcmp.eq.s32.totalorder %v2621, 1
        %vm2640 = vcmp.eq.s32.totalorder %v2622, 1
        %vm2641 = vcmp.eq.s32.totalorder %v2623, 1
        %vm2642 = vcmp.eq.s32.totalorder %v2624, 1
        %vm2643 = vcmp.eq.s32.totalorder %v2625, 1
        %vm2644 = vcmp.eq.s32.totalorder %v2626, 1
        %vm2645 = vcmp.eq.s32.totalorder %v2627, 1
        %vm2646 = vcmp.eq.s32.totalorder %v2628, 1
        %v2647 = vsel %vm2629, %v2501, 0.0
        %v2648 = vsel %vm2629, %v2502, 0.0
        %v2649 = vsel %vm2630, %v2503, 0.0
        %v2650 = vsel %vm2630, %v2504, 0.0
        %v2651 = vsel %vm2631, %v2505, 0.0
        %v2652 = vsel %vm2631, %v2506, 0.0
        %v2653 = vsel %vm2632, %v2507, 0.0
        %v2654 = vsel %vm2632, %v2508, 0.0
        %v2655 = vsel %vm2633, %v2509, 0.0
        %v2656 = vsel %vm2633, %v2510, 0.0
        %v2657 = vsel %vm2634, %v2511, 0.0
        %v2658 = vsel %vm2634, %v2512, 0.0
        %v2659 = vsel %vm2635, %v2513, 0.0
        %v2660 = vsel %vm2635, %v2514, 0.0
        %v2661 = vsel %vm2636, %v2515, 0.0
        %v2662 = vsel %vm2636, %v2516, 0.0
        %v2663 = vsel %vm2637, %v2517, 0.0
        %v2664 = vsel %vm2637, %v2518, 0.0
        %v2665 = vsel %vm2638, %v2519, 0.0
        %v2666 = vsel %vm2638, %v2520, 0.0
        %v2667 = vsel %vm2639, %v2521, 0.0
        %v2668 = vsel %vm2639, %v2522, 0.0
        %v2669 = vsel %vm2640, %v2523, 0.0
        %v2670 = vsel %vm2640, %v2524, 0.0
        %v2671 = vsel %vm2641, %v2525, 0.0
        %v2672 = vsel %vm2641, %v2526, 0.0
        %v2673 = vsel %vm2642, %v2527, 0.0
        %v2674 = vsel %vm2642, %v2528, 0.0
        %v2675 = vsel %vm2643, %v2529, 0.0
        %v2676 = vsel %vm2643, %v2530, 0.0
        %v2677 = vsel %vm2644, %v2531, 0.0
        %v2678 = vsel %vm2644, %v2532, 0.0
        %v2679 = vsel %vm2645, %v2533, 0.0
        %v2680 = vsel %vm2645, %v2534, 0.0
        %v2681 = vsel %vm2646, %v2535, 0.0
        %v2682 = vsel %vm2646, %v2536, 0.0
        %vm2719 = vcmask 1040384
        %v2720 = vrot.slane %v2647, 7
        %v2721 = vrot.slane %v2648, 7
        %v2722 = vsel %vm2719, %v2720, %v2721
        %v2723 = vrot.slane %v2649, 7
        %v2724 = vrot.slane %v2650, 7
        %v2725 = vsel %vm2719, %v2723, %v2724
        %v2726 = vrot.slane %v2651, 7
        %v2727 = vrot.slane %v2652, 7
        %v2728 = vsel %vm2719, %v2726, %v2727
        %v2729 = vrot.slane %v2653, 7
        %v2730 = vrot.slane %v2654, 7
        %v2731 = vsel %vm2719, %v2729, %v2730
        %v2732 = vrot.slane %v2655, 7
        %v2733 = vrot.slane %v2656, 7
        %v2734 = vsel %vm2719, %v2732, %v2733
        %v2735 = vrot.slane %v2657, 7
        %v2736 = vrot.slane %v2658, 7
        %v2737 = vsel %vm2719, %v2735, %v2736
        %v2738 = vrot.slane %v2659, 7
        %v2739 = vrot.slane %v2660, 7
        %v2740 = vsel %vm2719, %v2738, %v2739
        %v2741 = vrot.slane %v2661, 7
        %v2742 = vrot.slane %v2662, 7
        %v2743 = vsel %vm2719, %v2741, %v2742
        %v2744 = vrot.slane %v2663, 7
        %v2745 = vrot.slane %v2664, 7
        %v2746 = vsel %vm2719, %v2744, %v2745
        %v2747 = vrot.slane %v2665, 7
        %v2748 = vrot.slane %v2666, 7
        %v2749 = vsel %vm2719, %v2747, %v2748
        %v2750 = vrot.slane %v2667, 7
        %v2751 = vrot.slane %v2668, 7
        %v2752 = vsel %vm2719, %v2750, %v2751
        %v2753 = vrot.slane %v2669, 7
        %v2754 = vrot.slane %v2670, 7
        %v2755 = vsel %vm2719, %v2753, %v2754
        %v2756 = vrot.slane %v2671, 7
        %v2757 = vrot.slane %v2672, 7
        %v2758 = vsel %vm2719, %v2756, %v2757
        %v2759 = vrot.slane %v2673, 7
        %v2760 = vrot.slane %v2674, 7
        %v2761 = vsel %vm2719, %v2759, %v2760
        %v2762 = vrot.slane %v2675, 7
        %v2763 = vrot.slane %v2676, 7
        %v2764 = vsel %vm2719, %v2762, %v2763
        %v2765 = vrot.slane %v2677, 7
        %v2766 = vrot.slane %v2678, 7
        %v2767 = vsel %vm2719, %v2765, %v2766
        %v2768 = vrot.slane %v2679, 7
        %v2769 = vrot.slane %v2680, 7
        %v2770 = vsel %vm2719, %v2768, %v2769
        %v2771 = vrot.slane %v2681, 7
        %v2772 = vrot.slane %v2682, 7
        %v2773 = vsel %vm2719, %v2771, %v2772
        %v2826 = vsel %vm2719, 0.0, %v2720
        %v2827 = vsel %vm2719, 0.0, %v2723
        %v2828 = vsel %vm2719, 0.0, %v2726
        %v2829 = vsel %vm2719, 0.0, %v2729
        %v2830 = vsel %vm2719, 0.0, %v2732
        %v2831 = vsel %vm2719, 0.0, %v2735
        %v2832 = vsel %vm2719, 0.0, %v2738
        %v2833 = vsel %vm2719, 0.0, %v2741
        %v2834 = vsel %vm2719, 0.0, %v2744
        %v2835 = vsel %vm2719, 0.0, %v2747
        %v2836 = vsel %vm2719, 0.0, %v2750
        %v2837 = vsel %vm2719, 0.0, %v2753
        %v2838 = vsel %vm2719, 0.0, %v2756
        %v2839 = vsel %vm2719, 0.0, %v2759
        %v2840 = vsel %vm2719, 0.0, %v2762
        %v2841 = vsel %vm2719, 0.0, %v2765
        %v2842 = vsel %vm2719, 0.0, %v2768
        %v2843 = vsel %vm2719, 0.0, %v2771
        %v2844 = vsel %vm2719, %v2721, 0.0
        %v2845 = vsel %vm2719, %v2724, 0.0
        %v2846 = vsel %vm2719, %v2727, 0.0
        %v2847 = vsel %vm2719, %v2730, 0.0
        %v2848 = vsel %vm2719, %v2733, 0.0
        %v2849 = vsel %vm2719, %v2736, 0.0
        %v2850 = vsel %vm2719, %v2739, 0.0
        %v2851 = vsel %vm2719, %v2742, 0.0
        %v2852 = vsel %vm2719, %v2745, 0.0
        %v2853 = vsel %vm2719, %v2748, 0.0
        %v2854 = vsel %vm2719, %v2751, 0.0
        %v2855 = vsel %vm2719, %v2754, 0.0
        %v2856 = vsel %vm2719, %v2757, 0.0
        %v2857 = vsel %vm2719, %v2760, 0.0
        %v2858 = vsel %vm2719, %v2763, 0.0
        %v2859 = vsel %vm2719, %v2766, 0.0
        %v2860 = vsel %vm2719, %v2769, 0.0
        %v2861 = vsel %vm2719, %v2772, 0.0
        %vm2894 = vcmask 1046528
        %v2895 = vrot.slane %v2826, 1
        %v2896 = vrot.slane %v2722, 1
        %v2897 = vsel %vm2894, %v2895, %v2896
        %v2898 = vrot.slane %v2844, 1
        %v2899 = vsel %vm2894, %v2896, %v2898
        %v2900 = vrot.slane %v2827, 1
        %v2901 = vrot.slane %v2725, 1
        %v2902 = vsel %vm2894, %v2900, %v2901
        %v2903 = vrot.slane %v2845, 1
        %v2904 = vsel %vm2894, %v2901, %v2903
        %v2905 = vrot.slane %v2828, 1
        %v2906 = vrot.slane %v2728, 1
        %v2907 = vsel %vm2894, %v2905, %v2906
        %v2908 = vrot.slane %v2846, 1
        %v2909 = vsel %vm2894, %v2906, %v2908
        %v2910 = vrot.slane %v2829, 1
        %v2911 = vrot.slane %v2731, 1
        %v2912 = vsel %vm2894, %v2910, %v2911
        %v2913 = vrot.slane %v2847, 1
        %v2914 = vsel %vm2894, %v2911, %v2913
        %v2915 = vrot.slane %v2830, 1
        %v2916 = vrot.slane %v2734, 1
        %v2917 = vsel %vm2894, %v2915, %v2916
        %v2918 = vrot.slane %v2848, 1
        %v2919 = vsel %vm2894, %v2916, %v2918
        %v2920 = vrot.slane %v2831, 1
        %v2921 = vrot.slane %v2737, 1
        %v2922 = vsel %vm2894, %v2920, %v2921
        %v2923 = vrot.slane %v2849, 1
        %v2924 = vsel %vm2894, %v2921, %v2923
        %v2925 = vrot.slane %v2832, 1
        %v2926 = vrot.slane %v2740, 1
        %v2927 = vsel %vm2894, %v2925, %v2926
        %v2928 = vrot.slane %v2850, 1
        %v2929 = vsel %vm2894, %v2926, %v2928
        %v2930 = vrot.slane %v2833, 1
        %v2931 = vrot.slane %v2743, 1
        %v2932 = vsel %vm2894, %v2930, %v2931
        %v2933 = vrot.slane %v2851, 1
        %v2934 = vsel %vm2894, %v2931, %v2933
        %v2935 = vrot.slane %v2834, 1
        %v2936 = vrot.slane %v2746, 1
        %v2937 = vsel %vm2894, %v2935, %v2936
        %v2938 = vrot.slane %v2852, 1
        %v2939 = vsel %vm2894, %v2936, %v2938
        %v2940 = vrot.slane %v2835, 1
        %v2941 = vrot.slane %v2749, 1
        %v2942 = vsel %vm2894, %v2940, %v2941
        %v2943 = vrot.slane %v2853, 1
        %v2944 = vsel %vm2894, %v2941, %v2943
        %v2945 = vrot.slane %v2836, 1
        %v2946 = vrot.slane %v2752, 1
        %v2947 = vsel %vm2894, %v2945, %v2946
        %v2948 = vrot.slane %v2854, 1
        %v2949 = vsel %vm2894, %v2946, %v2948
        %v2950 = vrot.slane %v2837, 1
        %v2951 = vrot.slane %v2755, 1
        %v2952 = vsel %vm2894, %v2950, %v2951
        %v2953 = vrot.slane %v2855, 1
        %v2954 = vsel %vm2894, %v2951, %v2953
        %v2955 = vrot.slane %v2838, 1
        %v2956 = vrot.slane %v2758, 1
        %v2957 = vsel %vm2894, %v2955, %v2956
        %v2958 = vrot.slane %v2856, 1
        %v2959 = vsel %vm2894, %v2956, %v2958
        %v2960 = vrot.slane %v2839, 1
        %v2961 = vrot.slane %v2761, 1
        %v2962 = vsel %vm2894, %v2960, %v2961
        %v2963 = vrot.slane %v2857, 1
        %v2964 = vsel %vm2894, %v2961, %v2963
        %v2965 = vrot.slane %v2840, 1
        %v2966 = vrot.slane %v2764, 1
        %v2967 = vsel %vm2894, %v2965, %v2966
        %v2968 = vrot.slane %v2858, 1
        %v2969 = vsel %vm2894, %v2966, %v2968
        %v2970 = vrot.slane %v2841, 1
        %v2971 = vrot.slane %v2767, 1
        %v2972 = vsel %vm2894, %v2970, %v2971
        %v2973 = vrot.slane %v2859, 1
        %v2974 = vsel %vm2894, %v2971, %v2973
        %2975 = vrot.lane.b32.xlu0 %v2897, 8
        %v2976 = vpop.permute.xlu0 %2975
        %2977 = vrot.lane.b32.xlu0 %v2899, 8
        %v2978 = vpop.permute.xlu0 %2977
        %2979 = vrot.lane.b32.xlu0 %v2902, 8
        %v2980 = vpop.permute.xlu0 %2979
        %2981 = vrot.lane.b32.xlu0 %v2904, 8
        %v2982 = vpop.permute.xlu0 %2981
        %2983 = vrot.lane.b32.xlu0 %v2907, 8
        %v2984 = vpop.permute.xlu0 %2983
        %2985 = vrot.lane.b32.xlu0 %v2909, 8
        %v2986 = vpop.permute.xlu0 %2985
        %2987 = vrot.lane.b32.xlu0 %v2912, 8
        %v2988 = vpop.permute.xlu0 %2987
        %2989 = vrot.lane.b32.xlu0 %v2914, 8
        %v2990 = vpop.permute.xlu0 %2989
        %2991 = vrot.lane.b32.xlu0 %v2917, 8
        %v2992 = vpop.permute.xlu0 %2991
        %2993 = vrot.lane.b32.xlu0 %v2919, 8
        %v2994 = vpop.permute.xlu0 %2993
        %2995 = vrot.lane.b32.xlu0 %v2922, 8
        %v2996 = vpop.permute.xlu0 %2995
        %2997 = vrot.lane.b32.xlu0 %v2924, 8
        %v2998 = vpop.permute.xlu0 %2997
        %2999 = vrot.lane.b32.xlu0 %v2927, 8
        %v3000 = vpop.permute.xlu0 %2999
        %3001 = vrot.lane.b32.xlu0 %v2929, 8
        %v3002 = vpop.permute.xlu0 %3001
        %3003 = vrot.lane.b32.xlu0 %v2932, 8
        %v3004 = vpop.permute.xlu0 %3003
        %3005 = vrot.lane.b32.xlu0 %v2934, 8
        %v3006 = vpop.permute.xlu0 %3005
        %3007 = vrot.lane.b32.xlu0 %v2937, 8
        %v3008 = vpop.permute.xlu0 %3007
        %3009 = vrot.lane.b32.xlu0 %v2939, 8
        %v3010 = vpop.permute.xlu0 %3009
        %3011 = vrot.lane.b32.xlu0 %v2942, 8
        %v3012 = vpop.permute.xlu0 %3011
        %3013 = vrot.lane.b32.xlu0 %v2944, 8
        %v3014 = vpop.permute.xlu0 %3013
        %3015 = vrot.lane.b32.xlu0 %v2947, 8
        %v3016 = vpop.permute.xlu0 %3015
        %3017 = vrot.lane.b32.xlu0 %v2949, 8
        %v3018 = vpop.permute.xlu0 %3017
        %3019 = vrot.lane.b32.xlu0 %v2952, 8
        %v3020 = vpop.permute.xlu0 %3019
        %3021 = vrot.lane.b32.xlu0 %v2954, 8
        %v3022 = vpop.permute.xlu0 %3021
        %3023 = vrot.lane.b32.xlu0 %v2957, 8
        %v3024 = vpop.permute.xlu0 %3023
        %3025 = vrot.lane.b32.xlu0 %v2959, 8
        %v3026 = vpop.permute.xlu0 %3025
        %3027 = vrot.lane.b32.xlu0 %v2962, 8
        %v3028 = vpop.permute.xlu0 %3027
        %3029 = vrot.lane.b32.xlu0 %v2964, 8
        %v3030 = vpop.permute.xlu0 %3029
        %3031 = vrot.lane.b32.xlu0 %v2967, 8
        %v3032 = vpop.permute.xlu0 %3031
        %3033 = vrot.lane.b32.xlu0 %v2969, 8
        %v3034 = vpop.permute.xlu0 %3033
        %3035 = vrot.lane.b32.xlu0 %v2972, 8
        %v3036 = vpop.permute.xlu0 %3035
        %3037 = vrot.lane.b32.xlu0 %v2974, 8
        %v3038 = vpop.permute.xlu0 %3037
        %vm3071 = vcmask 1045504
        %v3072 = vrot.slane %v2826, 2
        %v3073 = vrot.slane %v2722, 2
        %v3074 = vsel %vm3071, %v3072, %v3073
        %v3075 = vrot.slane %v2844, 2
        %v3076 = vsel %vm3071, %v3073, %v3075
        %v3077 = vrot.slane %v2827, 2
        %v3078 = vrot.slane %v2725, 2
        %v3079 = vsel %vm3071, %v3077, %v3078
        %v3080 = vrot.slane %v2845, 2
        %v3081 = vsel %vm3071, %v3078, %v3080
        %v3082 = vrot.slane %v2828, 2
        %v3083 = vrot.slane %v2728, 2
        %v3084 = vsel %vm3071, %v3082, %v3083
        %v3085 = vrot.slane %v2846, 2
        %v3086 = vsel %vm3071, %v3083, %v3085
        %v3087 = vrot.slane %v2829, 2
        %v3088 = vrot.slane %v2731, 2
        %v3089 = vsel %vm3071, %v3087, %v3088
        %v3090 = vrot.slane %v2847, 2
        %v3091 = vsel %vm3071, %v3088, %v3090
        %v3092 = vrot.slane %v2830, 2
        %v3093 = vrot.slane %v2734, 2
        %v3094 = vsel %vm3071, %v3092, %v3093
        %v3095 = vrot.slane %v2848, 2
        %v3096 = vsel %vm3071, %v3093, %v3095
        %v3097 = vrot.slane %v2831, 2
        %v3098 = vrot.slane %v2737, 2
        %v3099 = vsel %vm3071, %v3097, %v3098
        %v3100 = vrot.slane %v2849, 2
        %v3101 = vsel %vm3071, %v3098, %v3100
        %v3102 = vrot.slane %v2832, 2
        %v3103 = vrot.slane %v2740, 2
        %v3104 = vsel %vm3071, %v3102, %v3103
        %v3105 = vrot.slane %v2850, 2
        %v3106 = vsel %vm3071, %v3103, %v3105
        %v3107 = vrot.slane %v2833, 2
        %v3108 = vrot.slane %v2743, 2
        %v3109 = vsel %vm3071, %v3107, %v3108
        %v3110 = vrot.slane %v2851, 2
        %v3111 = vsel %vm3071, %v3108, %v3110
        %v3112 = vrot.slane %v2834, 2
        %v3113 = vrot.slane %v2746, 2
        %v3114 = vsel %vm3071, %v3112, %v3113
        %v3115 = vrot.slane %v2852, 2
        %v3116 = vsel %vm3071, %v3113, %v3115
        %v3117 = vrot.slane %v2835, 2
        %v3118 = vrot.slane %v2749, 2
        %v3119 = vsel %vm3071, %v3117, %v3118
        %v3120 = vrot.slane %v2853, 2
        %v3121 = vsel %vm3071, %v3118, %v3120
        %v3122 = vrot.slane %v2836, 2
        %v3123 = vrot.slane %v2752, 2
        %v3124 = vsel %vm3071, %v3122, %v3123
        %v3125 = vrot.slane %v2854, 2
        %v3126 = vsel %vm3071, %v3123, %v3125
        %v3127 = vrot.slane %v2837, 2
        %v3128 = vrot.slane %v2755, 2
        %v3129 = vsel %vm3071, %v3127, %v3128
        %v3130 = vrot.slane %v2855, 2
        %v3131 = vsel %vm3071, %v3128, %v3130
        %v3132 = vrot.slane %v2838, 2
        %v3133 = vrot.slane %v2758, 2
        %v3134 = vsel %vm3071, %v3132, %v3133
        %v3135 = vrot.slane %v2856, 2
        %v3136 = vsel %vm3071, %v3133, %v3135
        %v3137 = vrot.slane %v2839, 2
        %v3138 = vrot.slane %v2761, 2
        %v3139 = vsel %vm3071, %v3137, %v3138
        %v3140 = vrot.slane %v2857, 2
        %v3141 = vsel %vm3071, %v3138, %v3140
        %v3142 = vrot.slane %v2840, 2
        %v3143 = vrot.slane %v2764, 2
        %v3144 = vsel %vm3071, %v3142, %v3143
        %v3145 = vrot.slane %v2858, 2
        %v3146 = vsel %vm3071, %v3143, %v3145
        %v3147 = vrot.slane %v2841, 2
        %v3148 = vrot.slane %v2767, 2
        %v3149 = vsel %vm3071, %v3147, %v3148
        %v3150 = vrot.slane %v2859, 2
        %v3151 = vsel %vm3071, %v3148, %v3150
        %3152 = vrot.lane.b32.xlu0 %v3074, 16
        %v3153 = vpop.permute.xlu0 %3152
        %3154 = vrot.lane.b32.xlu0 %v3076, 16
        %v3155 = vpop.permute.xlu0 %3154
        %3156 = vrot.lane.b32.xlu0 %v3079, 16
        %v3157 = vpop.permute.xlu0 %3156
        %3158 = vrot.lane.b32.xlu0 %v3081, 16
        %v3159 = vpop.permute.xlu0 %3158
        %3160 = vrot.lane.b32.xlu0 %v3084, 16
        %v3161 = vpop.permute.xlu0 %3160
        %3162 = vrot.lane.b32.xlu0 %v3086, 16
        %v3163 = vpop.permute.xlu0 %3162
        %3164 = vrot.lane.b32.xlu0 %v3089, 16
        %v3165 = vpop.permute.xlu0 %3164
        %3166 = vrot.lane.b32.xlu0 %v3091, 16
        %v3167 = vpop.permute.xlu0 %3166
        %3168 = vrot.lane.b32.xlu0 %v3094, 16
        %v3169 = vpop.permute.xlu0 %3168
        %3170 = vrot.lane.b32.xlu0 %v3096, 16
        %v3171 = vpop.permute.xlu0 %3170
        %3172 = vrot.lane.b32.xlu0 %v3099, 16
        %v3173 = vpop.permute.xlu0 %3172
        %3174 = vrot.lane.b32.xlu0 %v3101, 16
        %v3175 = vpop.permute.xlu0 %3174
        %3176 = vrot.lane.b32.xlu0 %v3104, 16
        %v3177 = vpop.permute.xlu0 %3176
        %3178 = vrot.lane.b32.xlu0 %v3106, 16
        %v3179 = vpop.permute.xlu0 %3178
        %3180 = vrot.lane.b32.xlu0 %v3109, 16
        %v3181 = vpop.permute.xlu0 %3180
        %3182 = vrot.lane.b32.xlu0 %v3111, 16
        %v3183 = vpop.permute.xlu0 %3182
        %3184 = vrot.lane.b32.xlu0 %v3114, 16
        %v3185 = vpop.permute.xlu0 %3184
        %3186 = vrot.lane.b32.xlu0 %v3116, 16
        %v3187 = vpop.permute.xlu0 %3186
        %3188 = vrot.lane.b32.xlu0 %v3119, 16
        %v3189 = vpop.permute.xlu0 %3188
        %3190 = vrot.lane.b32.xlu0 %v3121, 16
        %v3191 = vpop.permute.xlu0 %3190
        %3192 = vrot.lane.b32.xlu0 %v3124, 16
        %v3193 = vpop.permute.xlu0 %3192
        %3194 = vrot.lane.b32.xlu0 %v3126, 16
        %v3195 = vpop.permute.xlu0 %3194
        %3196 = vrot.lane.b32.xlu0 %v3129, 16
        %v3197 = vpop.permute.xlu0 %3196
        %3198 = vrot.lane.b32.xlu0 %v3131, 16
        %v3199 = vpop.permute.xlu0 %3198
        %3200 = vrot.lane.b32.xlu0 %v3134, 16
        %v3201 = vpop.permute.xlu0 %3200
        %3202 = vrot.lane.b32.xlu0 %v3136, 16
        %v3203 = vpop.permute.xlu0 %3202
        %3204 = vrot.lane.b32.xlu0 %v3139, 16
        %v3205 = vpop.permute.xlu0 %3204
        %3206 = vrot.lane.b32.xlu0 %v3141, 16
        %v3207 = vpop.permute.xlu0 %3206
        %3208 = vrot.lane.b32.xlu0 %v3144, 16
        %v3209 = vpop.permute.xlu0 %3208
        %3210 = vrot.lane.b32.xlu0 %v3146, 16
        %v3211 = vpop.permute.xlu0 %3210
        %3212 = vrot.lane.b32.xlu0 %v3149, 16
        %v3213 = vpop.permute.xlu0 %3212
        %3214 = vrot.lane.b32.xlu0 %v3151, 16
        %v3215 = vpop.permute.xlu0 %3214
        %3249 = vrot.lane.b32.xlu0 %v2827, 24
        %v3250 = vpop.permute.xlu0 %3249
        %3251 = vrot.lane.b32.xlu0 %v2725, 24
        %v3252 = vpop.permute.xlu0 %3251
        %3253 = vrot.lane.b32.xlu0 %v2828, 24
        %v3254 = vpop.permute.xlu0 %3253
        %3255 = vrot.lane.b32.xlu0 %v2728, 24
        %v3256 = vpop.permute.xlu0 %3255
        %3257 = vrot.lane.b32.xlu0 %v2829, 24
        %v3258 = vpop.permute.xlu0 %3257
        %3259 = vrot.lane.b32.xlu0 %v2731, 24
        %v3260 = vpop.permute.xlu0 %3259
        %3261 = vrot.lane.b32.xlu0 %v2830, 24
        %v3262 = vpop.permute.xlu0 %3261
        %3263 = vrot.lane.b32.xlu0 %v2734, 24
        %v3264 = vpop.permute.xlu0 %3263
        %3265 = vrot.lane.b32.xlu0 %v2831, 24
        %v3266 = vpop.permute.xlu0 %3265
        %3267 = vrot.lane.b32.xlu0 %v2737, 24
        %v3268 = vpop.permute.xlu0 %3267
        %3269 = vrot.lane.b32.xlu0 %v2832, 24
        %v3270 = vpop.permute.xlu0 %3269
        %3271 = vrot.lane.b32.xlu0 %v2740, 24
        %v3272 = vpop.permute.xlu0 %3271
        %3273 = vrot.lane.b32.xlu0 %v2833, 24
        %v3274 = vpop.permute.xlu0 %3273
        %3275 = vrot.lane.b32.xlu0 %v2743, 24
        %v3276 = vpop.permute.xlu0 %3275
        %3277 = vrot.lane.b32.xlu0 %v2834, 24
        %v3278 = vpop.permute.xlu0 %3277
        %3279 = vrot.lane.b32.xlu0 %v2746, 24
        %v3280 = vpop.permute.xlu0 %3279
        %3281 = vrot.lane.b32.xlu0 %v2835, 24
        %v3282 = vpop.permute.xlu0 %3281
        %3283 = vrot.lane.b32.xlu0 %v2749, 24
        %v3284 = vpop.permute.xlu0 %3283
        %3285 = vrot.lane.b32.xlu0 %v2836, 24
        %v3286 = vpop.permute.xlu0 %3285
        %3287 = vrot.lane.b32.xlu0 %v2752, 24
        %v3288 = vpop.permute.xlu0 %3287
        %3289 = vrot.lane.b32.xlu0 %v2837, 24
        %v3290 = vpop.permute.xlu0 %3289
        %3291 = vrot.lane.b32.xlu0 %v2755, 24
        %v3292 = vpop.permute.xlu0 %3291
        %3293 = vrot.lane.b32.xlu0 %v2838, 24
        %v3294 = vpop.permute.xlu0 %3293
        %3295 = vrot.lane.b32.xlu0 %v2758, 24
        %v3296 = vpop.permute.xlu0 %3295
        %3297 = vrot.lane.b32.xlu0 %v2839, 24
        %v3298 = vpop.permute.xlu0 %3297
        %3299 = vrot.lane.b32.xlu0 %v2761, 24
        %v3300 = vpop.permute.xlu0 %3299
        %3301 = vrot.lane.b32.xlu0 %v2840, 24
        %v3302 = vpop.permute.xlu0 %3301
        %3303 = vrot.lane.b32.xlu0 %v2764, 24
        %v3304 = vpop.permute.xlu0 %3303
        %3305 = vrot.lane.b32.xlu0 %v2841, 24
        %v3306 = vpop.permute.xlu0 %3305
        %3307 = vrot.lane.b32.xlu0 %v2767, 24
        %v3308 = vpop.permute.xlu0 %3307
        %3309 = vrot.lane.b32.xlu0 %v2842, 24
        %v3310 = vpop.permute.xlu0 %3309
        %3311 = vrot.lane.b32.xlu0 %v2770, 24
        %v3312 = vpop.permute.xlu0 %3311
        %v3346 = vrot.slane %v2842, 1
        %v3347 = vrot.slane %v2770, 1
        %v3348 = vsel %vm2894, %v3346, %v3347
        %v3349 = vrot.slane %v2860, 1
        %v3350 = vsel %vm2894, %v3347, %v3349
        %3351 = vrot.lane.b32.xlu0 %v2902, 32
        %v3352 = vpop.permute.xlu0 %3351
        %3353 = vrot.lane.b32.xlu0 %v2904, 32
        %v3354 = vpop.permute.xlu0 %3353
        %3355 = vrot.lane.b32.xlu0 %v2907, 32
        %v3356 = vpop.permute.xlu0 %3355
        %3357 = vrot.lane.b32.xlu0 %v2909, 32
        %v3358 = vpop.permute.xlu0 %3357
        %3359 = vrot.lane.b32.xlu0 %v2912, 32
        %v3360 = vpop.permute.xlu0 %3359
        %3361 = vrot.lane.b32.xlu0 %v2914, 32
        %v3362 = vpop.permute.xlu0 %3361
        %3363 = vrot.lane.b32.xlu0 %v2917, 32
        %v3364 = vpop.permute.xlu0 %3363
        %3365 = vrot.lane.b32.xlu0 %v2919, 32
        %v3366 = vpop.permute.xlu0 %3365
        %3367 = vrot.lane.b32.xlu0 %v2922, 32
        %v3368 = vpop.permute.xlu0 %3367
        %3369 = vrot.lane.b32.xlu0 %v2924, 32
        %v3370 = vpop.permute.xlu0 %3369
        %3371 = vrot.lane.b32.xlu0 %v2927, 32
        %v3372 = vpop.permute.xlu0 %3371
        %3373 = vrot.lane.b32.xlu0 %v2929, 32
        %v3374 = vpop.permute.xlu0 %3373
        %3375 = vrot.lane.b32.xlu0 %v2932, 32
        %v3376 = vpop.permute.xlu0 %3375
        %3377 = vrot.lane.b32.xlu0 %v2934, 32
        %v3378 = vpop.permute.xlu0 %3377
        %3379 = vrot.lane.b32.xlu0 %v2937, 32
        %v3380 = vpop.permute.xlu0 %3379
        %3381 = vrot.lane.b32.xlu0 %v2939, 32
        %v3382 = vpop.permute.xlu0 %3381
        %3383 = vrot.lane.b32.xlu0 %v2942, 32
        %v3384 = vpop.permute.xlu0 %3383
        %3385 = vrot.lane.b32.xlu0 %v2944, 32
        %v3386 = vpop.permute.xlu0 %3385
        %3387 = vrot.lane.b32.xlu0 %v2947, 32
        %v3388 = vpop.permute.xlu0 %3387
        %3389 = vrot.lane.b32.xlu0 %v2949, 32
        %v3390 = vpop.permute.xlu0 %3389
        %3391 = vrot.lane.b32.xlu0 %v2952, 32
        %v3392 = vpop.permute.xlu0 %3391
        %3393 = vrot.lane.b32.xlu0 %v2954, 32
        %v3394 = vpop.permute.xlu0 %3393
        %3395 = vrot.lane.b32.xlu0 %v2957, 32
        %v3396 = vpop.permute.xlu0 %3395
        %3397 = vrot.lane.b32.xlu0 %v2959, 32
        %v3398 = vpop.permute.xlu0 %3397
        %3399 = vrot.lane.b32.xlu0 %v2962, 32
        %v3400 = vpop.permute.xlu0 %3399
        %3401 = vrot.lane.b32.xlu0 %v2964, 32
        %v3402 = vpop.permute.xlu0 %3401
        %3403 = vrot.lane.b32.xlu0 %v2967, 32
        %v3404 = vpop.permute.xlu0 %3403
        %3405 = vrot.lane.b32.xlu0 %v2969, 32
        %v3406 = vpop.permute.xlu0 %3405
        %3407 = vrot.lane.b32.xlu0 %v2972, 32
        %v3408 = vpop.permute.xlu0 %3407
        %3409 = vrot.lane.b32.xlu0 %v2974, 32
        %v3410 = vpop.permute.xlu0 %3409
        %3411 = vrot.lane.b32.xlu0 %v3348, 32
        %v3412 = vpop.permute.xlu0 %3411
        %3413 = vrot.lane.b32.xlu0 %v3350, 32
        %v3414 = vpop.permute.xlu0 %3413
        %v3447 = vrot.slane %v2842, 2
        %v3448 = vrot.slane %v2770, 2
        %v3449 = vsel %vm3071, %v3447, %v3448
        %v3450 = vrot.slane %v2860, 2
        %v3451 = vsel %vm3071, %v3448, %v3450
        %3452 = vrot.lane.b32.xlu0 %v3079, 40
        %v3453 = vpop.permute.xlu0 %3452
        %3454 = vrot.lane.b32.xlu0 %v3081, 40
        %v3455 = vpop.permute.xlu0 %3454
        %3456 = vrot.lane.b32.xlu0 %v3084, 40
        %v3457 = vpop.permute.xlu0 %3456
        %3458 = vrot.lane.b32.xlu0 %v3086, 40
        %v3459 = vpop.permute.xlu0 %3458
        %3460 = vrot.lane.b32.xlu0 %v3089, 40
        %v3461 = vpop.permute.xlu0 %3460
        %3462 = vrot.lane.b32.xlu0 %v3091, 40
        %v3463 = vpop.permute.xlu0 %3462
        %3464 = vrot.lane.b32.xlu0 %v3094, 40
        %v3465 = vpop.permute.xlu0 %3464
        %3466 = vrot.lane.b32.xlu0 %v3096, 40
        %v3467 = vpop.permute.xlu0 %3466
        %3468 = vrot.lane.b32.xlu0 %v3099, 40
        %v3469 = vpop.permute.xlu0 %3468
        %3470 = vrot.lane.b32.xlu0 %v3101, 40
        %v3471 = vpop.permute.xlu0 %3470
        %3472 = vrot.lane.b32.xlu0 %v3104, 40
        %v3473 = vpop.permute.xlu0 %3472
        %3474 = vrot.lane.b32.xlu0 %v3106, 40
        %v3475 = vpop.permute.xlu0 %3474
        %3476 = vrot.lane.b32.xlu0 %v3109, 40
        %v3477 = vpop.permute.xlu0 %3476
        %3478 = vrot.lane.b32.xlu0 %v3111, 40
        %v3479 = vpop.permute.xlu0 %3478
        %3480 = vrot.lane.b32.xlu0 %v3114, 40
        %v3481 = vpop.permute.xlu0 %3480
        %3482 = vrot.lane.b32.xlu0 %v3116, 40
        %v3483 = vpop.permute.xlu0 %3482
        %3484 = vrot.lane.b32.xlu0 %v3119, 40
        %v3485 = vpop.permute.xlu0 %3484
        %3486 = vrot.lane.b32.xlu0 %v3121, 40
        %v3487 = vpop.permute.xlu0 %3486
        %3488 = vrot.lane.b32.xlu0 %v3124, 40
        %v3489 = vpop.permute.xlu0 %3488
        %3490 = vrot.lane.b32.xlu0 %v3126, 40
        %v3491 = vpop.permute.xlu0 %3490
        %3492 = vrot.lane.b32.xlu0 %v3129, 40
        %v3493 = vpop.permute.xlu0 %3492
        %3494 = vrot.lane.b32.xlu0 %v3131, 40
        %v3495 = vpop.permute.xlu0 %3494
        %3496 = vrot.lane.b32.xlu0 %v3134, 40
        %v3497 = vpop.permute.xlu0 %3496
        %3498 = vrot.lane.b32.xlu0 %v3136, 40
        %v3499 = vpop.permute.xlu0 %3498
        %3500 = vrot.lane.b32.xlu0 %v3139, 40
        %v3501 = vpop.permute.xlu0 %3500
        %3502 = vrot.lane.b32.xlu0 %v3141, 40
        %v3503 = vpop.permute.xlu0 %3502
        %3504 = vrot.lane.b32.xlu0 %v3144, 40
        %v3505 = vpop.permute.xlu0 %3504
        %3506 = vrot.lane.b32.xlu0 %v3146, 40
        %v3507 = vpop.permute.xlu0 %3506
        %3508 = vrot.lane.b32.xlu0 %v3149, 40
        %v3509 = vpop.permute.xlu0 %3508
        %3510 = vrot.lane.b32.xlu0 %v3151, 40
        %v3511 = vpop.permute.xlu0 %3510
        %3512 = vrot.lane.b32.xlu0 %v3449, 40
        %v3513 = vpop.permute.xlu0 %3512
        %3514 = vrot.lane.b32.xlu0 %v3451, 40
        %v3515 = vpop.permute.xlu0 %3514
        %3549 = vrot.lane.b32.xlu0 %v2828, 48
        %v3550 = vpop.permute.xlu0 %3549
        %3551 = vrot.lane.b32.xlu0 %v2728, 48
        %v3552 = vpop.permute.xlu0 %3551
        %3553 = vrot.lane.b32.xlu0 %v2829, 48
        %v3554 = vpop.permute.xlu0 %3553
        %3555 = vrot.lane.b32.xlu0 %v2731, 48
        %v3556 = vpop.permute.xlu0 %3555
        %3557 = vrot.lane.b32.xlu0 %v2830, 48
        %v3558 = vpop.permute.xlu0 %3557
        %3559 = vrot.lane.b32.xlu0 %v2734, 48
        %v3560 = vpop.permute.xlu0 %3559
        %3561 = vrot.lane.b32.xlu0 %v2831, 48
        %v3562 = vpop.permute.xlu0 %3561
        %3563 = vrot.lane.b32.xlu0 %v2737, 48
        %v3564 = vpop.permute.xlu0 %3563
        %3565 = vrot.lane.b32.xlu0 %v2832, 48
        %v3566 = vpop.permute.xlu0 %3565
        %3567 = vrot.lane.b32.xlu0 %v2740, 48
        %v3568 = vpop.permute.xlu0 %3567
        %3569 = vrot.lane.b32.xlu0 %v2833, 48
        %v3570 = vpop.permute.xlu0 %3569
        %3571 = vrot.lane.b32.xlu0 %v2743, 48
        %v3572 = vpop.permute.xlu0 %3571
        %3573 = vrot.lane.b32.xlu0 %v2834, 48
        %v3574 = vpop.permute.xlu0 %3573
        %3575 = vrot.lane.b32.xlu0 %v2746, 48
        %v3576 = vpop.permute.xlu0 %3575
        %3577 = vrot.lane.b32.xlu0 %v2835, 48
        %v3578 = vpop.permute.xlu0 %3577
        %3579 = vrot.lane.b32.xlu0 %v2749, 48
        %v3580 = vpop.permute.xlu0 %3579
        %3581 = vrot.lane.b32.xlu0 %v2836, 48
        %v3582 = vpop.permute.xlu0 %3581
        %3583 = vrot.lane.b32.xlu0 %v2752, 48
        %v3584 = vpop.permute.xlu0 %3583
        %3585 = vrot.lane.b32.xlu0 %v2837, 48
        %v3586 = vpop.permute.xlu0 %3585
        %3587 = vrot.lane.b32.xlu0 %v2755, 48
        %v3588 = vpop.permute.xlu0 %3587
        %3589 = vrot.lane.b32.xlu0 %v2838, 48
        %v3590 = vpop.permute.xlu0 %3589
        %3591 = vrot.lane.b32.xlu0 %v2758, 48
        %v3592 = vpop.permute.xlu0 %3591
        %3593 = vrot.lane.b32.xlu0 %v2839, 48
        %v3594 = vpop.permute.xlu0 %3593
        %3595 = vrot.lane.b32.xlu0 %v2761, 48
        %v3596 = vpop.permute.xlu0 %3595
        %3597 = vrot.lane.b32.xlu0 %v2840, 48
        %v3598 = vpop.permute.xlu0 %3597
        %3599 = vrot.lane.b32.xlu0 %v2764, 48
        %v3600 = vpop.permute.xlu0 %3599
        %3601 = vrot.lane.b32.xlu0 %v2841, 48
        %v3602 = vpop.permute.xlu0 %3601
        %3603 = vrot.lane.b32.xlu0 %v2767, 48
        %v3604 = vpop.permute.xlu0 %3603
        %3605 = vrot.lane.b32.xlu0 %v2842, 48
        %v3606 = vpop.permute.xlu0 %3605
        %3607 = vrot.lane.b32.xlu0 %v2770, 48
        %v3608 = vpop.permute.xlu0 %3607
        %3609 = vrot.lane.b32.xlu0 %v2843, 48
        %v3610 = vpop.permute.xlu0 %3609
        %3611 = vrot.lane.b32.xlu0 %v2773, 48
        %v3612 = vpop.permute.xlu0 %3611
        %v3646 = vrot.slane %v2843, 1
        %v3647 = vrot.slane %v2773, 1
        %v3648 = vsel %vm2894, %v3646, %v3647
        %v3649 = vrot.slane %v2861, 1
        %v3650 = vsel %vm2894, %v3647, %v3649
        %3651 = vrot.lane.b32.xlu0 %v2907, 56
        %v3652 = vpop.permute.xlu0 %3651
        %3653 = vrot.lane.b32.xlu0 %v2909, 56
        %v3654 = vpop.permute.xlu0 %3653
        %3655 = vrot.lane.b32.xlu0 %v2912, 56
        %v3656 = vpop.permute.xlu0 %3655
        %3657 = vrot.lane.b32.xlu0 %v2914, 56
        %v3658 = vpop.permute.xlu0 %3657
        %3659 = vrot.lane.b32.xlu0 %v2917, 56
        %v3660 = vpop.permute.xlu0 %3659
        %3661 = vrot.lane.b32.xlu0 %v2919, 56
        %v3662 = vpop.permute.xlu0 %3661
        %3663 = vrot.lane.b32.xlu0 %v2922, 56
        %v3664 = vpop.permute.xlu0 %3663
        %3665 = vrot.lane.b32.xlu0 %v2924, 56
        %v3666 = vpop.permute.xlu0 %3665
        %3667 = vrot.lane.b32.xlu0 %v2927, 56
        %v3668 = vpop.permute.xlu0 %3667
        %3669 = vrot.lane.b32.xlu0 %v2929, 56
        %v3670 = vpop.permute.xlu0 %3669
        %3671 = vrot.lane.b32.xlu0 %v2932, 56
        %v3672 = vpop.permute.xlu0 %3671
        %3673 = vrot.lane.b32.xlu0 %v2934, 56
        %v3674 = vpop.permute.xlu0 %3673
        %3675 = vrot.lane.b32.xlu0 %v2937, 56
        %v3676 = vpop.permute.xlu0 %3675
        %3677 = vrot.lane.b32.xlu0 %v2939, 56
        %v3678 = vpop.permute.xlu0 %3677
        %3679 = vrot.lane.b32.xlu0 %v2942, 56
        %v3680 = vpop.permute.xlu0 %3679
        %3681 = vrot.lane.b32.xlu0 %v2944, 56
        %v3682 = vpop.permute.xlu0 %3681
        %3683 = vrot.lane.b32.xlu0 %v2947, 56
        %v3684 = vpop.permute.xlu0 %3683
        %3685 = vrot.lane.b32.xlu0 %v2949, 56
        %v3686 = vpop.permute.xlu0 %3685
        %3687 = vrot.lane.b32.xlu0 %v2952, 56
        %v3688 = vpop.permute.xlu0 %3687
        %3689 = vrot.lane.b32.xlu0 %v2954, 56
        %v3690 = vpop.permute.xlu0 %3689
        %3691 = vrot.lane.b32.xlu0 %v2957, 56
        %v3692 = vpop.permute.xlu0 %3691
        %3693 = vrot.lane.b32.xlu0 %v2959, 56
        %v3694 = vpop.permute.xlu0 %3693
        %3695 = vrot.lane.b32.xlu0 %v2962, 56
        %v3696 = vpop.permute.xlu0 %3695
        %3697 = vrot.lane.b32.xlu0 %v2964, 56
        %v3698 = vpop.permute.xlu0 %3697
        %3699 = vrot.lane.b32.xlu0 %v2967, 56
        %v3700 = vpop.permute.xlu0 %3699
        %3701 = vrot.lane.b32.xlu0 %v2969, 56
        %v3702 = vpop.permute.xlu0 %3701
        %3703 = vrot.lane.b32.xlu0 %v2972, 56
        %v3704 = vpop.permute.xlu0 %3703
        %3705 = vrot.lane.b32.xlu0 %v2974, 56
        %v3706 = vpop.permute.xlu0 %3705
        %3707 = vrot.lane.b32.xlu0 %v3348, 56
        %v3708 = vpop.permute.xlu0 %3707
        %3709 = vrot.lane.b32.xlu0 %v3350, 56
        %v3710 = vpop.permute.xlu0 %3709
        %3711 = vrot.lane.b32.xlu0 %v3648, 56
        %v3712 = vpop.permute.xlu0 %3711
        %3713 = vrot.lane.b32.xlu0 %v3650, 56
        %v3714 = vpop.permute.xlu0 %3713
        %v3747 = vrot.slane %v2843, 2
        %v3748 = vrot.slane %v2773, 2
        %v3749 = vsel %vm3071, %v3747, %v3748
        %v3750 = vrot.slane %v2861, 2
        %v3751 = vsel %vm3071, %v3748, %v3750
        %3752 = vrot.lane.b32.xlu0 %v3084, 64
        %v3753 = vpop.permute.xlu0 %3752
        %3754 = vrot.lane.b32.xlu0 %v3086, 64
        %v3755 = vpop.permute.xlu0 %3754
        %3756 = vrot.lane.b32.xlu0 %v3089, 64
        %v3757 = vpop.permute.xlu0 %3756
        %3758 = vrot.lane.b32.xlu0 %v3091, 64
        %v3759 = vpop.permute.xlu0 %3758
        %3760 = vrot.lane.b32.xlu0 %v3094, 64
        %v3761 = vpop.permute.xlu0 %3760
        %3762 = vrot.lane.b32.xlu0 %v3096, 64
        %v3763 = vpop.permute.xlu0 %3762
        %3764 = vrot.lane.b32.xlu0 %v3099, 64
        %v3765 = vpop.permute.xlu0 %3764
        %3766 = vrot.lane.b32.xlu0 %v3101, 64
        %v3767 = vpop.permute.xlu0 %3766
        %3768 = vrot.lane.b32.xlu0 %v3104, 64
        %v3769 = vpop.permute.xlu0 %3768
        %3770 = vrot.lane.b32.xlu0 %v3106, 64
        %v3771 = vpop.permute.xlu0 %3770
        %3772 = vrot.lane.b32.xlu0 %v3109, 64
        %v3773 = vpop.permute.xlu0 %3772
        %3774 = vrot.lane.b32.xlu0 %v3111, 64
        %v3775 = vpop.permute.xlu0 %3774
        %3776 = vrot.lane.b32.xlu0 %v3114, 64
        %v3777 = vpop.permute.xlu0 %3776
        %3778 = vrot.lane.b32.xlu0 %v3116, 64
        %v3779 = vpop.permute.xlu0 %3778
        %3780 = vrot.lane.b32.xlu0 %v3119, 64
        %v3781 = vpop.permute.xlu0 %3780
        %3782 = vrot.lane.b32.xlu0 %v3121, 64
        %v3783 = vpop.permute.xlu0 %3782
        %3784 = vrot.lane.b32.xlu0 %v3124, 64
        %v3785 = vpop.permute.xlu0 %3784
        %3786 = vrot.lane.b32.xlu0 %v3126, 64
        %v3787 = vpop.permute.xlu0 %3786
        %3788 = vrot.lane.b32.xlu0 %v3129, 64
        %v3789 = vpop.permute.xlu0 %3788
        %3790 = vrot.lane.b32.xlu0 %v3131, 64
        %v3791 = vpop.permute.xlu0 %3790
        %3792 = vrot.lane.b32.xlu0 %v3134, 64
        %v3793 = vpop.permute.xlu0 %3792
        %3794 = vrot.lane.b32.xlu0 %v3136, 64
        %v3795 = vpop.permute.xlu0 %3794
        %3796 = vrot.lane.b32.xlu0 %v3139, 64
        %v3797 = vpop.permute.xlu0 %3796
        %3798 = vrot.lane.b32.xlu0 %v3141, 64
        %v3799 = vpop.permute.xlu0 %3798
        %3800 = vrot.lane.b32.xlu0 %v3144, 64
        %v3801 = vpop.permute.xlu0 %3800
        %3802 = vrot.lane.b32.xlu0 %v3146, 64
        %v3803 = vpop.permute.xlu0 %3802
        %3804 = vrot.lane.b32.xlu0 %v3149, 64
        %v3805 = vpop.permute.xlu0 %3804
        %3806 = vrot.lane.b32.xlu0 %v3151, 64
        %v3807 = vpop.permute.xlu0 %3806
        %3808 = vrot.lane.b32.xlu0 %v3449, 64
        %v3809 = vpop.permute.xlu0 %3808
        %3810 = vrot.lane.b32.xlu0 %v3451, 64
        %v3811 = vpop.permute.xlu0 %3810
        %3812 = vrot.lane.b32.xlu0 %v3749, 64
        %v3813 = vpop.permute.xlu0 %3812
        %3814 = vrot.lane.b32.xlu0 %v3751, 64
        %v3815 = vpop.permute.xlu0 %3814
        %v3848 = vsel %vm1872, %v2826, %v2976
        %v3849 = vsel %vm1872, %v2722, %v2978
        %v3850 = vsel %vm1872, %v2827, %v2980
        %v3851 = vsel %vm1872, %v2725, %v2982
        %v3852 = vsel %vm1872, %v2828, %v2984
        %v3853 = vsel %vm1872, %v2728, %v2986
        %v3854 = vsel %vm1872, %v2829, %v2988
        %v3855 = vsel %vm1872, %v2731, %v2990
        %v3856 = vsel %vm1872, %v2830, %v2992
        %v3857 = vsel %vm1872, %v2734, %v2994
        %v3858 = vsel %vm1872, %v2831, %v2996
        %v3859 = vsel %vm1872, %v2737, %v2998
        %v3860 = vsel %vm1872, %v2832, %v3000
        %v3861 = vsel %vm1872, %v2740, %v3002
        %v3862 = vsel %vm1872, %v2833, %v3004
        %v3863 = vsel %vm1872, %v2743, %v3006
        %v3864 = vsel %vm1872, %v2834, %v3008
        %v3865 = vsel %vm1872, %v2746, %v3010
        %v3866 = vsel %vm1872, %v2835, %v3012
        %v3867 = vsel %vm1872, %v2749, %v3014
        %v3868 = vsel %vm1872, %v2836, %v3016
        %v3869 = vsel %vm1872, %v2752, %v3018
        %v3870 = vsel %vm1872, %v2837, %v3020
        %v3871 = vsel %vm1872, %v2755, %v3022
        %v3872 = vsel %vm1872, %v2838, %v3024
        %v3873 = vsel %vm1872, %v2758, %v3026
        %v3874 = vsel %vm1872, %v2839, %v3028
        %v3875 = vsel %vm1872, %v2761, %v3030
        %v3876 = vsel %vm1872, %v2840, %v3032
        %v3877 = vsel %vm1872, %v2764, %v3034
        %v3878 = vsel %vm1872, %v2841, %v3036
        %v3879 = vsel %vm1872, %v2767, %v3038
        %v3880 = vsel %vm1946, %v3848, %v3153
        %v3881 = vsel %vm1946, %v3849, %v3155
        %v3882 = vsel %vm1946, %v3850, %v3157
        %v3883 = vsel %vm1946, %v3851, %v3159
        %v3884 = vsel %vm1946, %v3852, %v3161
        %v3885 = vsel %vm1946, %v3853, %v3163
        %v3886 = vsel %vm1946, %v3854, %v3165
        %v3887 = vsel %vm1946, %v3855, %v3167
        %v3888 = vsel %vm1946, %v3856, %v3169
        %v3889 = vsel %vm1946, %v3857, %v3171
        %v3890 = vsel %vm1946, %v3858, %v3173
        %v3891 = vsel %vm1946, %v3859, %v3175
        %v3892 = vsel %vm1946, %v3860, %v3177
        %v3893 = vsel %vm1946, %v3861, %v3179
        %v3894 = vsel %vm1946, %v3862, %v3181
        %v3895 = vsel %vm1946, %v3863, %v3183
        %v3896 = vsel %vm1946, %v3864, %v3185
        %v3897 = vsel %vm1946, %v3865, %v3187
        %v3898 = vsel %vm1946, %v3866, %v3189
        %v3899 = vsel %vm1946, %v3867, %v3191
        %v3900 = vsel %vm1946, %v3868, %v3193
        %v3901 = vsel %vm1946, %v3869, %v3195
        %v3902 = vsel %vm1946, %v3870, %v3197
        %v3903 = vsel %vm1946, %v3871, %v3199
        %v3904 = vsel %vm1946, %v3872, %v3201
        %v3905 = vsel %vm1946, %v3873, %v3203
        %v3906 = vsel %vm1946, %v3874, %v3205
        %v3907 = vsel %vm1946, %v3875, %v3207
        %v3908 = vsel %vm1946, %v3876, %v3209
        %v3909 = vsel %vm1946, %v3877, %v3211
        %v3910 = vsel %vm1946, %v3878, %v3213
        %v3911 = vsel %vm1946, %v3879, %v3215
        %v3912 = vsel %vm2020, %v3880, %v3250
        %v3913 = vsel %vm2020, %v3881, %v3252
        %v3914 = vsel %vm2020, %v3882, %v3254
        %v3915 = vsel %vm2020, %v3883, %v3256
        %v3916 = vsel %vm2020, %v3884, %v3258
        %v3917 = vsel %vm2020, %v3885, %v3260
        %v3918 = vsel %vm2020, %v3886, %v3262
        %v3919 = vsel %vm2020, %v3887, %v3264
        %v3920 = vsel %vm2020, %v3888, %v3266
        %v3921 = vsel %vm2020, %v3889, %v3268
        %v3922 = vsel %vm2020, %v3890, %v3270
        %v3923 = vsel %vm2020, %v3891, %v3272
        %v3924 = vsel %vm2020, %v3892, %v3274
        %v3925 = vsel %vm2020, %v3893, %v3276
        %v3926 = vsel %vm2020, %v3894, %v3278
        %v3927 = vsel %vm2020, %v3895, %v3280
        %v3928 = vsel %vm2020, %v3896, %v3282
        %v3929 = vsel %vm2020, %v3897, %v3284
        %v3930 = vsel %vm2020, %v3898, %v3286
        %v3931 = vsel %vm2020, %v3899, %v3288
        %v3932 = vsel %vm2020, %v3900, %v3290
        %v3933 = vsel %vm2020, %v3901, %v3292
        %v3934 = vsel %vm2020, %v3902, %v3294
        %v3935 = vsel %vm2020, %v3903, %v3296
        %v3936 = vsel %vm2020, %v3904, %v3298
        %v3937 = vsel %vm2020, %v3905, %v3300
        %v3938 = vsel %vm2020, %v3906, %v3302
        %v3939 = vsel %vm2020, %v3907, %v3304
        %v3940 = vsel %vm2020, %v3908, %v3306
        %v3941 = vsel %vm2020, %v3909, %v3308
        %v3942 = vsel %vm2020, %v3910, %v3310
        %v3943 = vsel %vm2020, %v3911, %v3312
        %v3944 = vsel %vm2094, %v3912, %v3352
        %v3945 = vsel %vm2094, %v3913, %v3354
        %v3946 = vsel %vm2094, %v3914, %v3356
        %v3947 = vsel %vm2094, %v3915, %v3358
        %v3948 = vsel %vm2094, %v3916, %v3360
        %v3949 = vsel %vm2094, %v3917, %v3362
        %v3950 = vsel %vm2094, %v3918, %v3364
        %v3951 = vsel %vm2094, %v3919, %v3366
        %v3952 = vsel %vm2094, %v3920, %v3368
        %v3953 = vsel %vm2094, %v3921, %v3370
        %v3954 = vsel %vm2094, %v3922, %v3372
        %v3955 = vsel %vm2094, %v3923, %v3374
        %v3956 = vsel %vm2094, %v3924, %v3376
        %v3957 = vsel %vm2094, %v3925, %v3378
        %v3958 = vsel %vm2094, %v3926, %v3380
        %v3959 = vsel %vm2094, %v3927, %v3382
        %v3960 = vsel %vm2094, %v3928, %v3384
        %v3961 = vsel %vm2094, %v3929, %v3386
        %v3962 = vsel %vm2094, %v3930, %v3388
        %v3963 = vsel %vm2094, %v3931, %v3390
        %v3964 = vsel %vm2094, %v3932, %v3392
        %v3965 = vsel %vm2094, %v3933, %v3394
        %v3966 = vsel %vm2094, %v3934, %v3396
        %v3967 = vsel %vm2094, %v3935, %v3398
        %v3968 = vsel %vm2094, %v3936, %v3400
        %v3969 = vsel %vm2094, %v3937, %v3402
        %v3970 = vsel %vm2094, %v3938, %v3404
        %v3971 = vsel %vm2094, %v3939, %v3406
        %v3972 = vsel %vm2094, %v3940, %v3408
        %v3973 = vsel %vm2094, %v3941, %v3410
        %v3974 = vsel %vm2094, %v3942, %v3412
        %v3975 = vsel %vm2094, %v3943, %v3414
        %vm3976 = vcmask 326656
        %v3977 = vsel %vm3976, %v3944, %v3453
        %v3978 = vsel %vm3976, %v3945, %v3455
        %v3979 = vsel %vm3976, %v3946, %v3457
        %v3980 = vsel %vm3976, %v3947, %v3459
        %v3981 = vsel %vm3976, %v3948, %v3461
        %v3982 = vsel %vm3976, %v3949, %v3463
        %v3983 = vsel %vm3976, %v3950, %v3465
        %v3984 = vsel %vm3976, %v3951, %v3467
        %v3985 = vsel %vm3976, %v3952, %v3469
        %v3986 = vsel %vm3976, %v3953, %v3471
        %v3987 = vsel %vm3976, %v3954, %v3473
        %v3988 = vsel %vm3976, %v3955, %v3475
        %v3989 = vsel %vm3976, %v3956, %v3477
        %v3990 = vsel %vm3976, %v3957, %v3479
        %v3991 = vsel %vm3976, %v3958, %v3481
        %v3992 = vsel %vm3976, %v3959, %v3483
        %v3993 = vsel %vm3976, %v3960, %v3485
        %v3994 = vsel %vm3976, %v3961, %v3487
        %v3995 = vsel %vm3976, %v3962, %v3489
        %v3996 = vsel %vm3976, %v3963, %v3491
        %v3997 = vsel %vm3976, %v3964, %v3493
        %v3998 = vsel %vm3976, %v3965, %v3495
        %v3999 = vsel %vm3976, %v3966, %v3497
        %v4000 = vsel %vm3976, %v3967, %v3499
        %v4001 = vsel %vm3976, %v3968, %v3501
        %v4002 = vsel %vm3976, %v3969, %v3503
        %v4003 = vsel %vm3976, %v3970, %v3505
        %v4004 = vsel %vm3976, %v3971, %v3507
        %v4005 = vsel %vm3976, %v3972, %v3509
        %v4006 = vsel %vm3976, %v3973, %v3511
        %v4007 = vsel %vm3976, %v3974, %v3513
        %v4008 = vsel %vm3976, %v3975, %v3515
        %vm4009 = vcmask 392192
        %v4010 = vsel %vm4009, %v3977, %v3550
        %v4011 = vsel %vm4009, %v3978, %v3552
        %v4012 = vsel %vm4009, %v3979, %v3554
        %v4013 = vsel %vm4009, %v3980, %v3556
        %v4014 = vsel %vm4009, %v3981, %v3558
        %v4015 = vsel %vm4009, %v3982, %v3560
        %v4016 = vsel %vm4009, %v3983, %v3562
        %v4017 = vsel %vm4009, %v3984, %v3564
        %v4018 = vsel %vm4009, %v3985, %v3566
        %v4019 = vsel %vm4009, %v3986, %v3568
        %v4020 = vsel %vm4009, %v3987, %v3570
        %v4021 = vsel %vm4009, %v3988, %v3572
        %v4022 = vsel %vm4009, %v3989, %v3574
        %v4023 = vsel %vm4009, %v3990, %v3576
        %v4024 = vsel %vm4009, %v3991, %v3578
        %v4025 = vsel %vm4009, %v3992, %v3580
        %v4026 = vsel %vm4009, %v3993, %v3582
        %v4027 = vsel %vm4009, %v3994, %v3584
        %v4028 = vsel %vm4009, %v3995, %v3586
        %v4029 = vsel %vm4009, %v3996, %v3588
        %v4030 = vsel %vm4009, %v3997, %v3590
        %v4031 = vsel %vm4009, %v3998, %v3592
        %v4032 = vsel %vm4009, %v3999, %v3594
        %v4033 = vsel %vm4009, %v4000, %v3596
        %v4034 = vsel %vm4009, %v4001, %v3598
        %v4035 = vsel %vm4009, %v4002, %v3600
        %v4036 = vsel %vm4009, %v4003, %v3602
        %v4037 = vsel %vm4009, %v4004, %v3604
        %v4038 = vsel %vm4009, %v4005, %v3606
        %v4039 = vsel %vm4009, %v4006, %v3608
        %v4040 = vsel %vm4009, %v4007, %v3610
        %v4041 = vsel %vm4009, %v4008, %v3612
        %vm4042 = vcmask 457728
        %v4043 = vsel %vm4042, %v4010, %v3652
        %v4044 = vsel %vm4042, %v4011, %v3654
        %v4045 = vsel %vm4042, %v4012, %v3656
        %v4046 = vsel %vm4042, %v4013, %v3658
        %v4047 = vsel %vm4042, %v4014, %v3660
        %v4048 = vsel %vm4042, %v4015, %v3662
        %v4049 = vsel %vm4042, %v4016, %v3664
        %v4050 = vsel %vm4042, %v4017, %v3666
        %v4051 = vsel %vm4042, %v4018, %v3668
        %v4052 = vsel %vm4042, %v4019, %v3670
        %v4053 = vsel %vm4042, %v4020, %v3672
        %v4054 = vsel %vm4042, %v4021, %v3674
        %v4055 = vsel %vm4042, %v4022, %v3676
        %v4056 = vsel %vm4042, %v4023, %v3678
        %v4057 = vsel %vm4042, %v4024, %v3680
        %v4058 = vsel %vm4042, %v4025, %v3682
        %v4059 = vsel %vm4042, %v4026, %v3684
        %v4060 = vsel %vm4042, %v4027, %v3686
        %v4061 = vsel %vm4042, %v4028, %v3688
        %v4062 = vsel %vm4042, %v4029, %v3690
        %v4063 = vsel %vm4042, %v4030, %v3692
        %v4064 = vsel %vm4042, %v4031, %v3694
        %v4065 = vsel %vm4042, %v4032, %v3696
        %v4066 = vsel %vm4042, %v4033, %v3698
        %v4067 = vsel %vm4042, %v4034, %v3700
        %v4068 = vsel %vm4042, %v4035, %v3702
        %v4069 = vsel %vm4042, %v4036, %v3704
        %v4070 = vsel %vm4042, %v4037, %v3706
        %v4071 = vsel %vm4042, %v4038, %v3708
        %v4072 = vsel %vm4042, %v4039, %v3710
        %v4073 = vsel %vm4042, %v4040, %v3712
        %v4074 = vsel %vm4042, %v4041, %v3714
        %vm4075 = vcmask 523264
        %v4076 = vsel %vm4075, %v4043, %v3753
        %v4077 = vsel %vm4075, %v4044, %v3755
        %v4078 = vsel %vm4075, %v4045, %v3757
        %v4079 = vsel %vm4075, %v4046, %v3759
        %v4080 = vsel %vm4075, %v4047, %v3761
        %v4081 = vsel %vm4075, %v4048, %v3763
        %v4082 = vsel %vm4075, %v4049, %v3765
        %v4083 = vsel %vm4075, %v4050, %v3767
        %v4084 = vsel %vm4075, %v4051, %v3769
        %v4085 = vsel %vm4075, %v4052, %v3771
        %v4086 = vsel %vm4075, %v4053, %v3773
        %v4087 = vsel %vm4075, %v4054, %v3775
        %v4088 = vsel %vm4075, %v4055, %v3777
        %v4089 = vsel %vm4075, %v4056, %v3779
        %v4090 = vsel %vm4075, %v4057, %v3781
        %v4091 = vsel %vm4075, %v4058, %v3783
        %v4092 = vsel %vm4075, %v4059, %v3785
        %v4093 = vsel %vm4075, %v4060, %v3787
        %v4094 = vsel %vm4075, %v4061, %v3789
        %v4095 = vsel %vm4075, %v4062, %v3791
        %v4096 = vsel %vm4075, %v4063, %v3793
        %v4097 = vsel %vm4075, %v4064, %v3795
        %v4098 = vsel %vm4075, %v4065, %v3797
        %v4099 = vsel %vm4075, %v4066, %v3799
        %v4100 = vsel %vm4075, %v4067, %v3801
        %v4101 = vsel %vm4075, %v4068, %v3803
        %v4102 = vsel %vm4075, %v4069, %v3805
        %v4103 = vsel %vm4075, %v4070, %v3807
        %v4104 = vsel %vm4075, %v4071, %v3809
        %v4105 = vsel %vm4075, %v4072, %v3811
        %v4106 = vsel %vm4075, %v4073, %v3813
        %v4107 = vsel %vm4075, %v4074, %v3815
        %v4108 = vld [vmem:[#allocation8] sm:$0xff]
        %v4109 = vld [vmem:[#allocation8 + $0x8] sm:$0xff]
        %v4110 = vld [vmem:[#allocation8 + $0x10] sm:$0xff]
        %v4111 = vld [vmem:[#allocation8 + $0x18] sm:$0xff]
        %v4112 = vld [vmem:[#allocation8 + $0x20] sm:$0xff]
        %v4113 = vld [vmem:[#allocation8 + $0x28] sm:$0xff]
        %v4114 = vld [vmem:[#allocation8 + $0x30] sm:$0xff]
        %v4115 = vld [vmem:[#allocation8 + $0x38] sm:$0xff]
        %v4116 = vld [vmem:[#allocation8 + $0x40] sm:$0xff]
        %v4117 = vld [vmem:[#allocation10] sm:$0x1]
        %v4119 = vlaneseq
        %v4120 = vshrl.u32 %v4119, 7
        %v4121 = vsub.s32 0, %v4120
        %v4122 = vrot.slane %v4117, %v4121
        %vm4124 = vcmask 588800
        %v4126 = vsel %vm4124, %v4076, 0
        %v4129 = vsel %vm4124, %v4077, 0
        %v4132 = vsel %vm4124, %v4078, 0
        %v4135 = vsel %vm4124, %v4079, 0
        %v4138 = vsel %vm4124, %v4080, 0
        %v4141 = vsel %vm4124, %v4081, 0
        %v4144 = vsel %vm4124, %v4082, 0
        %v4147 = vsel %vm4124, %v4083, 0
        %v4150 = vsel %vm4124, %v4084, 0
        %v4153 = vsel %vm4124, %v4085, 0
        %v4156 = vsel %vm4124, %v4086, 0
        %v4159 = vsel %vm4124, %v4087, 0
        %v4162 = vsel %vm4124, %v4088, 0
        %v4165 = vsel %vm4124, %v4089, 0
        %v4168 = vsel %vm4124, %v4090, 0
        %v4171 = vsel %vm4124, %v4091, 0
        %v4174 = vsel %vm4124, %v4092, 0
        %v4177 = vsel %vm4124, %v4093, 0
        %v4180 = vsel %vm4124, %v4094, 0
        %v4183 = vsel %vm4124, %v4095, 0
        %v4186 = vsel %vm4124, %v4096, 0
        %v4189 = vsel %vm4124, %v4097, 0
        %v4192 = vsel %vm4124, %v4098, 0
        %v4195 = vsel %vm4124, %v4099, 0
        %v4198 = vsel %vm4124, %v4100, 0
        %v4201 = vsel %vm4124, %v4101, 0
        %v4204 = vsel %vm4124, %v4102, 0
        %v4207 = vsel %vm4124, %v4103, 0
        %v4210 = vsel %vm4124, %v4104, 0
        %v4213 = vsel %vm4124, %v4105, 0
        %v4216 = vsel %vm4124, %v4106, 0
        %v4219 = vsel %vm4124, %v4107, 0
        %4221 = vmatprep.subr.mxu0 0.0
        %4222 = vmatpush1.msra.mxu0 %v4108
        %4223 = vmatprep.subr.mxu0 0.0
        %4224 = vmatpush1.msra.mxu0 %v4109
        %4225 = vmatprep.subr.mxu0 0.0
        %4226 = vmatpush1.msra.mxu0 %v4110
        %4227 = vmatprep.subr.mxu0 0.0
        %4228 = vmatpush1.msra.mxu0 %v4111
        %4229 = vmatprep.subr.mxu0 0.0
        %4230 = vmatpush1.msra.mxu0 %v4112
        %4231 = vmatprep.subr.mxu0 0.0
        %4232 = vmatpush1.msra.mxu0 %v4113
        %4233 = vmatprep.subr.mxu0 0.0
        %4234 = vmatpush1.msra.mxu0 %v4114
        %4235 = vmatprep.subr.mxu0 0.0
        %4236 = vmatpush1.msra.mxu0 %v4115
        %4237 = vmatprep.subr.mxu0 0.0
        %4238 = vmatpush1.msra.mxu0 %v4116
        %4239 = vmatprep.subr.mxu0 0.0
        %4240 = vmatpush1.msra.mxu0 0.0
        %4241 = vmatprep.subr.mxu0 0.0
        %4242 = vmatpush1.msra.mxu0 0.0
        %4243 = vmatprep.subr.mxu0 0.0
        %4244 = vmatpush1.msra.mxu0 0.0
        %4245 = vmatprep.subr.mxu0 0.0
        %4246 = vmatpush1.msra.mxu0 0.0
        %4247 = vmatprep.subr.mxu0 0.0
        %4248 = vmatpush1.msra.mxu0 0.0
        %4249 = vmatprep.subr.mxu0 0.0
        %4250 = vmatpush1.msra.mxu0 0.0
        %4251 = vmatprep.subr.mxu0 0.0
        %4252 = vmatpush1.msra.mxu0 0.0
        %4253 = vmatprep.subr.mxu0 0.0
        %4254 = vmatpush1.msra.mxu0 0.0
        %4255 = vmatprep.subr.mxu0 0.0
        %4256 = vmatpush1.msra.mxu0 0.0
        %4257 = vmatprep.subr.mxu0 0.0
        %4258 = vmatpush1.msra.mxu0 0.0
        %4259 = vmatprep.subr.mxu0 0.0
        %4260 = vmatpush1.msra.mxu0 0.0
        %4261 = vmatprep.subr.mxu0 0.0
        %4262 = vmatpush1.msra.mxu0 0.0
        %4263 = vmatprep.subr.mxu0 0.0
        %4264 = vmatpush1.msra.mxu0 0.0
        %4265 = vmatprep.subr.mxu0 0.0
        %4266 = vmatpush1.msra.mxu0 0.0
        %4267 = vmatprep.subr.mxu0 0.0
        %4268 = vmatpush1.msra.mxu0 0.0
        %4269 = vmatprep.subr.mxu0 0.0
        %4270 = vmatpush1.msra.mxu0 0.0
        %4271 = vmatprep.subr.mxu0 0.0
        %4272 = vmatpush1.msra.mxu0 0.0
        %4273 = vmatprep.subr.mxu0 0.0
        %4274 = vmatpush1.msra.mxu0 0.0
        %4275 = vmatprep.subr.mxu0 0.0
        %4276 = vmatpush1.msra.mxu0 0.0
        %4277 = vmatprep.subr.mxu0 0.0
        %4278 = vmatpush1.msra.mxu0 0.0
        %4279 = vmatprep.subr.mxu0 0.0
        %4280 = vmatpush1.msra.mxu0 0.0
        %4281 = vmatprep.subr.mxu0 0.0
        %4282 = vmatpush1.msra.mxu0 0.0
        %4283 = vmatprep.subr.mxu0 0.0
        %4284 = vmatpush1.msra.mxu0 0.0
        %4285 = vmatprep.mubr.f32.mxu0 0.0
        %4286 = vmatmul.mubr.f32.gmra.mrb[0].mxu0 %v4126
        %v4287 = vpop.f32.mrb[0].mxu0
        %v4288 = vadd.f32 %v4122, %v4287
        %v4289 = vpop.f32.mrb[0].mxu0
        %4290 = vmatprep.mubr.f32.mxu0 0.0
        %4291 = vmatmul.mubr.f32.gmra.mrb[0].mxu0 %v4129
        %v4292 = vpop.f32.mrb[0].mxu0
        %v4293 = vadd.f32 %v4122, %v4292
        %v4294 = vpop.f32.mrb[0].mxu0
        %4295 = vmatprep.mubr.f32.mxu0 0.0
        %4296 = vmatmul.mubr.f32.gmra.mrb[0].mxu0 %v4132
        %v4297 = vpop.f32.mrb[0].mxu0
        %v4298 = vadd.f32 %v4122, %v4297
        %v4299 = vpop.f32.mrb[0].mxu0
        %4300 = vmatprep.mubr.f32.mxu0 0.0
        %4301 = vmatmul.mubr.f32.gmra.mrb[0].mxu0 %v4135
        %v4302 = vpop.f32.mrb[0].mxu0
        %v4303 = vadd.f32 %v4122, %v4302
        %v4304 = vpop.f32.mrb[0].mxu0
        %4305 = vmatprep.mubr.f32.mxu0 0.0
        %4306 = vmatmul.mubr.f32.gmra.mrb[0].mxu0 %v4138
        %v4307 = vpop.f32.mrb[0].mxu0
        %v4308 = vadd.f32 %v4122, %v4307
        %v4309 = vpop.f32.mrb[0].mxu0
        %4310 = vmatprep.mubr.f32.mxu0 0.0
        %4311 = vmatmul.mubr.f32.gmra.mrb[0].mxu0 %v4141
        %v4312 = vpop.f32.mrb[0].mxu0
        %v4313 = vadd.f32 %v4122, %v4312
        %v4314 = vpop.f32.mrb[0].mxu0
        %4315 = vmatprep.mubr.f32.mxu0 0.0
        %4316 = vmatmul.mubr.f32.gmra.mrb[0].mxu0 %v4144
        %v4317 = vpop.f32.mrb[0].mxu0
        %v4318 = vadd.f32 %v4122, %v4317
        %v4319 = vpop.f32.mrb[0].mxu0
        %4320 = vmatprep.mubr.f32.mxu0 0.0
        %4321 = vmatmul.mubr.f32.gmra.mrb[0].mxu0 %v4147
        %v4322 = vpop.f32.mrb[0].mxu0
        %v4323 = vadd.f32 %v4122, %v4322
        %v4324 = vpop.f32.mrb[0].mxu0
        %4325 = vmatprep.mubr.f32.mxu0 0.0
        %4326 = vmatmul.mubr.f32.gmra.mrb[0].mxu0 %v4150
        %v4327 = vpop.f32.mrb[0].mxu0
        %v4328 = vadd.f32 %v4122, %v4327
        %v4329 = vpop.f32.mrb[0].mxu0
        %4330 = vmatprep.mubr.f32.mxu0 0.0
        %4331 = vmatmul.mubr.f32.gmra.mrb[0].mxu0 %v4153
        %v4332 = vpop.f32.mrb[0].mxu0
        %v4333 = vadd.f32 %v4122, %v4332
        %v4334 = vpop.f32.mrb[0].mxu0
        %4335 = vmatprep.mubr.f32.mxu0 0.0
        %4336 = vmatmul.mubr.f32.gmra.mrb[0].mxu0 %v4156
        %v4337 = vpop.f32.mrb[0].mxu0
        %v4338 = vadd.f32 %v4122, %v4337
        %v4339 = vpop.f32.mrb[0].mxu0
        %4340 = vmatprep.mubr.f32.mxu0 0.0
        %4341 = vmatmul.mubr.f32.gmra.mrb[0].mxu0 %v4159
        %v4342 = vpop.f32.mrb[0].mxu0
        %v4343 = vadd.f32 %v4122, %v4342
        %v4344 = vpop.f32.mrb[0].mxu0
        %4345 = vmatprep.mubr.f32.mxu0 0.0
        %4346 = vmatmul.mubr.f32.gmra.mrb[0].mxu0 %v4162
        %v4347 = vpop.f32.mrb[0].mxu0
        %v4348 = vadd.f32 %v4122, %v4347
        %v4349 = vpop.f32.mrb[0].mxu0
        %4350 = vmatprep.mubr.f32.mxu0 0.0
        %4351 = vmatmul.mubr.f32.gmra.mrb[0].mxu0 %v4165
        %v4352 = vpop.f32.mrb[0].mxu0
        %v4353 = vadd.f32 %v4122, %v4352
        %v4354 = vpop.f32.mrb[0].mxu0
        %4355 = vmatprep.mubr.f32.mxu0 0.0
        %4356 = vmatmul.mubr.f32.gmra.mrb[0].mxu0 %v4168
        %v4357 = vpop.f32.mrb[0].mxu0
        %v4358 = vadd.f32 %v4122, %v4357
        %v4359 = vpop.f32.mrb[0].mxu0
        %4360 = vmatprep.mubr.f32.mxu0 0.0
        %4361 = vmatmul.mubr.f32.gmra.mrb[0].mxu0 %v4171
        %v4362 = vpop.f32.mrb[0].mxu0
        %v4363 = vadd.f32 %v4122, %v4362
        %v4364 = vpop.f32.mrb[0].mxu0
        %4365 = vmatprep.mubr.f32.mxu0 0.0
        %4366 = vmatmul.mubr.f32.gmra.mrb[0].mxu0 %v4174
        %v4367 = vpop.f32.mrb[0].mxu0
        %v4368 = vadd.f32 %v4122, %v4367
        %v4369 = vpop.f32.mrb[0].mxu0
        %4370 = vmatprep.mubr.f32.mxu0 0.0
        %4371 = vmatmul.mubr.f32.gmra.mrb[0].mxu0 %v4177
        %v4372 = vpop.f32.mrb[0].mxu0
        %v4373 = vadd.f32 %v4122, %v4372
        %v4374 = vpop.f32.mrb[0].mxu0
        %4375 = vmatprep.mubr.f32.mxu0 0.0
        %4376 = vmatmul.mubr.f32.gmra.mrb[0].mxu0 %v4180
        %v4377 = vpop.f32.mrb[0].mxu0
        %v4378 = vadd.f32 %v4122, %v4377
        %v4379 = vpop.f32.mrb[0].mxu0
        %4380 = vmatprep.mubr.f32.mxu0 0.0
        %4381 = vmatmul.mubr.f32.gmra.mrb[0].mxu0 %v4183
        %v4382 = vpop.f32.mrb[0].mxu0
        %v4383 = vadd.f32 %v4122, %v4382
        %v4384 = vpop.f32.mrb[0].mxu0
        %4385 = vmatprep.mubr.f32.mxu0 0.0
        %4386 = vmatmul.mubr.f32.gmra.mrb[0].mxu0 %v4186
        %v4387 = vpop.f32.mrb[0].mxu0
        %v4388 = vadd.f32 %v4122, %v4387
        %v4389 = vpop.f32.mrb[0].mxu0
        %4390 = vmatprep.mubr.f32.mxu0 0.0
        %4391 = vmatmul.mubr.f32.gmra.mrb[0].mxu0 %v4189
        %v4392 = vpop.f32.mrb[0].mxu0
        %v4393 = vadd.f32 %v4122, %v4392
        %v4394 = vpop.f32.mrb[0].mxu0
        %4395 = vmatprep.mubr.f32.mxu0 0.0
        %4396 = vmatmul.mubr.f32.gmra.mrb[0].mxu0 %v4192
        %v4397 = vpop.f32.mrb[0].mxu0
        %v4398 = vadd.f32 %v4122, %v4397
        %v4399 = vpop.f32.mrb[0].mxu0
        %4400 = vmatprep.mubr.f32.mxu0 0.0
        %4401 = vmatmul.mubr.f32.gmra.mrb[0].mxu0 %v4195
        %v4402 = vpop.f32.mrb[0].mxu0
        %v4403 = vadd.f32 %v4122, %v4402
        %v4404 = vpop.f32.mrb[0].mxu0
        %4405 = vmatprep.mubr.f32.mxu0 0.0
        %4406 = vmatmul.mubr.f32.gmra.mrb[0].mxu0 %v4198
        %v4407 = vpop.f32.mrb[0].mxu0
        %v4408 = vadd.f32 %v4122, %v4407
        %v4409 = vpop.f32.mrb[0].mxu0
        %4410 = vmatprep.mubr.f32.mxu0 0.0
        %4411 = vmatmul.mubr.f32.gmra.mrb[0].mxu0 %v4201
        %v4412 = vpop.f32.mrb[0].mxu0
        %v4413 = vadd.f32 %v4122, %v4412
        %v4414 = vpop.f32.mrb[0].mxu0
        %4415 = vmatprep.mubr.f32.mxu0 0.0
        %4416 = vmatmul.mubr.f32.gmra.mrb[0].mxu0 %v4204
        %v4417 = vpop.f32.mrb[0].mxu0
        %v4418 = vadd.f32 %v4122, %v4417
        %v4419 = vpop.f32.mrb[0].mxu0
        %4420 = vmatprep.mubr.f32.mxu0 0.0
        %4421 = vmatmul.mubr.f32.gmra.mrb[0].mxu0 %v4207
        %v4422 = vpop.f32.mrb[0].mxu0
        %v4423 = vadd.f32 %v4122, %v4422
        %v4424 = vpop.f32.mrb[0].mxu0
        %4425 = vmatprep.mubr.f32.mxu0 0.0
        %4426 = vmatmul.mubr.f32.gmra.mrb[0].mxu0 %v4210
        %v4427 = vpop.f32.mrb[0].mxu0
        %v4428 = vadd.f32 %v4122, %v4427
        %v4429 = vpop.f32.mrb[0].mxu0
        %4430 = vmatprep.mubr.f32.mxu0 0.0
        %4431 = vmatmul.mubr.f32.gmra.mrb[0].mxu0 %v4213
        %v4432 = vpop.f32.mrb[0].mxu0
        %v4433 = vadd.f32 %v4122, %v4432
        %v4434 = vpop.f32.mrb[0].mxu0
        %4435 = vmatprep.mubr.f32.mxu0 0.0
        %4436 = vmatmul.mubr.f32.gmra.mrb[0].mxu0 %v4216
        %v4437 = vpop.f32.mrb[0].mxu0
        %v4438 = vadd.f32 %v4122, %v4437
        %v4439 = vpop.f32.mrb[0].mxu0
        %4440 = vmatprep.mubr.f32.mxu0 0.0
        %4441 = vmatmul.mubr.f32.gmra.mrb[0].mxu0 %v4219
        %v4442 = vpop.f32.mrb[0].mxu0
        %v4443 = vadd.f32 %v4122, %v4442
        %v4444 = vpop.f32.mrb[0].mxu0
        %4445 = vdwg.mxu0
        %v4446 = vmax.f32 %v4288, 0.0
        %v4447 = vmax.f32 %v4293, 0.0
        %v4448 = vmax.f32 %v4298, 0.0
        %v4449 = vmax.f32 %v4303, 0.0
        %v4450 = vmax.f32 %v4308, 0.0
        %v4451 = vmax.f32 %v4313, 0.0
        %v4452 = vmax.f32 %v4318, 0.0
        %v4453 = vmax.f32 %v4323, 0.0
        %v4454 = vmax.f32 %v4328, 0.0
        %v4455 = vmax.f32 %v4333, 0.0
        %v4456 = vmax.f32 %v4338, 0.0
        %v4457 = vmax.f32 %v4343, 0.0
        %v4458 = vmax.f32 %v4348, 0.0
        %v4459 = vmax.f32 %v4353, 0.0
        %v4460 = vmax.f32 %v4358, 0.0
        %v4461 = vmax.f32 %v4363, 0.0
        %v4462 = vmax.f32 %v4368, 0.0
        %v4463 = vmax.f32 %v4373, 0.0
        %v4464 = vmax.f32 %v4378, 0.0
        %v4465 = vmax.f32 %v4383, 0.0
        %v4466 = vmax.f32 %v4388, 0.0
        %v4467 = vmax.f32 %v4393, 0.0
        %v4468 = vmax.f32 %v4398, 0.0
        %v4469 = vmax.f32 %v4403, 0.0
        %v4470 = vmax.f32 %v4408, 0.0
        %v4471 = vmax.f32 %v4413, 0.0
        %v4472 = vmax.f32 %v4418, 0.0
        %v4473 = vmax.f32 %v4423, 0.0
        %v4474 = vmax.f32 %v4428, 0.0
        %v4475 = vmax.f32 %v4433, 0.0
        %v4476 = vmax.f32 %v4438, 0.0
        %v4477 = vmax.f32 %v4443, 0.0
        %4478 = vst.msk [vmem:[%s347] sm:$0xff] %vm1872, %v4446
        %4479 = vst.msk [vmem:[%s347 + $0x8] sm:$0xff] %vm1872, %v4447
        %4480 = vst.msk [vmem:[%s347 + $0x10] sm:$0xff] %vm1872, %v4448
        %4481 = vst.msk [vmem:[%s347 + $0x18] sm:$0xff] %vm1872, %v4449
        %4482 = vst.msk [vmem:[%s347 + $0x20] sm:$0xff] %vm1872, %v4450
        %4483 = vst.msk [vmem:[%s347 + $0x28] sm:$0xff] %vm1872, %v4451
        %4484 = vst.msk [vmem:[%s347 + $0x30] sm:$0xff] %vm1872, %v4452
        %4485 = vst.msk [vmem:[%s347 + $0x38] sm:$0xff] %vm1872, %v4453
        %4486 = vst.msk [vmem:[%s347 + $0x40] sm:$0xff] %vm1872, %v4454
        %4487 = vst.msk [vmem:[%s347 + $0x48] sm:$0xff] %vm1872, %v4455
        %4488 = vst.msk [vmem:[%s347 + $0x50] sm:$0xff] %vm1872, %v4456
        %4489 = vst.msk [vmem:[%s347 + $0x58] sm:$0xff] %vm1872, %v4457
        %4490 = vst.msk [vmem:[%s347 + $0x60] sm:$0xff] %vm1872, %v4458
        %4491 = vst.msk [vmem:[%s347 + $0x68] sm:$0xff] %vm1872, %v4459
        %4492 = vst.msk [vmem:[%s347 + $0x70] sm:$0xff] %vm1872, %v4460
        %4493 = vst.msk [vmem:[%s347 + $0x78] sm:$0xff] %vm1872, %v4461
        %4494 = vst.msk [vmem:[%s347 + $0x80] sm:$0xff] %vm1872, %v4462
        %4495 = vst.msk [vmem:[%s347 + $0x88] sm:$0xff] %vm1872, %v4463
        %4496 = vst.msk [vmem:[%s347 + $0x90] sm:$0xff] %vm1872, %v4464
        %4497 = vst.msk [vmem:[%s347 + $0x98] sm:$0xff] %vm1872, %v4465
        %4498 = vst.msk [vmem:[%s347 + $0xa0] sm:$0xff] %vm1872, %v4466
        %4499 = vst.msk [vmem:[%s347 + $0xa8] sm:$0xff] %vm1872, %v4467
        %4500 = vst.msk [vmem:[%s347 + $0xb0] sm:$0xff] %vm1872, %v4468
        %4501 = vst.msk [vmem:[%s347 + $0xb8] sm:$0xff] %vm1872, %v4469
        %4502 = vst.msk [vmem:[%s347 + $0xc0] sm:$0xff] %vm1872, %v4470
        %4503 = vst.msk [vmem:[%s347 + $0xc8] sm:$0xff] %vm1872, %v4471
        %4504 = vst.msk [vmem:[%s347 + $0xd0] sm:$0xff] %vm1872, %v4472
        %4505 = vst.msk [vmem:[%s347 + $0xd8] sm:$0xff] %vm1872, %v4473
        %4506 = vst.msk [vmem:[%s347 + $0xe0] sm:$0xff] %vm1872, %v4474
        %4507 = vst.msk [vmem:[%s347 + $0xe8] sm:$0xff] %vm1872, %v4475
        %4508 = vst.msk [vmem:[%s347 + $0xf0] sm:$0xff] %vm1872, %v4476
        %4509 = vst.msk [vmem:[%s347 + $0xf8] sm:$0xff] %vm1872, %v4477
        %v4510 = vsel %vm1872, %v4446, -inf
        %v4511 = vsel %vm1872, %v4448, -inf
        %v4512 = vmax.f32 %v4510, %v4511
        %v4513 = vsel %vm1872, %v4447, -inf
        %v4514 = vsel %vm1872, %v4449, -inf
        %v4515 = vmax.f32 %v4513, %v4514
        %v4516 = vsel %vm1872, %v4450, -inf
        %v4517 = vsel %vm1872, %v4452, -inf
        %v4518 = vmax.f32 %v4516, %v4517
        %v4519 = vsel %vm1872, %v4451, -inf
        %v4520 = vsel %vm1872, %v4453, -inf
        %v4521 = vmax.f32 %v4519, %v4520
        %v4522 = vsel %vm1872, %v4454, -inf
        %v4523 = vsel %vm1872, %v4456, -inf
        %v4524 = vmax.f32 %v4522, %v4523
        %v4525 = vsel %vm1872, %v4455, -inf
        %v4526 = vsel %vm1872, %v4457, -inf
        %v4527 = vmax.f32 %v4525, %v4526
        %v4528 = vsel %vm1872, %v4458, -inf
        %v4529 = vsel %vm1872, %v4460, -inf
        %v4530 = vmax.f32 %v4528, %v4529
        %v4531 = vsel %vm1872, %v4459, -inf
        %v4532 = vsel %vm1872, %v4461, -inf
        %v4533 = vmax.f32 %v4531, %v4532
        %v4534 = vsel %vm1872, %v4462, -inf
        %v4535 = vsel %vm1872, %v4464, -inf
        %v4536 = vmax.f32 %v4534, %v4535
        %v4537 = vsel %vm1872, %v4463, -inf
        %v4538 = vsel %vm1872, %v4465, -inf
        %v4539 = vmax.f32 %v4537, %v4538
        %v4540 = vsel %vm1872, %v4466, -inf
        %v4541 = vsel %vm1872, %v4468, -inf
        %v4542 = vmax.f32 %v4540, %v4541
        %v4543 = vsel %vm1872, %v4467, -inf
        %v4544 = vsel %vm1872, %v4469, -inf
        %v4545 = vmax.f32 %v4543, %v4544
        %v4546 = vsel %vm1872, %v4470, -inf
        %v4547 = vsel %vm1872, %v4472, -inf
        %v4548 = vmax.f32 %v4546, %v4547
        %v4549 = vsel %vm1872, %v4471, -inf
        %v4550 = vsel %vm1872, %v4473, -inf
        %v4551 = vmax.f32 %v4549, %v4550
        %v4552 = vsel %vm1872, %v4474, -inf
        %v4553 = vsel %vm1872, %v4476, -inf
        %v4554 = vmax.f32 %v4552, %v4553
        %v4555 = vsel %vm1872, %v4475, -inf
        %v4556 = vsel %vm1872, %v4477, -inf
        %v4557 = vmax.f32 %v4555, %v4556
        %v4574 = vcombine.high %v4512, %v4512
        %v4576 = vunpack.c.l.s4 1983009808
        %v4577 = vunpack.c.0.s8 %v4576
        %v4578 = vlaneseq
        %v4579 = vshrl.u32 %v4578, 7
        %v4580 = vsub.s32 %v4577, %v4579
        %v4581 = vrot.slane %v4512, %v4580
        %v4583 = vunpack.c.l.s4 1983009808
        %v4584 = vunpack.c.0.s8 %v4583
        %v4585 = vlaneseq
        %v4586 = vshrl.u32 %v4585, 7
        %v4587 = vsub.s32 %v4584, %v4586
        %v4588 = vrot.slane %v4574, %v4587
        %v4589 = vcombine.high %v4581, %v4581
        %v4590 = vcombine.high %v4588, %v4588
        %v4591 = vcombine.high %v4515, %v4515
        %v4593 = vunpack.c.l.s4 1983009808
        %v4594 = vunpack.c.0.s8 %v4593
        %v4595 = vlaneseq
        %v4596 = vshrl.u32 %v4595, 7
        %v4597 = vsub.s32 %v4594, %v4596
        %v4598 = vrot.slane %v4515, %v4597
        %v4600 = vunpack.c.l.s4 1983009808
        %v4601 = vunpack.c.0.s8 %v4600
        %v4602 = vlaneseq
        %v4603 = vshrl.u32 %v4602, 7
        %v4604 = vsub.s32 %v4601, %v4603
        %v4605 = vrot.slane %v4591, %v4604
        %v4606 = vcombine.high %v4598, %v4598
        %v4607 = vcombine.high %v4605, %v4605
        %v4608 = vcombine.high %v4518, %v4518
        %v4610 = vunpack.c.l.s4 1983009808
        %v4611 = vunpack.c.0.s8 %v4610
        %v4612 = vlaneseq
        %v4613 = vshrl.u32 %v4612, 7
        %v4614 = vsub.s32 %v4611, %v4613
        %v4615 = vrot.slane %v4518, %v4614
        %v4617 = vunpack.c.l.s4 1983009808
        %v4618 = vunpack.c.0.s8 %v4617
        %v4619 = vlaneseq
        %v4620 = vshrl.u32 %v4619, 7
        %v4621 = vsub.s32 %v4618, %v4620
        %v4622 = vrot.slane %v4608, %v4621
        %v4623 = vcombine.high %v4615, %v4615
        %v4624 = vcombine.high %v4622, %v4622
        %v4625 = vcombine.high %v4521, %v4521
        %v4627 = vunpack.c.l.s4 1983009808
        %v4628 = vunpack.c.0.s8 %v4627
        %v4629 = vlaneseq
        %v4630 = vshrl.u32 %v4629, 7
        %v4631 = vsub.s32 %v4628, %v4630
        %v4632 = vrot.slane %v4521, %v4631
        %v4634 = vunpack.c.l.s4 1983009808
        %v4635 = vunpack.c.0.s8 %v4634
        %v4636 = vlaneseq
        %v4637 = vshrl.u32 %v4636, 7
        %v4638 = vsub.s32 %v4635, %v4637
        %v4639 = vrot.slane %v4625, %v4638
        %v4640 = vcombine.high %v4632, %v4632
        %v4641 = vcombine.high %v4639, %v4639
        %v4642 = vcombine.high %v4524, %v4524
        %v4644 = vunpack.c.l.s4 1983009808
        %v4645 = vunpack.c.0.s8 %v4644
        %v4646 = vlaneseq
        %v4647 = vshrl.u32 %v4646, 7
        %v4648 = vsub.s32 %v4645, %v4647
        %v4649 = vrot.slane %v4524, %v4648
        %v4651 = vunpack.c.l.s4 1983009808
        %v4652 = vunpack.c.0.s8 %v4651
        %v4653 = vlaneseq
        %v4654 = vshrl.u32 %v4653, 7
        %v4655 = vsub.s32 %v4652, %v4654
        %v4656 = vrot.slane %v4642, %v4655
        %v4657 = vcombine.high %v4649, %v4649
        %v4658 = vcombine.high %v4656, %v4656
        %v4659 = vcombine.high %v4527, %v4527
        %v4661 = vunpack.c.l.s4 1983009808
        %v4662 = vunpack.c.0.s8 %v4661
        %v4663 = vlaneseq
        %v4664 = vshrl.u32 %v4663, 7
        %v4665 = vsub.s32 %v4662, %v4664
        %v4666 = vrot.slane %v4527, %v4665
        %v4668 = vunpack.c.l.s4 1983009808
        %v4669 = vunpack.c.0.s8 %v4668
        %v4670 = vlaneseq
        %v4671 = vshrl.u32 %v4670, 7
        %v4672 = vsub.s32 %v4669, %v4671
        %v4673 = vrot.slane %v4659, %v4672
        %v4674 = vcombine.high %v4666, %v4666
        %v4675 = vcombine.high %v4673, %v4673
        %v4676 = vcombine.high %v4530, %v4530
        %v4678 = vunpack.c.l.s4 1983009808
        %v4679 = vunpack.c.0.s8 %v4678
        %v4680 = vlaneseq
        %v4681 = vshrl.u32 %v4680, 7
        %v4682 = vsub.s32 %v4679, %v4681
        %v4683 = vrot.slane %v4530, %v4682
        %v4685 = vunpack.c.l.s4 1983009808
        %v4686 = vunpack.c.0.s8 %v4685
        %v4687 = vlaneseq
        %v4688 = vshrl.u32 %v4687, 7
        %v4689 = vsub.s32 %v4686, %v4688
        %v4690 = vrot.slane %v4676, %v4689
        %v4691 = vcombine.high %v4683, %v4683
        %v4692 = vcombine.high %v4690, %v4690
        %v4693 = vcombine.high %v4533, %v4533
        %v4695 = vunpack.c.l.s4 1983009808
        %v4696 = vunpack.c.0.s8 %v4695
        %v4697 = vlaneseq
        %v4698 = vshrl.u32 %v4697, 7
        %v4699 = vsub.s32 %v4696, %v4698
        %v4700 = vrot.slane %v4533, %v4699
        %v4702 = vunpack.c.l.s4 1983009808
        %v4703 = vunpack.c.0.s8 %v4702
        %v4704 = vlaneseq
        %v4705 = vshrl.u32 %v4704, 7
        %v4706 = vsub.s32 %v4703, %v4705
        %v4707 = vrot.slane %v4693, %v4706
        %v4708 = vcombine.high %v4700, %v4700
        %v4709 = vcombine.high %v4707, %v4707
        %v4710 = vcombine.high %v4536, %v4536
        %v4712 = vunpack.c.l.s4 1983009808
        %v4713 = vunpack.c.0.s8 %v4712
        %v4714 = vlaneseq
        %v4715 = vshrl.u32 %v4714, 7
        %v4716 = vsub.s32 %v4713, %v4715
        %v4717 = vrot.slane %v4536, %v4716
        %v4719 = vunpack.c.l.s4 1983009808
        %v4720 = vunpack.c.0.s8 %v4719
        %v4721 = vlaneseq
        %v4722 = vshrl.u32 %v4721, 7
        %v4723 = vsub.s32 %v4720, %v4722
        %v4724 = vrot.slane %v4710, %v4723
        %v4725 = vcombine.high %v4717, %v4717
        %v4726 = vcombine.high %v4724, %v4724
        %v4727 = vcombine.high %v4539, %v4539
        %v4729 = vunpack.c.l.s4 1983009808
        %v4730 = vunpack.c.0.s8 %v4729
        %v4731 = vlaneseq
        %v4732 = vshrl.u32 %v4731, 7
        %v4733 = vsub.s32 %v4730, %v4732
        %v4734 = vrot.slane %v4539, %v4733
        %v4736 = vunpack.c.l.s4 1983009808
        %v4737 = vunpack.c.0.s8 %v4736
        %v4738 = vlaneseq
        %v4739 = vshrl.u32 %v4738, 7
        %v4740 = vsub.s32 %v4737, %v4739
        %v4741 = vrot.slane %v4727, %v4740
        %v4742 = vcombine.high %v4734, %v4734
        %v4743 = vcombine.high %v4741, %v4741
        %v4744 = vcombine.high %v4542, %v4542
        %v4746 = vunpack.c.l.s4 1983009808
        %v4747 = vunpack.c.0.s8 %v4746
        %v4748 = vlaneseq
        %v4749 = vshrl.u32 %v4748, 7
        %v4750 = vsub.s32 %v4747, %v4749
        %v4751 = vrot.slane %v4542, %v4750
        %v4753 = vunpack.c.l.s4 1983009808
        %v4754 = vunpack.c.0.s8 %v4753
        %v4755 = vlaneseq
        %v4756 = vshrl.u32 %v4755, 7
        %v4757 = vsub.s32 %v4754, %v4756
        %v4758 = vrot.slane %v4744, %v4757
        %v4759 = vcombine.high %v4751, %v4751
        %v4760 = vcombine.high %v4758, %v4758
        %v4761 = vcombine.high %v4545, %v4545
        %v4763 = vunpack.c.l.s4 1983009808
        %v4764 = vunpack.c.0.s8 %v4763
        %v4765 = vlaneseq
        %v4766 = vshrl.u32 %v4765, 7
        %v4767 = vsub.s32 %v4764, %v4766
        %v4768 = vrot.slane %v4545, %v4767
        %v4770 = vunpack.c.l.s4 1983009808
        %v4771 = vunpack.c.0.s8 %v4770
        %v4772 = vlaneseq
        %v4773 = vshrl.u32 %v4772, 7
        %v4774 = vsub.s32 %v4771, %v4773
        %v4775 = vrot.slane %v4761, %v4774
        %v4776 = vcombine.high %v4768, %v4768
        %v4777 = vcombine.high %v4775, %v4775
        %v4778 = vcombine.high %v4548, %v4548
        %v4780 = vunpack.c.l.s4 1983009808
        %v4781 = vunpack.c.0.s8 %v4780
        %v4782 = vlaneseq
        %v4783 = vshrl.u32 %v4782, 7
        %v4784 = vsub.s32 %v4781, %v4783
        %v4785 = vrot.slane %v4548, %v4784
        %v4787 = vunpack.c.l.s4 1983009808
        %v4788 = vunpack.c.0.s8 %v4787
        %v4789 = vlaneseq
        %v4790 = vshrl.u32 %v4789, 7
        %v4791 = vsub.s32 %v4788, %v4790
        %v4792 = vrot.slane %v4778, %v4791
        %v4793 = vcombine.high %v4785, %v4785
        %v4794 = vcombine.high %v4792, %v4792
        %v4795 = vcombine.high %v4551, %v4551
        %v4797 = vunpack.c.l.s4 1983009808
        %v4798 = vunpack.c.0.s8 %v4797
        %v4799 = vlaneseq
        %v4800 = vshrl.u32 %v4799, 7
        %v4801 = vsub.s32 %v4798, %v4800
        %v4802 = vrot.slane %v4551, %v4801
        %v4804 = vunpack.c.l.s4 1983009808
        %v4805 = vunpack.c.0.s8 %v4804
        %v4806 = vlaneseq
        %v4807 = vshrl.u32 %v4806, 7
        %v4808 = vsub.s32 %v4805, %v4807
        %v4809 = vrot.slane %v4795, %v4808
        %v4810 = vcombine.high %v4802, %v4802
        %v4811 = vcombine.high %v4809, %v4809
        %v4812 = vcombine.high %v4554, %v4554
        %v4814 = vunpack.c.l.s4 1983009808
        %v4815 = vunpack.c.0.s8 %v4814
        %v4816 = vlaneseq
        %v4817 = vshrl.u32 %v4816, 7
        %v4818 = vsub.s32 %v4815, %v4817
        %v4819 = vrot.slane %v4554, %v4818
        %v4821 = vunpack.c.l.s4 1983009808
        %v4822 = vunpack.c.0.s8 %v4821
        %v4823 = vlaneseq
        %v4824 = vshrl.u32 %v4823, 7
        %v4825 = vsub.s32 %v4822, %v4824
        %v4826 = vrot.slane %v4812, %v4825
        %v4827 = vcombine.high %v4819, %v4819
        %v4828 = vcombine.high %v4826, %v4826
        %v4829 = vcombine.high %v4557, %v4557
        %v4831 = vunpack.c.l.s4 1983009808
        %v4832 = vunpack.c.0.s8 %v4831
        %v4833 = vlaneseq
        %v4834 = vshrl.u32 %v4833, 7
        %v4835 = vsub.s32 %v4832, %v4834
        %v4836 = vrot.slane %v4557, %v4835
        %v4838 = vunpack.c.l.s4 1983009808
        %v4839 = vunpack.c.0.s8 %v4838
        %v4840 = vlaneseq
        %v4841 = vshrl.u32 %v4840, 7
        %v4842 = vsub.s32 %v4839, %v4841
        %v4843 = vrot.slane %v4829, %v4842
        %v4844 = vcombine.high %v4836, %v4836
        %v4845 = vcombine.high %v4843, %v4843
        %vm4910 = vcmask 58368
        %v4911 = vsel %vm4910, %v4581, -inf
        %v4912 = vrot.slane %v4911, 4
        %v4913 = vmax.f32 %v4911, %v4912
        %v4914 = vrot.slane %v4913, 2
        %v4915 = vmax.f32 %v4913, %v4914
        %v4916 = vrot.slane %v4915, 1
        %v4917 = vmax.f32 %v4915, %v4916
        %v4918 = vsel %vm4910, %v4589, -inf
        %v4919 = vrot.slane %v4918, 4
        %v4920 = vmax.f32 %v4918, %v4919
        %v4921 = vrot.slane %v4920, 2
        %v4922 = vmax.f32 %v4920, %v4921
        %v4923 = vrot.slane %v4922, 1
        %v4924 = vmax.f32 %v4922, %v4923
        %v4925 = vsel %vm4910, %v4588, -inf
        %v4926 = vrot.slane %v4925, 4
        %v4927 = vmax.f32 %v4925, %v4926
        %v4928 = vrot.slane %v4927, 2
        %v4929 = vmax.f32 %v4927, %v4928
        %v4930 = vrot.slane %v4929, 1
        %v4931 = vmax.f32 %v4929, %v4930
        %v4932 = vsel %vm4910, %v4590, -inf
        %v4933 = vrot.slane %v4932, 4
        %v4934 = vmax.f32 %v4932, %v4933
        %v4935 = vrot.slane %v4934, 2
        %v4936 = vmax.f32 %v4934, %v4935
        %v4937 = vrot.slane %v4936, 1
        %v4938 = vmax.f32 %v4936, %v4937
        %v4939 = vsel %vm4910, %v4598, -inf
        %v4940 = vrot.slane %v4939, 4
        %v4941 = vmax.f32 %v4939, %v4940
        %v4942 = vrot.slane %v4941, 2
        %v4943 = vmax.f32 %v4941, %v4942
        %v4944 = vrot.slane %v4943, 1
        %v4945 = vmax.f32 %v4943, %v4944
        %v4946 = vsel %vm4910, %v4606, -inf
        %v4947 = vrot.slane %v4946, 4
        %v4948 = vmax.f32 %v4946, %v4947
        %v4949 = vrot.slane %v4948, 2
        %v4950 = vmax.f32 %v4948, %v4949
        %v4951 = vrot.slane %v4950, 1
        %v4952 = vmax.f32 %v4950, %v4951
        %v4953 = vsel %vm4910, %v4605, -inf
        %v4954 = vrot.slane %v4953, 4
        %v4955 = vmax.f32 %v4953, %v4954
        %v4956 = vrot.slane %v4955, 2
        %v4957 = vmax.f32 %v4955, %v4956
        %v4958 = vrot.slane %v4957, 1
        %v4959 = vmax.f32 %v4957, %v4958
        %v4960 = vsel %vm4910, %v4607, -inf
        %v4961 = vrot.slane %v4960, 4
        %v4962 = vmax.f32 %v4960, %v4961
        %v4963 = vrot.slane %v4962, 2
        %v4964 = vmax.f32 %v4962, %v4963
        %v4965 = vrot.slane %v4964, 1
        %v4966 = vmax.f32 %v4964, %v4965
        %v4967 = vsel %vm4910, %v4615, -inf
        %v4968 = vrot.slane %v4967, 4
        %v4969 = vmax.f32 %v4967, %v4968
        %v4970 = vrot.slane %v4969, 2
        %v4971 = vmax.f32 %v4969, %v4970
        %v4972 = vrot.slane %v4971, 1
        %v4973 = vmax.f32 %v4971, %v4972
        %v4974 = vsel %vm4910, %v4623, -inf
        %v4975 = vrot.slane %v4974, 4
        %v4976 = vmax.f32 %v4974, %v4975
        %v4977 = vrot.slane %v4976, 2
        %v4978 = vmax.f32 %v4976, %v4977
        %v4979 = vrot.slane %v4978, 1
        %v4980 = vmax.f32 %v4978, %v4979
        %v4981 = vsel %vm4910, %v4622, -inf
        %v4982 = vrot.slane %v4981, 4
        %v4983 = vmax.f32 %v4981, %v4982
        %v4984 = vrot.slane %v4983, 2
        %v4985 = vmax.f32 %v4983, %v4984
        %v4986 = vrot.slane %v4985, 1
        %v4987 = vmax.f32 %v4985, %v4986
        %v4988 = vsel %vm4910, %v4624, -inf
        %v4989 = vrot.slane %v4988, 4
        %v4990 = vmax.f32 %v4988, %v4989
        %v4991 = vrot.slane %v4990, 2
        %v4992 = vmax.f32 %v4990, %v4991
        %v4993 = vrot.slane %v4992, 1
        %v4994 = vmax.f32 %v4992, %v4993
        %v4995 = vsel %vm4910, %v4632, -inf
        %v4996 = vrot.slane %v4995, 4
        %v4997 = vmax.f32 %v4995, %v4996
        %v4998 = vrot.slane %v4997, 2
        %v4999 = vmax.f32 %v4997, %v4998
        %v5000 = vrot.slane %v4999, 1
        %v5001 = vmax.f32 %v4999, %v5000
        %v5002 = vsel %vm4910, %v4640, -inf
        %v5003 = vrot.slane %v5002, 4
        %v5004 = vmax.f32 %v5002, %v5003
        %v5005 = vrot.slane %v5004, 2
        %v5006 = vmax.f32 %v5004, %v5005
        %v5007 = vrot.slane %v5006, 1
        %v5008 = vmax.f32 %v5006, %v5007
        %v5009 = vsel %vm4910, %v4639, -inf
        %v5010 = vrot.slane %v5009, 4
        %v5011 = vmax.f32 %v5009, %v5010
        %v5012 = vrot.slane %v5011, 2
        %v5013 = vmax.f32 %v5011, %v5012
        %v5014 = vrot.slane %v5013, 1
        %v5015 = vmax.f32 %v5013, %v5014
        %v5016 = vsel %vm4910, %v4641, -inf
        %v5017 = vrot.slane %v5016, 4
        %v5018 = vmax.f32 %v5016, %v5017
        %v5019 = vrot.slane %v5018, 2
        %v5020 = vmax.f32 %v5018, %v5019
        %v5021 = vrot.slane %v5020, 1
        %v5022 = vmax.f32 %v5020, %v5021
        %v5023 = vsel %vm4910, %v4649, -inf
        %v5024 = vrot.slane %v5023, 4
        %v5025 = vmax.f32 %v5023, %v5024
        %v5026 = vrot.slane %v5025, 2
        %v5027 = vmax.f32 %v5025, %v5026
        %v5028 = vrot.slane %v5027, 1
        %v5029 = vmax.f32 %v5027, %v5028
        %v5030 = vsel %vm4910, %v4657, -inf
        %v5031 = vrot.slane %v5030, 4
        %v5032 = vmax.f32 %v5030, %v5031
        %v5033 = vrot.slane %v5032, 2
        %v5034 = vmax.f32 %v5032, %v5033
        %v5035 = vrot.slane %v5034, 1
        %v5036 = vmax.f32 %v5034, %v5035
        %v5037 = vsel %vm4910, %v4656, -inf
        %v5038 = vrot.slane %v5037, 4
        %v5039 = vmax.f32 %v5037, %v5038
        %v5040 = vrot.slane %v5039, 2
        %v5041 = vmax.f32 %v5039, %v5040
        %v5042 = vrot.slane %v5041, 1
        %v5043 = vmax.f32 %v5041, %v5042
        %v5044 = vsel %vm4910, %v4658, -inf
        %v5045 = vrot.slane %v5044, 4
        %v5046 = vmax.f32 %v5044, %v5045
        %v5047 = vrot.slane %v5046, 2
        %v5048 = vmax.f32 %v5046, %v5047
        %v5049 = vrot.slane %v5048, 1
        %v5050 = vmax.f32 %v5048, %v5049
        %v5051 = vsel %vm4910, %v4666, -inf
        %v5052 = vrot.slane %v5051, 4
        %v5053 = vmax.f32 %v5051, %v5052
        %v5054 = vrot.slane %v5053, 2
        %v5055 = vmax.f32 %v5053, %v5054
        %v5056 = vrot.slane %v5055, 1
        %v5057 = vmax.f32 %v5055, %v5056
        %v5058 = vsel %vm4910, %v4674, -inf
        %v5059 = vrot.slane %v5058, 4
        %v5060 = vmax.f32 %v5058, %v5059
        %v5061 = vrot.slane %v5060, 2
        %v5062 = vmax.f32 %v5060, %v5061
        %v5063 = vrot.slane %v5062, 1
        %v5064 = vmax.f32 %v5062, %v5063
        %v5065 = vsel %vm4910, %v4673, -inf
        %v5066 = vrot.slane %v5065, 4
        %v5067 = vmax.f32 %v5065, %v5066
        %v5068 = vrot.slane %v5067, 2
        %v5069 = vmax.f32 %v5067, %v5068
        %v5070 = vrot.slane %v5069, 1
        %v5071 = vmax.f32 %v5069, %v5070
        %v5072 = vsel %vm4910, %v4675, -inf
        %v5073 = vrot.slane %v5072, 4
        %v5074 = vmax.f32 %v5072, %v5073
        %v5075 = vrot.slane %v5074, 2
        %v5076 = vmax.f32 %v5074, %v5075
        %v5077 = vrot.slane %v5076, 1
        %v5078 = vmax.f32 %v5076, %v5077
        %v5079 = vsel %vm4910, %v4683, -inf
        %v5080 = vrot.slane %v5079, 4
        %v5081 = vmax.f32 %v5079, %v5080
        %v5082 = vrot.slane %v5081, 2
        %v5083 = vmax.f32 %v5081, %v5082
        %v5084 = vrot.slane %v5083, 1
        %v5085 = vmax.f32 %v5083, %v5084
        %v5086 = vsel %vm4910, %v4691, -inf
        %v5087 = vrot.slane %v5086, 4
        %v5088 = vmax.f32 %v5086, %v5087
        %v5089 = vrot.slane %v5088, 2
        %v5090 = vmax.f32 %v5088, %v5089
        %v5091 = vrot.slane %v5090, 1
        %v5092 = vmax.f32 %v5090, %v5091
        %v5093 = vsel %vm4910, %v4690, -inf
        %v5094 = vrot.slane %v5093, 4
        %v5095 = vmax.f32 %v5093, %v5094
        %v5096 = vrot.slane %v5095, 2
        %v5097 = vmax.f32 %v5095, %v5096
        %v5098 = vrot.slane %v5097, 1
        %v5099 = vmax.f32 %v5097, %v5098
        %v5100 = vsel %vm4910, %v4692, -inf
        %v5101 = vrot.slane %v5100, 4
        %v5102 = vmax.f32 %v5100, %v5101
        %v5103 = vrot.slane %v5102, 2
        %v5104 = vmax.f32 %v5102, %v5103
        %v5105 = vrot.slane %v5104, 1
        %v5106 = vmax.f32 %v5104, %v5105
        %v5107 = vsel %vm4910, %v4700, -inf
        %v5108 = vrot.slane %v5107, 4
        %v5109 = vmax.f32 %v5107, %v5108
        %v5110 = vrot.slane %v5109, 2
        %v5111 = vmax.f32 %v5109, %v5110
        %v5112 = vrot.slane %v5111, 1
        %v5113 = vmax.f32 %v5111, %v5112
        %v5114 = vsel %vm4910, %v4708, -inf
        %v5115 = vrot.slane %v5114, 4
        %v5116 = vmax.f32 %v5114, %v5115
        %v5117 = vrot.slane %v5116, 2
        %v5118 = vmax.f32 %v5116, %v5117
        %v5119 = vrot.slane %v5118, 1
        %v5120 = vmax.f32 %v5118, %v5119
        %v5121 = vsel %vm4910, %v4707, -inf
        %v5122 = vrot.slane %v5121, 4
        %v5123 = vmax.f32 %v5121, %v5122
        %v5124 = vrot.slane %v5123, 2
        %v5125 = vmax.f32 %v5123, %v5124
        %v5126 = vrot.slane %v5125, 1
        %v5127 = vmax.f32 %v5125, %v5126
        %v5128 = vsel %vm4910, %v4709, -inf
        %v5129 = vrot.slane %v5128, 4
        %v5130 = vmax.f32 %v5128, %v5129
        %v5131 = vrot.slane %v5130, 2
        %v5132 = vmax.f32 %v5130, %v5131
        %v5133 = vrot.slane %v5132, 1
        %v5134 = vmax.f32 %v5132, %v5133
        %v5135 = vsel %vm4910, %v4717, -inf
        %v5136 = vrot.slane %v5135, 4
        %v5137 = vmax.f32 %v5135, %v5136
        %v5138 = vrot.slane %v5137, 2
        %v5139 = vmax.f32 %v5137, %v5138
        %v5140 = vrot.slane %v5139, 1
        %v5141 = vmax.f32 %v5139, %v5140
        %v5142 = vsel %vm4910, %v4725, -inf
        %v5143 = vrot.slane %v5142, 4
        %v5144 = vmax.f32 %v5142, %v5143
        %v5145 = vrot.slane %v5144, 2
        %v5146 = vmax.f32 %v5144, %v5145
        %v5147 = vrot.slane %v5146, 1
        %v5148 = vmax.f32 %v5146, %v5147
        %v5149 = vsel %vm4910, %v4724, -inf
        %v5150 = vrot.slane %v5149, 4
        %v5151 = vmax.f32 %v5149, %v5150
        %v5152 = vrot.slane %v5151, 2
        %v5153 = vmax.f32 %v5151, %v5152
        %v5154 = vrot.slane %v5153, 1
        %v5155 = vmax.f32 %v5153, %v5154
        %v5156 = vsel %vm4910, %v4726, -inf
        %v5157 = vrot.slane %v5156, 4
        %v5158 = vmax.f32 %v5156, %v5157
        %v5159 = vrot.slane %v5158, 2
        %v5160 = vmax.f32 %v5158, %v5159
        %v5161 = vrot.slane %v5160, 1
        %v5162 = vmax.f32 %v5160, %v5161
        %v5163 = vsel %vm4910, %v4734, -inf
        %v5164 = vrot.slane %v5163, 4
        %v5165 = vmax.f32 %v5163, %v5164
        %v5166 = vrot.slane %v5165, 2
        %v5167 = vmax.f32 %v5165, %v5166
        %v5168 = vrot.slane %v5167, 1
        %v5169 = vmax.f32 %v5167, %v5168
        %v5170 = vsel %vm4910, %v4742, -inf
        %v5171 = vrot.slane %v5170, 4
        %v5172 = vmax.f32 %v5170, %v5171
        %v5173 = vrot.slane %v5172, 2
        %v5174 = vmax.f32 %v5172, %v5173
        %v5175 = vrot.slane %v5174, 1
        %v5176 = vmax.f32 %v5174, %v5175
        %v5177 = vsel %vm4910, %v4741, -inf
        %v5178 = vrot.slane %v5177, 4
        %v5179 = vmax.f32 %v5177, %v5178
        %v5180 = vrot.slane %v5179, 2
        %v5181 = vmax.f32 %v5179, %v5180
        %v5182 = vrot.slane %v5181, 1
        %v5183 = vmax.f32 %v5181, %v5182
        %v5184 = vsel %vm4910, %v4743, -inf
        %v5185 = vrot.slane %v5184, 4
        %v5186 = vmax.f32 %v5184, %v5185
        %v5187 = vrot.slane %v5186, 2
        %v5188 = vmax.f32 %v5186, %v5187
        %v5189 = vrot.slane %v5188, 1
        %v5190 = vmax.f32 %v5188, %v5189
        %v5191 = vsel %vm4910, %v4751, -inf
        %v5192 = vrot.slane %v5191, 4
        %v5193 = vmax.f32 %v5191, %v5192
        %v5194 = vrot.slane %v5193, 2
        %v5195 = vmax.f32 %v5193, %v5194
        %v5196 = vrot.slane %v5195, 1
        %v5197 = vmax.f32 %v5195, %v5196
        %v5198 = vsel %vm4910, %v4759, -inf
        %v5199 = vrot.slane %v5198, 4
        %v5200 = vmax.f32 %v5198, %v5199
        %v5201 = vrot.slane %v5200, 2
        %v5202 = vmax.f32 %v5200, %v5201
        %v5203 = vrot.slane %v5202, 1
        %v5204 = vmax.f32 %v5202, %v5203
        %v5205 = vsel %vm4910, %v4758, -inf
        %v5206 = vrot.slane %v5205, 4
        %v5207 = vmax.f32 %v5205, %v5206
        %v5208 = vrot.slane %v5207, 2
        %v5209 = vmax.f32 %v5207, %v5208
        %v5210 = vrot.slane %v5209, 1
        %v5211 = vmax.f32 %v5209, %v5210
        %v5212 = vsel %vm4910, %v4760, -inf
        %v5213 = vrot.slane %v5212, 4
        %v5214 = vmax.f32 %v5212, %v5213
        %v5215 = vrot.slane %v5214, 2
        %v5216 = vmax.f32 %v5214, %v5215
        %v5217 = vrot.slane %v5216, 1
        %v5218 = vmax.f32 %v5216, %v5217
        %v5219 = vsel %vm4910, %v4768, -inf
        %v5220 = vrot.slane %v5219, 4
        %v5221 = vmax.f32 %v5219, %v5220
        %v5222 = vrot.slane %v5221, 2
        %v5223 = vmax.f32 %v5221, %v5222
        %v5224 = vrot.slane %v5223, 1
        %v5225 = vmax.f32 %v5223, %v5224
        %v5226 = vsel %vm4910, %v4776, -inf
        %v5227 = vrot.slane %v5226, 4
        %v5228 = vmax.f32 %v5226, %v5227
        %v5229 = vrot.slane %v5228, 2
        %v5230 = vmax.f32 %v5228, %v5229
        %v5231 = vrot.slane %v5230, 1
        %v5232 = vmax.f32 %v5230, %v5231
        %v5233 = vsel %vm4910, %v4775, -inf
        %v5234 = vrot.slane %v5233, 4
        %v5235 = vmax.f32 %v5233, %v5234
        %v5236 = vrot.slane %v5235, 2
        %v5237 = vmax.f32 %v5235, %v5236
        %v5238 = vrot.slane %v5237, 1
        %v5239 = vmax.f32 %v5237, %v5238
        %v5240 = vsel %vm4910, %v4777, -inf
        %v5241 = vrot.slane %v5240, 4
        %v5242 = vmax.f32 %v5240, %v5241
        %v5243 = vrot.slane %v5242, 2
        %v5244 = vmax.f32 %v5242, %v5243
        %v5245 = vrot.slane %v5244, 1
        %v5246 = vmax.f32 %v5244, %v5245
        %v5247 = vsel %vm4910, %v4785, -inf
        %v5248 = vrot.slane %v5247, 4
        %v5249 = vmax.f32 %v5247, %v5248
        %v5250 = vrot.slane %v5249, 2
        %v5251 = vmax.f32 %v5249, %v5250
        %v5252 = vrot.slane %v5251, 1
        %v5253 = vmax.f32 %v5251, %v5252
        %v5254 = vsel %vm4910, %v4793, -inf
        %v5255 = vrot.slane %v5254, 4
        %v5256 = vmax.f32 %v5254, %v5255
        %v5257 = vrot.slane %v5256, 2
        %v5258 = vmax.f32 %v5256, %v5257
        %v5259 = vrot.slane %v5258, 1
        %v5260 = vmax.f32 %v5258, %v5259
        %v5261 = vsel %vm4910, %v4792, -inf
        %v5262 = vrot.slane %v5261, 4
        %v5263 = vmax.f32 %v5261, %v5262
        %v5264 = vrot.slane %v5263, 2
        %v5265 = vmax.f32 %v5263, %v5264
        %v5266 = vrot.slane %v5265, 1
        %v5267 = vmax.f32 %v5265, %v5266
        %v5268 = vsel %vm4910, %v4794, -inf
        %v5269 = vrot.slane %v5268, 4
        %v5270 = vmax.f32 %v5268, %v5269
        %v5271 = vrot.slane %v5270, 2
        %v5272 = vmax.f32 %v5270, %v5271
        %v5273 = vrot.slane %v5272, 1
        %v5274 = vmax.f32 %v5272, %v5273
        %v5275 = vsel %vm4910, %v4802, -inf
        %v5276 = vrot.slane %v5275, 4
        %v5277 = vmax.f32 %v5275, %v5276
        %v5278 = vrot.slane %v5277, 2
        %v5279 = vmax.f32 %v5277, %v5278
        %v5280 = vrot.slane %v5279, 1
        %v5281 = vmax.f32 %v5279, %v5280
        %v5282 = vsel %vm4910, %v4810, -inf
        %v5283 = vrot.slane %v5282, 4
        %v5284 = vmax.f32 %v5282, %v5283
        %v5285 = vrot.slane %v5284, 2
        %v5286 = vmax.f32 %v5284, %v5285
        %v5287 = vrot.slane %v5286, 1
        %v5288 = vmax.f32 %v5286, %v5287
        %v5289 = vsel %vm4910, %v4809, -inf
        %v5290 = vrot.slane %v5289, 4
        %v5291 = vmax.f32 %v5289, %v5290
        %v5292 = vrot.slane %v5291, 2
        %v5293 = vmax.f32 %v5291, %v5292
        %v5294 = vrot.slane %v5293, 1
        %v5295 = vmax.f32 %v5293, %v5294
        %v5296 = vsel %vm4910, %v4811, -inf
        %v5297 = vrot.slane %v5296, 4
        %v5298 = vmax.f32 %v5296, %v5297
        %v5299 = vrot.slane %v5298, 2
        %v5300 = vmax.f32 %v5298, %v5299
        %v5301 = vrot.slane %v5300, 1
        %v5302 = vmax.f32 %v5300, %v5301
        %v5303 = vsel %vm4910, %v4819, -inf
        %v5304 = vrot.slane %v5303, 4
        %v5305 = vmax.f32 %v5303, %v5304
        %v5306 = vrot.slane %v5305, 2
        %v5307 = vmax.f32 %v5305, %v5306
        %v5308 = vrot.slane %v5307, 1
        %v5309 = vmax.f32 %v5307, %v5308
        %v5310 = vsel %vm4910, %v4827, -inf
        %v5311 = vrot.slane %v5310, 4
        %v5312 = vmax.f32 %v5310, %v5311
        %v5313 = vrot.slane %v5312, 2
        %v5314 = vmax.f32 %v5312, %v5313
        %v5315 = vrot.slane %v5314, 1
        %v5316 = vmax.f32 %v5314, %v5315
        %v5317 = vsel %vm4910, %v4826, -inf
        %v5318 = vrot.slane %v5317, 4
        %v5319 = vmax.f32 %v5317, %v5318
        %v5320 = vrot.slane %v5319, 2
        %v5321 = vmax.f32 %v5319, %v5320
        %v5322 = vrot.slane %v5321, 1
        %v5323 = vmax.f32 %v5321, %v5322
        %v5324 = vsel %vm4910, %v4828, -inf
        %v5325 = vrot.slane %v5324, 4
        %v5326 = vmax.f32 %v5324, %v5325
        %v5327 = vrot.slane %v5326, 2
        %v5328 = vmax.f32 %v5326, %v5327
        %v5329 = vrot.slane %v5328, 1
        %v5330 = vmax.f32 %v5328, %v5329
        %v5331 = vsel %vm4910, %v4836, -inf
        %v5332 = vrot.slane %v5331, 4
        %v5333 = vmax.f32 %v5331, %v5332
        %v5334 = vrot.slane %v5333, 2
        %v5335 = vmax.f32 %v5333, %v5334
        %v5336 = vrot.slane %v5335, 1
        %v5337 = vmax.f32 %v5335, %v5336
        %v5338 = vsel %vm4910, %v4844, -inf
        %v5339 = vrot.slane %v5338, 4
        %v5340 = vmax.f32 %v5338, %v5339
        %v5341 = vrot.slane %v5340, 2
        %v5342 = vmax.f32 %v5340, %v5341
        %v5343 = vrot.slane %v5342, 1
        %v5344 = vmax.f32 %v5342, %v5343
        %v5345 = vsel %vm4910, %v4843, -inf
        %v5346 = vrot.slane %v5345, 4
        %v5347 = vmax.f32 %v5345, %v5346
        %v5348 = vrot.slane %v5347, 2
        %v5349 = vmax.f32 %v5347, %v5348
        %v5350 = vrot.slane %v5349, 1
        %v5351 = vmax.f32 %v5349, %v5350
        %v5352 = vsel %vm4910, %v4845, -inf
        %v5353 = vrot.slane %v5352, 4
        %v5354 = vmax.f32 %v5352, %v5353
        %v5355 = vrot.slane %v5354, 2
        %v5356 = vmax.f32 %v5354, %v5355
        %v5357 = vrot.slane %v5356, 1
        %v5358 = vmax.f32 %v5356, %v5357
        %vm5423 = vcmask 1041409
        %v5424 = vsel %vm5423, %v4924, %v4917
        %vm5425 = vcmask 1042434
        %v5426 = vsel %vm5425, %v4931, %v5424
        %vm5427 = vcmask 1043459
        %v5428 = vsel %vm5427, %v4938, %v5426
        %vm5429 = vcmask 1044484
        %v5430 = vsel %vm5429, %v4945, %v5428
        %vm5431 = vcmask 1045509
        %v5432 = vsel %vm5431, %v4952, %v5430
        %vm5433 = vcmask 1046534
        %v5434 = vsel %vm5433, %v4959, %v5432
        %vm5435 = vcmask 1047559
        %v5436 = vsel %vm5435, %v4966, %v5434
        %v5437 = vsel %vm5423, %v4980, %v4973
        %v5438 = vsel %vm5425, %v4987, %v5437
        %v5439 = vsel %vm5427, %v4994, %v5438
        %v5440 = vsel %vm5429, %v5001, %v5439
        %v5441 = vsel %vm5431, %v5008, %v5440
        %v5442 = vsel %vm5433, %v5015, %v5441
        %v5443 = vsel %vm5435, %v5022, %v5442
        %v5444 = vsel %vm5423, %v5036, %v5029
        %v5445 = vsel %vm5425, %v5043, %v5444
        %v5446 = vsel %vm5427, %v5050, %v5445
        %v5447 = vsel %vm5429, %v5057, %v5446
        %v5448 = vsel %vm5431, %v5064, %v5447
        %v5449 = vsel %vm5433, %v5071, %v5448
        %v5450 = vsel %vm5435, %v5078, %v5449
        %v5451 = vsel %vm5423, %v5092, %v5085
        %v5452 = vsel %vm5425, %v5099, %v5451
        %v5453 = vsel %vm5427, %v5106, %v5452
        %v5454 = vsel %vm5429, %v5113, %v5453
        %v5455 = vsel %vm5431, %v5120, %v5454
        %v5456 = vsel %vm5433, %v5127, %v5455
        %v5457 = vsel %vm5435, %v5134, %v5456
        %v5458 = vsel %vm5423, %v5148, %v5141
        %v5459 = vsel %vm5425, %v5155, %v5458
        %v5460 = vsel %vm5427, %v5162, %v5459
        %v5461 = vsel %vm5429, %v5169, %v5460
        %v5462 = vsel %vm5431, %v5176, %v5461
        %v5463 = vsel %vm5433, %v5183, %v5462
        %v5464 = vsel %vm5435, %v5190, %v5463
        %v5465 = vsel %vm5423, %v5204, %v5197
        %v5466 = vsel %vm5425, %v5211, %v5465
        %v5467 = vsel %vm5427, %v5218, %v5466
        %v5468 = vsel %vm5429, %v5225, %v5467
        %v5469 = vsel %vm5431, %v5232, %v5468
        %v5470 = vsel %vm5433, %v5239, %v5469
        %v5471 = vsel %vm5435, %v5246, %v5470
        %v5472 = vsel %vm5423, %v5260, %v5253
        %v5473 = vsel %vm5425, %v5267, %v5472
        %v5474 = vsel %vm5427, %v5274, %v5473
        %v5475 = vsel %vm5429, %v5281, %v5474
        %v5476 = vsel %vm5431, %v5288, %v5475
        %v5477 = vsel %vm5433, %v5295, %v5476
        %v5478 = vsel %vm5435, %v5302, %v5477
        %v5479 = vsel %vm5423, %v5316, %v5309
        %v5480 = vsel %vm5425, %v5323, %v5479
        %v5481 = vsel %vm5427, %v5330, %v5480
        %v5482 = vsel %vm5429, %v5337, %v5481
        %v5483 = vsel %vm5431, %v5344, %v5482
        %v5484 = vsel %vm5433, %v5351, %v5483
        %v5485 = vsel %vm5435, %v5358, %v5484
        %5494 = vst.msk [vmem:[%s354] sm:$0xff] %vm1872, %v5436
        %5495 = vst.msk [vmem:[%s354 + $0x8] sm:$0xff] %vm1872, %v5443
        %5496 = vst.msk [vmem:[%s354 + $0x10] sm:$0xff] %vm1872, %v5450
        %5497 = vst.msk [vmem:[%s354 + $0x18] sm:$0xff] %vm1872, %v5457
        %5498 = vst.msk [vmem:[%s354 + $0x20] sm:$0xff] %vm1872, %v5464
        %5499 = vst.msk [vmem:[%s354 + $0x28] sm:$0xff] %vm1872, %v5471
        %5500 = vst.msk [vmem:[%s354 + $0x30] sm:$0xff] %vm1872, %v5478
        %5501 = vst.msk [vmem:[%s354 + $0x38] sm:$0xff] %vm1872, %v5485
        %s5502 = sand.u32 %s163, 1
        %s5503 = scalar_lea.sflag [#allocation4], %s5502
        %s5504 = sand.u32 %s163, 1
        %s5505 = smul.addr %s5504, 256
        %s5506 = scalar_lea.vmem [#allocation11], %s5505
        %s5507 = sand.u32 %s191, 1
        %s5508 = scalar_lea.sflag [#allocation13], %s5507
        %s5509 = sand.u32 %s191, 1
        %s5510 = smul.addr %s5509, 64
        %s5511 = scalar_lea.vmem [#allocation12], %s5510
        // Predicated region
        $region61: #{tpu_custom_call.1} parent=39 // pred_check
          %p5512 = pneg %p173
        $region62: #{tpu_custom_call.1} parent=39 // pred_check_branch
          %5514 = sbr.rel (%p5512) target = $region64
        $region63: #{tpu_custom_call.1} parent=39 // pred_region
          %s5515 = smul.u32 16, %s34
          %s5517 = ssub.s32 4096, 4096
          %5518 = vsyncadd %s5503, %s5517
          %s5519 = smul.addr %s5515, 2
          %s5520 = smul.addr %s33, 32
          %s5521 = sadd.s32 %s5519, %s5520
          %s5522 = smul.addr %s5521, 128
          %s5523 = scalar_lea.hbm %s5, %s5522
          %s5524 = sshll.u32 %s5506, 4
          %s5525 = int_to_ptr.vmem [resolvable:$true] %s5524
          %5530 = dma.vmem_to_hbm [thread:$0]  %s5525, 4096, %s5523, %s5503, 128, 128, 8
        $region64: #{tpu_custom_call.1} parent=39 // pred_fallthru
          _
        // Predicated region
        $region65: #{tpu_custom_call.1} parent=39 // pred_check
          %p5531 = pneg %p201
        $region66: #{tpu_custom_call.1} parent=39 // pred_check_branch
          %5533 = sbr.rel (%p5531) target = $region68
        $region67: #{tpu_custom_call.1} parent=39 // pred_region
          %s5534 = smul.u32 8, %s34
          %s5536 = ssub.s32 1024, 1024
          %5537 = vsyncadd %s5508, %s5536
          %s5538 = smul.addr %s33, 8
          %s5539 = sadd.s32 %s5534, %s5538
          %s5540 = smul.addr %s5539, 128
          %s5541 = scalar_lea.hbm %s6, %s5540
          %s5542 = sshll.u32 %s5511, 4
          %s5543 = int_to_ptr.vmem [resolvable:$true] %s5542
          %5548 = dma.vmem_to_hbm [thread:$0]  %s5543, 1024, %s5541, %s5508, 128, 128, 8
        $region68: #{tpu_custom_call.1} parent=39 // pred_fallthru
          _
      $region40: #{tpu_custom_call.1} parent=5 // pred_fallthru
        _
      %p5549 = scmp.le.s32.totalorder 2, %s24
      // Predicated region
      $region69: #{tpu_custom_call.1} parent=5 // pred_check
        %p5550 = pneg %p5549
      $region70: #{tpu_custom_call.1} parent=5 // pred_check_branch
        %5552 = sbr.rel (%p5550) target = $region72
      $region71: #{tpu_custom_call.1} parent=5 // pred_region
        %s5553 = ssub.s32 %s24, 2
        // Predicated region
        $region73: #{tpu_custom_call.1} parent=71 // pred_check
          %p5554 = pneg %p179
        $region74: #{tpu_custom_call.1} parent=71 // pred_check_branch
          %5556 = sbr.rel (%p5554) target = $region76
        $region75: #{tpu_custom_call.1} parent=71 // pred_region
          %s5557 = sand.u32 %s164, 1
          %s5558 = scalar_lea.sflag [#allocation4], %s5557
          %s5559 = sand.u32 %s164, 1
          %s5560 = smul.addr %s5559, 256
          %s5561 = scalar_lea.vmem [#allocation11], %s5560
          %5562 = dma.done %s5558, 4096
        $region76: #{tpu_custom_call.1} parent=71 // pred_fallthru
          _
        // Predicated region
        $region77: #{tpu_custom_call.1} parent=71 // pred_check
          %p5563 = pneg %p207
        $region78: #{tpu_custom_call.1} parent=71 // pred_check_branch
          %5565 = sbr.rel (%p5563) target = $region80
        $region79: #{tpu_custom_call.1} parent=71 // pred_region
          %s5566 = sand.u32 %s192, 1
          %s5567 = scalar_lea.sflag [#allocation13], %s5566
          %s5568 = sand.u32 %s192, 1
          %s5569 = smul.addr %s5568, 64
          %s5570 = scalar_lea.vmem [#allocation12], %s5569
          %5571 = dma.done %s5567, 1024
        $region80: #{tpu_custom_call.1} parent=71 // pred_fallthru
          _
      $region72: #{tpu_custom_call.1} parent=5 // pred_fallthru
        _
    $region6: #{tpu_custom_call.1} parent=1 // loop_footer
      %s28 = sadd.s32 1, %s24
    $region7: #{tpu_custom_call.1} parent=1 // loop_footer_branch
      %23 = sbr.rel target = $region3
    $region8: #{tpu_custom_call.1} parent=1 // loop_exit
      _
    %5572 = vsyncpa [#allocation3], 1
    %s5573 = scalar_lea.sflag [#allocation3], 1
    %5574 = vsyncpa %s5573, 1
    %5575 = vsyncpa [#allocation6], 1
    %5576 = vsyncpa [#allocation9], 1
    %5577 = vsyncpa [#allocation4], 1
    %s5578 = scalar_lea.sflag [#allocation4], 1
    %5579 = vsyncpa %s5578, 1
    %5580 = vsyncpa [#allocation13], 1
    %s5581 = scalar_lea.sflag [#allocation13], 1
    %5582 = vsyncpa %s5581, 1

</llo_original>
